<compile_context>
chip_gen: v5e
topology: v5e:2x2
jax: 0.10.0
libtpu: 0.0.40
codegen_flags: <defaults>
</compile_context>

<pallas_src>
import jax
import jax.numpy as jnp
from jax import lax
from jax.experimental import pallas as pl
from jax.experimental.pallas import tpu as pltpu

_EPS = 1e-5
_LANE = 128          # default lane-padding quantum for the channel dim
_TM_MATMUL = 512     # max M-tile rows for the patch-matmul fallback


def _round_up(x, m):
    return (x + m - 1) // m * m


def _choose_tile(m, tmax=_TM_MATMUL, sub=16):
    """Adaptive M tile: waste is bounded by nt*sub rows (not a full tile)."""
    nt = -(-m // tmax)
    tile = _round_up(-(-m // nt), sub)
    return tile, nt * tile


def _pad_rows(a, rows):
    if a.shape[0] == rows:
        return a
    return jnp.pad(a, ((0, rows - a.shape[0]), (0, 0)))


def _pad_vec(v, cp):
    return jnp.pad(v.astype(jnp.float32), (0, cp - v.shape[0]))


def _cparams(block_bytes):
    """Per-call compiler params: VMEM limit derived from the block working set
    and clamped to 3/4 of the device VMEM (64 MiB/TC on v7x, 128 MiB else)."""
    cap = 64 * 1024 * 1024
    try:
        cap = int(getattr(pltpu.get_tpu_info(), "vmem_capacity_bytes", cap))
    except Exception:
        pass
    limit = int(min(cap * 3 // 4,
                    max(32 * 1024 * 1024, 2 * block_bytes + (8 << 20))))
    return pltpu.CompilerParams(dimension_semantics=("parallel",),
                                vmem_limit_bytes=limit)


# ----------------------------- Pallas kernels ------------------------------

def _conv3x3_s1_kernel(x_ref, w_ref, z_ref, sum_ref, sq_ref):
    """Fused 3x3 stride-1 conv: 9-tap accumulation + BN (sum, sum^2) partials.

    x_ref: (1, H+2, W+2, C) bf16 (zero-padded image), w_ref: (9, C, Cp) bf16,
    z_ref: (H*W, Cp) bf16, sum_ref/sq_ref: (1, 1, Cp) f32.
    Requires W % 8 == 0 and (H*W) % 16 == 0 (guaranteed by the _fusable gate).
    """
    hp, wp, c = x_ref.shape[1], x_ref.shape[2], x_ref.shape[3]
    h, w = hp - 2, wp - 2
    cp = z_ref.shape[-1]
    acc = jnp.zeros((h * w, cp), jnp.float32)
    for t in range(9):                      # unrolled static tap loop
        di, dj = t // 3, t % 3
        xt = x_ref[0, di:di + h, dj:dj + w, :].reshape(h * w, c)
        acc = acc + jnp.dot(xt, w_ref[t], preferred_element_type=jnp.float32)
    z_ref[...] = acc.astype(z_ref.dtype)
    sum_ref[0] = jnp.sum(acc, axis=0, keepdims=True)
    sq_ref[0] = jnp.sum(acc * acc, axis=0, keepdims=True)


def _patch_matmul_kernel(p_ref, w_ref, z_ref, sum_ref, sq_ref):
    """Fallback conv: z = P @ W (bf16 on the MXU, f32 acc) + stats partials."""
    z = jnp.dot(p_ref[...], w_ref[...], preferred_element_type=jnp.float32)
    z_ref[...] = z.astype(z_ref.dtype)
    sum_ref[0] = jnp.sum(z, axis=0, keepdims=True)
    sq_ref[0] = jnp.sum(z * z, axis=0, keepdims=True)


def _residual_stats_kernel(xs_ref, wd_ref, sum_ref, sq_ref):
    """Downsample 1x1 conv BN stats only (z_r itself is recomputed later)."""
    r = jnp.dot(xs_ref[...], wd_ref[...], preferred_element_type=jnp.float32)
    sum_ref[0] = jnp.sum(r, axis=0, keepdims=True)
    sq_ref[0] = jnp.sum(r * r, axis=0, keepdims=True)


def _bn_relu_kernel(z_ref, sc_ref, sh_ref, o_ref):
    z = z_ref[...].astype(jnp.float32)
    o_ref[...] = jnp.maximum(z * sc_ref[...] + sh_ref[...], 0.0
                             ).astype(o_ref.dtype)


def _bn_res_relu_kernel(z_ref, xs_ref, wd_ref, sc_ref, sh_ref,
                        rsc_ref, rsh_ref, o_ref):
    """BN2 affine + residual (1x1 conv or identity, recomputed on MXU) + ReLU."""
    y = z_ref[...].astype(jnp.float32) * sc_ref[...] + sh_ref[...]
    r = jnp.dot(xs_ref[...], wd_ref[...], preferred_element_type=jnp.float32)
    y = y + r * rsc_ref[...] + rsh_ref[...]
    o_ref[...] = jnp.maximum(y, 0.0).astype(o_ref.dtype)


# ------------------------- pallas_call wrappers -----------------------------

def _conv3x3_s1(x_pad, w9, cp):
    n, hp, wp, c = x_pad.shape
    h, w = hp - 2, wp - 2
    hw = h * w
    block_bytes = (2 * (hp * wp * c * 2 + hw * cp * 2 + 4 * cp * 4)
                   + 9 * c * cp * 2 + hw * cp * 4)
    flops = 2 * n * hw * 9 * c * cp
    bytes_accessed = (x_pad.size * 2 + w9.size * 2 + n * hw * cp * 2
                      + 2 * n * cp * 4)
    return pl.pallas_call(
        _conv3x3_s1_kernel,
        out_shape=(jax.ShapeDtypeStruct((n * hw, cp), jnp.bfloat16),
                   jax.ShapeDtypeStruct((n, 1, cp), jnp.float32),
                   jax.ShapeDtypeStruct((n, 1, cp), jnp.float32)),
        grid=(n,),
        in_specs=[
            pl.BlockSpec((1, hp, wp, c), lambda i: (i, 0, 0, 0)),
            # Grid-invariant tap weights held whole in VMEM.
            # TODO(synk): pin single-buffered (pl.Buffered(1)) on 64 MiB v7x.
            pl.BlockSpec((9, c, cp), lambda i: (0, 0, 0)),
        ],
        out_specs=(pl.BlockSpec((hw, cp), lambda i: (i, 0)),
                   pl.BlockSpec((1, 1, cp), lambda i: (i, 0, 0)),
                   pl.BlockSpec((1, 1, cp), lambda i: (i, 0, 0))),
        compiler_params=_cparams(block_bytes),
        cost_estimate=pl.CostEstimate(flops=flops, transcendentals=0,
                                      bytes_accessed=bytes_accessed),
    )(x_pad, w9)


def _patch_matmul(patches, wmat, cp, tile):
    rows, k = patches.shape
    nt = rows // tile
    block_bytes = (2 * (tile * k * 2 + tile * cp * 2 + 4 * cp * 4)
                   + k * cp * 2 + tile * cp * 4)
    flops = 2 * rows * k * cp
    bytes_accessed = (patches.size * 2 + wmat.size * 2 + rows * cp * 2
                      + 2 * nt * cp * 4)
    return pl.pallas_call(
        _patch_matmul_kernel,
        out_shape=(jax.ShapeDtypeStruct((rows, cp), jnp.bfloat16),
                   jax.ShapeDtypeStruct((nt, 1, cp), jnp.float32),
                   jax.ShapeDtypeStruct((nt, 1, cp), jnp.float32)),
        grid=(nt,),
        in_specs=[pl.BlockSpec((tile, k), lambda i: (i, 0)),
                  pl.BlockSpec((k, cp), lambda i: (0, 0))],
        out_specs=(pl.BlockSpec((tile, cp), lambda i: (i, 0)),
                   pl.BlockSpec((1, 1, cp), lambda i: (i, 0, 0)),
                   pl.BlockSpec((1, 1, cp), lambda i: (i, 0, 0))),
        compiler_params=_cparams(block_bytes),
        cost_estimate=pl.CostEstimate(flops=flops, transcendentals=0,
                                      bytes_accessed=bytes_accessed),
    )(patches, wmat)


def _residual_stats(xs, wd, cp, tile):
    rows, c = xs.shape
    nt = rows // tile
    block_bytes = 2 * (tile * c * 2 + 4 * cp * 4) + c * cp * 2 + tile * cp * 4
    flops = 2 * rows * c * cp
    bytes_accessed = xs.size * 2 + wd.size * 2 + 2 * nt * cp * 4
    return pl.pallas_call(
        _residual_stats_kernel,
        out_shape=(jax.ShapeDtypeStruct((nt, 1, cp), jnp.float32),
                   jax.ShapeDtypeStruct((nt, 1, cp), jnp.float32)),
        grid=(nt,),
        in_specs=[pl.BlockSpec((tile, c), lambda i: (i, 0)),
                  pl.BlockSpec((c, cp), lambda i: (0, 0))],
        out_specs=(pl.BlockSpec((1, 1, cp), lambda i: (i, 0, 0)),
                   pl.BlockSpec((1, 1, cp), lambda i: (i, 0, 0))),
        compiler_params=_cparams(block_bytes),
        cost_estimate=pl.CostEstimate(flops=flops, transcendentals=0,
                                      bytes_accessed=bytes_accessed),
    )(xs, wd)


def _bn_relu(z, scale, shift, tile):
    rows, cp = z.shape
    nt = rows // tile
    block_bytes = 2 * (2 * tile * cp * 2) + 2 * cp * 4
    bytes_accessed = 2 * rows * cp * 2 + 2 * cp * 4
    return pl.pallas_call(
        _bn_relu_kernel,
        out_shape=jax.ShapeDtypeStruct((rows, cp), jnp.bfloat16),
        grid=(nt,),
        in_specs=[pl.BlockSpec((tile, cp), lambda i: (i, 0)),
                  pl.BlockSpec((1, cp), lambda i: (0, 0)),
                  pl.BlockSpec((1, cp), lambda i: (0, 0))],
        out_specs=pl.BlockSpec((tile, cp), lambda i: (i, 0)),
        compiler_params=_cparams(block_bytes),
        cost_estimate=pl.CostEstimate(flops=3 * rows * cp, transcendentals=0,
                                      bytes_accessed=bytes_accessed),
    )(z, scale, shift)


def _bn_res_relu(z, xs, wd, sc, sh, rsc, rsh, tile):
    rows, cp = z.shape
    c = xs.shape[1]
    nt = rows // tile
    block_bytes = (2 * (tile * cp * 2 + tile * c * 2 + tile * cp * 4)
                   + c * cp * 2 + 4 * cp * 4)
    flops = 2 * rows * c * cp + 6 * rows * cp
    bytes_accessed = (rows * cp * 2 + xs.size * 2 + wd.size * 2
                      + rows * cp * 4 + 4 * cp * 4)
    return pl.pallas_call(
        _bn_res_relu_kernel,
        out_shape=jax.ShapeDtypeStruct((rows, cp), jnp.float32),
        grid=(nt,),
        in_specs=[pl.BlockSpec((tile, cp), lambda i: (i, 0)),
                  pl.BlockSpec((tile, c), lambda i: (i, 0)),
                  pl.BlockSpec((c, cp), lambda i: (0, 0)),
                  pl.BlockSpec((1, cp), lambda i: (0, 0)),
                  pl.BlockSpec((1, cp), lambda i: (0, 0)),
                  pl.BlockSpec((1, cp), lambda i: (0, 0)),
                  pl.BlockSpec((1, cp), lambda i: (0, 0))],
        out_specs=pl.BlockSpec((tile, cp), lambda i: (i, 0)),
        compiler_params=_cparams(block_bytes),
        cost_estimate=pl.CostEstimate(flops=flops, transcendentals=0,
                                      bytes_accessed=bytes_accessed),
    )(z, xs, wd, sc, sh, rsc, rsh)


# ------------------------------- JAX glue ----------------------------------

def _fold_stats(sums, sqs, m_true, gamma_p, beta_p):
    """Fold per-tile (sum, sum^2) partials into per-channel scale/shift (f32).

    Zero-padded rows/channels contribute exact zeros, so the batch statistics
    over the true m rows are exact.
    TODO(synk): switch to a Welford/Chan fold of per-tile (mean, M2) partials
    if activations with |mean| >> std ever make the f32 cancellation matter.
    """
    s = jnp.sum(sums, axis=(0, 1))
    q = jnp.sum(sqs, axis=(0, 1))
    mean = s / m_true
    var = jnp.maximum(q / m_true - mean * mean, 0.0)
    scale = gamma_p * lax.rsqrt(var + _EPS)
    shift = beta_p - mean * scale
    return scale.reshape(1, -1), shift.reshape(1, -1)


def _im2col(x_nhwc, kh, kw, stride, pad):
    """x: [N,H,W,C] -> patches [N*Ho*Wo, kh*kw*C] (column index = t*C + c)."""
    n, h, w, c = x_nhwc.shape
    xp = jnp.pad(x_nhwc, ((0, 0), (pad, pad), (pad, pad), (0, 0)))
    ho = (h + 2 * pad - kh) // stride + 1
    wo = (w + 2 * pad - kw) // stride + 1
    pieces = []
    for i in range(kh):
        for j in range(kw):
            pieces.append(xp[:, i:i + (ho - 1) * stride + 1:stride,
                             j:j + (wo - 1) * stride + 1:stride, :])
    p = jnp.stack(pieces, axis=3)                   # [N, Ho, Wo, kh*kw, C]
    return p.reshape(n * ho * wo, kh * kw * c), ho, wo


def _w_to_taps(w_t, cin_pad, cp):
    """torch [Cout,Cin,3,3] -> (9, cin_pad, cp) bf16, tap index t = i*3+j."""
    cout, cin = int(w_t.shape[0]), int(w_t.shape[1])
    w9 = jnp.transpose(w_t, (2, 3, 1, 0)).reshape(9, cin, cout)
    w9 = jnp.pad(w9, ((0, 0), (0, cin_pad - cin), (0, cp - cout)))
    return w9.astype(jnp.bfloat16)


def _w_to_mat(w_t, cin_pad, cp):
    """torch [Cout,Cin,kh,kw] -> (kh*kw*cin_pad, cp) bf16 matching _im2col."""
    cout, cin, kh, kw = (int(s) for s in w_t.shape)
    wt = jnp.transpose(w_t, (2, 3, 1, 0))
    wt = jnp.pad(wt, ((0, 0), (0, 0), (0, cin_pad - cin), (0, cp - cout)))
    return wt.reshape(kh * kw * cin_pad, cp).astype(jnp.bfloat16)


def _fusable(h, w, c, cp):
    """Fused tap-conv requires reshape-friendly spatial dims and a whole padded
    image (plus f32 accumulator) fitting comfortably in VMEM."""
    hw = h * w
    if w % 8 != 0 or hw % 16 != 0:
        return False
    need = (2 * ((h + 2) * (w + 2) * c * 2 + hw * cp * 2 + 4 * cp * 4)
            + 9 * c * cp * 2 + hw * cp * 4)
    return need < 40 * 1024 * 1024


def basic_block_forward(x_nchw, params, stride):
    x = jnp.transpose(x_nchw, (0, 2, 3, 1)).astype(jnp.float32)   # NHWC
    n, h, w, cin = x.shape
    cout = params["w1"].shape[0]
    lane = 256 if cout >= 256 else _LANE      # 256-wide N tiles for v6e/v7x MXU
    cp = _round_up(cout, lane)

    ho = (h + 2 - 3) // stride + 1
    wo = (w + 2 - 3) // stride + 1
    hw = ho * wo
    m = n * hw

    g1, b1 = _pad_vec(params["g1"], cp), _pad_vec(params["b1"], cp)
    g2, b2 = _pad_vec(params["g2"], cp), _pad_vec(params["b2"], cp)

    # ---- conv1 (3x3, stride) + BN1 stats -----------------------------------
    if stride == 1 and _fusable(ho, wo, cin, cp):
        xpad = jnp.pad(x.astype(jnp.bfloat16), ((0, 0), (1, 1), (1, 1), (0, 0)))
        z1, s1, q1 = _conv3x3_s1(xpad, _w_to_taps(params["w1"], cin, cp), cp)
        rows1, tile1 = m, hw
    else:
        # TODO(synk): extend the fused tap kernel to strided windows so the
        # stride-2 stage-boundary conv1 also avoids the patch materialization.
        p1, _, _ = _im2col(x.astype(jnp.bfloat16), 3, 3, stride, 1)
        tile1, rows1 = _choose_tile(m)
        p1 = _pad_rows(p1, rows1)
        z1, s1, q1 = _patch_matmul(p1, _w_to_mat(params["w1"], cin, cp), cp,
                                   tile1)
    sc1, sh1 = _fold_stats(s1, q1, m, g1, b1)

    # ---- BN1 + ReLU (bf16 out; lane-padded channels are exactly zero) ------
    y1 = _bn_relu(z1, sc1, sh1, tile1)
    y1_img = y1[:m].reshape(n, ho, wo, cp)

    # ---- conv2 (3x3, stride 1) + BN2 stats ----------------------------------
    if _fusable(ho, wo, cp, cp):
        y1_pad = jnp.pad(y1_img, ((0, 0), (1, 1), (1, 1), (0, 0)))
        z2, s2, q2 = _conv3x3_s1(y1_pad, _w_to_taps(params["w2"], cp, cp), cp)
        rows2, tile2 = m, hw
    else:
        p2, _, _ = _im2col(y1_img, 3, 3, 1, 1)
        tile2, rows2 = _choose_tile(m)
        p2 = _pad_rows(p2, rows2)
        z2, s2, q2 = _patch_matmul(p2, _w_to_mat(params["w2"], cp, cp), cp,
                                   tile2)
    sc2, sh2 = _fold_stats(s2, q2, m, g2, b2)

    # ---- residual branch: 1x1 conv (or identity) fused into the epilogue ---
    if stride != 1 or cin != cout:
        xs = x[:, ::stride, ::stride, :].astype(jnp.bfloat16).reshape(m, cin)
        xs = _pad_rows(xs, rows2)
        wdm = _w_to_mat(params["wd"], cin, cp)
        sr, qr = _residual_stats(xs, wdm, cp, tile2)
        rsc, rsh = _fold_stats(sr, qr, m, _pad_vec(params["gd"], cp),
                               _pad_vec(params["bd"], cp))
    else:
        xs = _pad_rows(x.astype(jnp.bfloat16).reshape(m, cin), rows2)
        wdm = jnp.eye(cin, cp, dtype=jnp.bfloat16)   # identity residual
        rsc = jnp.ones((1, cp), jnp.float32)
        rsh = jnp.zeros((1, cp), jnp.float32)

    # ---- BN2 + residual (recomputed on the MXU) + add + ReLU ----------------
    out = _bn_res_relu(z2, xs, wdm, sc2, sh2, rsc, rsh, tile2)
    out = out[:m, :cout].reshape(n, ho, wo, cout)
    return jnp.transpose(out, (0, 3, 1, 2))          # back to NCHW


# --------------------------- pure-JAX references -----------------------------

def _ref_forward(x_nchw, params, stride, matched=False):
    """Train-mode BasicBlock reference.  matched=True mirrors the kernel's
    bf16-operand / f32-accumulate convs and bf16 storage of z / y1 / residual
    so it can be checked with a tight tolerance."""
    cdt = jnp.bfloat16 if matched else jnp.float32

    def store(a):
        return a.astype(jnp.bfloat16).astype(jnp.float32) if matched else a

    def conv(xx, wt, s, p):
        return lax.conv_general_dilated(
            xx.astype(cdt), jnp.transpose(wt, (2, 3, 1, 0)).astype(cdt),
            (s, s), [(p, p), (p, p)],
            dimension_numbers=("NHWC", "HWIO", "NHWC"),
            preferred_element_type=jnp.float32)

    def bn(z, g, b, store_z=True):
        mean = z.mean(axis=(0, 1, 2), keepdims=True)
        var = jnp.square(z - mean).mean(axis=(0, 1, 2), keepdims=True)
        zz = store(z) if store_z else z
        return (zz - mean) * (g / jnp.sqrt(var + _EPS)) + b

    x = jnp.transpose(x_nchw, (0, 2, 3, 1)).astype(jnp.float32)
    cin, cout = x.shape[-1], params["w1"].shape[0]
    y1 = store(jnp.maximum(
        bn(conv(x, params["w1"], stride, 1), params["g1"], params["b1"]), 0.0))
    if stride != 1 or cin != cout:
        res = bn(conv(x, params["wd"], stride, 0), params["gd"], params["bd"],
                 store_z=False)
    else:
        res = store(x)
    y2 = bn(conv(y1, params["w2"], 1, 1), params["g2"], params["b2"]) + res
    return jnp.transpose(jnp.maximum(y2, 0.0), (0, 3, 1, 2))


# --------------------------------- main -------------------------------------

def _make_params(key, cin, cout, downsample):
    ks = jax.random.split(key, 8)
    p = {
        "w1": jax.random.normal(ks[0], (cout, cin, 3, 3), jnp.float32) * 0.1,
        "g1": 1.0 + 0.1 * jax.random.normal(ks[1], (cout,), jnp.float32),
        "b1": 0.1 * jax.random.normal(ks[2], (cout,), jnp.float32),
        "w2": jax.random.normal(ks[3], (cout, cout, 3, 3), jnp.float32) * 0.1,
        "g2": 1.0 + 0.1 * jax.random.normal(ks[4], (cout,), jnp.float32),
        "b2": 0.1 * jax.random.normal(ks[5], (cout,), jnp.float32),
    }
    if downsample:
        p["wd"] = jax.random.normal(ks[6], (cout, cin, 1, 1), jnp.float32) * 0.1
        p["gd"] = 1.0 + 0.1 * jax.random.normal(ks[7], (cout,), jnp.float32)
        p["bd"] = jnp.zeros((cout,), jnp.float32)
    return p


def _check(x, params, stride, n, cout, h, w):
    fwd = jax.jit(basic_block_forward, static_argnums=(2,))
    out = jax.block_until_ready(fwd(x, params, stride))
    assert out.shape == (n, cout, h // stride, w // stride), out.shape
    # Tight check vs a reference mirroring the kernel's bf16 numerics.
    ref_m = _ref_forward(x, params, stride, matched=True)
    err_m = float(jnp.max(jnp.abs(out - ref_m)))
    assert err_m < 2e-2, f"matched-reference mismatch: {err_m}"
    # Loose sanity check vs the full-f32 reference (bf16 operand rounding).
    ref_f = _ref_forward(x, params, stride, matched=False)
    err_f = float(jnp.max(jnp.abs(out - ref_f)))
    assert err_f < 2e-1, f"f32-reference mismatch: {err_f}"


if __name__ == "__main__":
    key = jax.random.PRNGKey(0)
    k1, k2, kx1, kx2 = jax.random.split(key, 4)

    # Test 1: downsample path active (stride 2, channels 4 -> 8): conv1 takes
    # the strided patch fallback, conv2 + fused 1x1 residual take fused paths.
    N, CIN, COUT, H, W, STRIDE = 2, 4, 8, 16, 16, 2
    params = _make_params(k1, CIN, COUT, downsample=True)
    x = jax.random.normal(kx1, (N, CIN, H, W), jnp.float32)
    _check(x, params, STRIDE, N, COUT, H, W)

    # Test 2: identity path (stride 1, channels 8 -> 8): both convs fused.
    C2 = 8
    params2 = _make_params(k2, C2, C2, downsample=False)
    x2 = jax.random.normal(kx2, (N, C2, H, W), jnp.float32)
    _check(x2, params2, 1, N, C2, H, W)

    print("KERNEL_OK")
</pallas_src>

<mosaic_0001>
module attributes {stable_mosaic.version = 11 : i64} {
  func.func @_bn_relu_kernel(%arg0: i32, %arg1: memref<128x128xbf16, #tpu.memory_space<vmem>>, %arg2: memref<1x128xf32, #tpu.memory_space<vmem>>, %arg3: memref<1x128xf32, #tpu.memory_space<vmem>>, %arg4: memref<128x128xbf16, #tpu.memory_space<vmem>>) attributes {dimension_semantics = [#tpu.dimension_semantics<parallel>], iteration_bounds = array<i64: 1>, scalar_prefetch = 0 : i64, scratch_operands = 0 : i64, tpu.core_type = #tpu.core_type<tc>, window_params = [{transform_indices = @transform_0, window_bounds = array<i64: 128, 128>}, {pipeline_mode = #tpu.pipeline_mode<synchronous>, transform_indices = @transform_1, window_bounds = array<i64: 1, 128>}, {pipeline_mode = #tpu.pipeline_mode<synchronous>, transform_indices = @transform_2, window_bounds = array<i64: 1, 128>}, {transform_indices = @transform_3, window_bounds = array<i64: 128, 128>}]} {
    %c0 = arith.constant 0 : index
    %c0_0 = arith.constant 0 : index
    %0 = vector.load %arg1[%c0, %c0_0] : memref<128x128xbf16, #tpu.memory_space<vmem>>, vector<128x128xbf16>
    %1 = arith.extf %0 : vector<128x128xbf16> to vector<128x128xf32>
    %c0_1 = arith.constant 0 : index
    %c0_2 = arith.constant 0 : index
    %2 = vector.load %arg2[%c0_1, %c0_2] : memref<1x128xf32, #tpu.memory_space<vmem>>, vector<1x128xf32>
    %3 = vector.broadcast %2 : vector<1x128xf32> to vector<128x128xf32>
    %4 = arith.mulf %1, %3 : vector<128x128xf32>
    %c0_3 = arith.constant 0 : index
    %c0_4 = arith.constant 0 : index
    %5 = vector.load %arg3[%c0_3, %c0_4] : memref<1x128xf32, #tpu.memory_space<vmem>>, vector<1x128xf32>
    %6 = vector.broadcast %5 : vector<1x128xf32> to vector<128x128xf32>
    %7 = arith.addf %4, %6 : vector<128x128xf32>
    %cst = arith.constant 0.000000e+00 : f32
    %8 = vector.broadcast %cst : f32 to vector<128x128xf32>
    %9 = arith.maximumf %7, %8 : vector<128x128xf32>
    %10 = arith.truncf %9 : vector<128x128xf32> to vector<128x128xbf16>
    %c0_5 = arith.constant 0 : index
    %c0_6 = arith.constant 0 : index
    %11 = vector.load %arg4[%c0_5, %c0_6] : memref<128x128xbf16, #tpu.memory_space<vmem>>, vector<128x128xbf16>
    tpu.vector_store %arg4[%c0_5, %c0_6], %10 {strides = array<i32>} : memref<128x128xbf16, #tpu.memory_space<vmem>>, vector<128x128xbf16>,
    return
  }
  func.func @transform_0(%arg0: i32) -> (i32, i32) {
    %c0_i32 = arith.constant 0 : i32
    %c0_i32_0 = arith.constant 0 : i32
    return %arg0, %c0_i32 : i32, i32
  }
  func.func @transform_1(%arg0: i32) -> (i32, i32) {
    %c0_i32 = arith.constant 0 : i32
    %c0_i32_0 = arith.constant 0 : i32
    %c0_i32_1 = arith.constant 0 : i32
    return %c0_i32, %c0_i32_0 : i32, i32
  }
  func.func @transform_2(%arg0: i32) -> (i32, i32) {
    %c0_i32 = arith.constant 0 : i32
    %c0_i32_0 = arith.constant 0 : i32
    %c0_i32_1 = arith.constant 0 : i32
    return %c0_i32, %c0_i32_0 : i32, i32
  }
  func.func @transform_3(%arg0: i32) -> (i32, i32) {
    %c0_i32 = arith.constant 0 : i32
    %c0_i32_0 = arith.constant 0 : i32
    return %arg0, %c0_i32 : i32, i32
  }
}

module attributes {stable_mosaic.version = 11 : i64} {
  func.func @_patch_matmul_kernel(%arg0: i32, %arg1: memref<128x36xbf16, #tpu.memory_space<vmem>>, %arg2: memref<36x128xbf16, #tpu.memory_space<vmem>>, %arg3: memref<128x128xbf16, #tpu.memory_space<vmem>>, %arg4: memref<1x1x128xf32, #tpu.memory_space<vmem>>, %arg5: memref<1x1x128xf32, #tpu.memory_space<vmem>>) attributes {dimension_semantics = [#tpu.dimension_semantics<parallel>], iteration_bounds = array<i64: 1>, scalar_prefetch = 0 : i64, scratch_operands = 0 : i64, tpu.core_type = #tpu.core_type<tc>, window_params = [{transform_indices = @transform_0, window_bounds = array<i64: 128, 36>}, {pipeline_mode = #tpu.pipeline_mode<synchronous>, transform_indices = @transform_1, window_bounds = array<i64: 36, 128>}, {transform_indices = @transform_2, window_bounds = array<i64: 128, 128>}, {transform_indices = @transform_3, window_bounds = array<i64: 1, 1, 128>}, {transform_indices = @transform_4, window_bounds = array<i64: 1, 1, 128>}]} {
    %c0 = arith.constant 0 : index
    %c0_0 = arith.constant 0 : index
    %0 = vector.load %arg1[%c0, %c0_0] : memref<128x36xbf16, #tpu.memory_space<vmem>>, vector<128x36xbf16>
    %c0_1 = arith.constant 0 : index
    %c0_2 = arith.constant 0 : index
    %1 = vector.load %arg2[%c0_1, %c0_2] : memref<36x128xbf16, #tpu.memory_space<vmem>>, vector<36x128xbf16>
    %cst = arith.constant dense<0.000000e+00> : vector<128x128xf32>
    %2 = tpu.matmul %0, %1, %cst {dimension_numbers = #tpu.dot_dimension_numbers<[1], [0], [0], [1], [0, 0, 1, 1], [], []>} : vector<128x36xbf16>, vector<36x128xbf16>, vector<128x128xf32> -> vector<128x128xf32>
    %3 = arith.truncf %2 : vector<128x128xf32> to vector<128x128xbf16>
    %c0_3 = arith.constant 0 : index
    %c0_4 = arith.constant 0 : index
    %4 = vector.load %arg3[%c0_3, %c0_4] : memref<128x128xbf16, #tpu.memory_space<vmem>>, vector<128x128xbf16>
    tpu.vector_store %arg3[%c0_3, %c0_4], %3 {strides = array<i32>} : memref<128x128xbf16, #tpu.memory_space<vmem>>, vector<128x128xbf16>,
    %cst_5 = arith.constant dense<0.000000e+00> : vector<128xf32>
    %5 = vector.multi_reduction <add>, %2, %cst_5 [0] : vector<128x128xf32> to vector<128xf32>
    %6 = vector.shape_cast %5 : vector<128xf32> to vector<1x128xf32>
    %c0_6 = arith.constant 0 : index
    %c0_7 = arith.constant 0 : index
    %c0_8 = arith.constant 0 : index
    %7 = vector.load %arg4[%c0_6, %c0_7, %c0_8] : memref<1x1x128xf32, #tpu.memory_space<vmem>>, vector<1x1x128xf32>
    %8 = vector.shape_cast %7 : vector<1x1x128xf32> to vector<1x128xf32>
    %9 = vector.shape_cast %6 : vector<1x128xf32> to vector<1x1x128xf32>
    tpu.vector_store %arg4[%c0_6, %c0_7, %c0_8], %9 {strides = array<i32>} : memref<1x1x128xf32, #tpu.memory_space<vmem>>, vector<1x1x128xf32>,
    %10 = arith.mulf %2, %2 : vector<128x128xf32>
    %cst_9 = arith.constant dense<0.000000e+00> : vector<128xf32>
    %11 = vector.multi_reduction <add>, %10, %cst_9 [0] : vector<128x128xf32> to vector<128xf32>
    %12 = vector.shape_cast %11 : vector<128xf32> to vector<1x128xf32>
    %c0_10 = arith.constant 0 : index
    %c0_11 = arith.constant 0 : index
    %c0_12 = arith.constant 0 : index
    %13 = vector.load %arg5[%c0_10, %c0_11, %c0_12] : memref<1x1x128xf32, #tpu.memory_space<vmem>>, vector<1x1x128xf32>
    %14 = vector.shape_cast %13 : vector<1x1x128xf32> to vector<1x128xf32>
    %15 = vector.shape_cast %12 : vector<1x128xf32> to vector<1x1x128xf32>
    tpu.vector_store %arg5[%c0_10, %c0_11, %c0_12], %15 {strides = array<i32>} : memref<1x1x128xf32, #tpu.memory_space<vmem>>, vector<1x1x128xf32>,
    return
  }
  func.func @transform_0(%arg0: i32) -> (i32, i32) {
    %c0_i32 = arith.constant 0 : i32
    %c0_i32_0 = arith.constant 0 : i32
    return %arg0, %c0_i32 : i32, i32
  }
  func.func @transform_1(%arg0: i32) -> (i32, i32) {
    %c0_i32 = arith.constant 0 : i32
    %c0_i32_0 = arith.constant 0 : i32
    %c0_i32_1 = arith.constant 0 : i32
    return %c0_i32, %c0_i32_0 : i32, i32
  }
  func.func @transform_2(%arg0: i32) -> (i32, i32) {
    %c0_i32 = arith.constant 0 : i32
    %c0_i32_0 = arith.constant 0 : i32
    return %arg0, %c0_i32 : i32, i32
  }
  func.func @transform_3(%arg0: i32) -> (i32, i32, i32) {
    %c0_i32 = arith.constant 0 : i32
    %c0_i32_0 = arith.constant 0 : i32
    %c0_i32_1 = arith.constant 0 : i32
    return %arg0, %c0_i32, %c0_i32_0 : i32, i32, i32
  }
  func.func @transform_4(%arg0: i32) -> (i32, i32, i32) {
    %c0_i32 = arith.constant 0 : i32
    %c0_i32_0 = arith.constant 0 : i32
    %c0_i32_1 = arith.constant 0 : i32
    return %arg0, %c0_i32, %c0_i32_0 : i32, i32, i32
  }
}

module attributes {stable_mosaic.version = 11 : i64} {
  func.func @_conv3x3_s1_kernel(%arg0: i32, %arg1: memref<1x10x10x128xbf16, #tpu.memory_space<vmem>>, %arg2: memref<9x128x128xbf16, #tpu.memory_space<vmem>>, %arg3: memref<64x128xbf16, #tpu.memory_space<vmem>>, %arg4: memref<1x1x128xf32, #tpu.memory_space<vmem>>, %arg5: memref<1x1x128xf32, #tpu.memory_space<vmem>>) attributes {dimension_semantics = [#tpu.dimension_semantics<parallel>], iteration_bounds = array<i64: 2>, scalar_prefetch = 0 : i64, scratch_operands = 0 : i64, tpu.core_type = #tpu.core_type<tc>, window_params = [{transform_indices = @transform_0, window_bounds = array<i64: 1, 10, 10, 128>}, {pipeline_mode = #tpu.pipeline_mode<synchronous>, transform_indices = @transform_1, window_bounds = array<i64: 9, 128, 128>}, {transform_indices = @transform_2, window_bounds = array<i64: 64, 128>}, {transform_indices = @transform_3, window_bounds = array<i64: 1, 1, 128>}, {transform_indices = @transform_4, window_bounds = array<i64: 1, 1, 128>}]} {
    %cst = arith.constant 0.000000e+00 : f32
    %0 = vector.broadcast %cst : f32 to vector<64x128xf32>
    %c0 = arith.constant 0 : index
    %c0_0 = arith.constant 0 : index
    %c0_1 = arith.constant 0 : index
    %c0_2 = arith.constant 0 : index
    %1 = vector.load %arg1[%c0, %c0_0, %c0_1, %c0_2] : memref<1x10x10x128xbf16, #tpu.memory_space<vmem>>, vector<1x8x8x128xbf16>
    %2 = vector.shape_cast %1 : vector<1x8x8x128xbf16> to vector<8x8x128xbf16>
    %3 = vector.shape_cast %2 : vector<8x8x128xbf16> to vector<64x128xbf16>
    %c0_3 = arith.constant 0 : index
    %c0_4 = arith.constant 0 : index
    %c0_5 = arith.constant 0 : index
    %4 = vector.load %arg2[%c0_3, %c0_4, %c0_5] : memref<9x128x128xbf16, #tpu.memory_space<vmem>>, vector<1x128x128xbf16>
    %5 = vector.shape_cast %4 : vector<1x128x128xbf16> to vector<128x128xbf16>
    %cst_6 = arith.constant dense<0.000000e+00> : vector<64x128xf32>
    %6 = tpu.matmul %3, %5, %cst_6 {dimension_numbers = #tpu.dot_dimension_numbers<[1], [0], [0], [1], [0, 0, 1, 1], [], []>} : vector<64x128xbf16>, vector<128x128xbf16>, vector<64x128xf32> -> vector<64x128xf32>
    %7 = arith.addf %0, %6 : vector<64x128xf32>
    %c0_7 = arith.constant 0 : index
    %c0_8 = arith.constant 0 : index
    %c1 = arith.constant 1 : index
    %c0_9 = arith.constant 0 : index
    %8 = vector.load %arg1[%c0_7, %c0_8, %c1, %c0_9] : memref<1x10x10x128xbf16, #tpu.memory_space<vmem>>, vector<1x8x8x128xbf16>
    %9 = vector.shape_cast %8 : vector<1x8x8x128xbf16> to vector<8x8x128xbf16>
    %10 = vector.shape_cast %9 : vector<8x8x128xbf16> to vector<64x128xbf16>
    %c1_10 = arith.constant 1 : index
    %c0_11 = arith.constant 0 : index
    %c0_12 = arith.constant 0 : index
    %11 = vector.load %arg2[%c1_10, %c0_11, %c0_12] : memref<9x128x128xbf16, #tpu.memory_space<vmem>>, vector<1x128x128xbf16>
    %12 = vector.shape_cast %11 : vector<1x128x128xbf16> to vector<128x128xbf16>
    %cst_13 = arith.constant dense<0.000000e+00> : vector<64x128xf32>
    %13 = tpu.matmul %10, %12, %cst_13 {dimension_numbers = #tpu.dot_dimension_numbers<[1], [0], [0], [1], [0, 0, 1, 1], [], []>} : vector<64x128xbf16>, vector<128x128xbf16>, vector<64x128xf32> -> vector<64x128xf32>
    %14 = arith.addf %7, %13 : vector<64x128xf32>
    %c0_14 = arith.constant 0 : index
    %c0_15 = arith.constant 0 : index
    %c2 = arith.constant 2 : index
    %c0_16 = arith.constant 0 : index
    %15 = vector.load %arg1[%c0_14, %c0_15, %c2, %c0_16] : memref<1x10x10x128xbf16, #tpu.memory_space<vmem>>, vector<1x8x8x128xbf16>
    %16 = vector.shape_cast %15 : vector<1x8x8x128xbf16> to vector<8x8x128xbf16>
    %17 = vector.shape_cast %16 : vector<8x8x128xbf16> to vector<64x128xbf16>
    %c2_17 = arith.constant 2 : index
    %c0_18 = arith.constant 0 : index
    %c0_19 = arith.constant 0 : index
    %18 = vector.load %arg2[%c2_17, %c0_18, %c0_19] : memref<9x128x128xbf16, #tpu.memory_space<vmem>>, vector<1x128x128xbf16>
    %19 = vector.shape_cast %18 : vector<1x128x128xbf16> to vector<128x128xbf16>
    %cst_20 = arith.constant dense<0.000000e+00> : vector<64x128xf32>
    %20 = tpu.matmul %17, %19, %cst_20 {dimension_numbers = #tpu.dot_dimension_numbers<[1], [0], [0], [1], [0, 0, 1, 1], [], []>} : vector<64x128xbf16>, vector<128x128xbf16>, vector<64x128xf32> -> vector<64x128xf32>
    %21 = arith.addf %14, %20 : vector<64x128xf32>
    %c0_21 = arith.constant 0 : index
    %c1_22 = arith.constant 1 : index
    %c0_23 = arith.constant 0 : index
    %c0_24 = arith.constant 0 : index
    %22 = vector.load %arg1[%c0_21, %c1_22, %c0_23, %c0_24] : memref<1x10x10x128xbf16, #tpu.memory_space<vmem>>, vector<1x8x8x128xbf16>
    %23 = vector.shape_cast %22 : vector<1x8x8x128xbf16> to vector<8x8x128xbf16>
    %24 = vector.shape_cast %23 : vector<8x8x128xbf16> to vector<64x128xbf16>
    %c3 = arith.constant 3 : index
    %c0_25 = arith.constant 0 : index
    %c0_26 = arith.constant 0 : index
    %25 = vector.load %arg2[%c3, %c0_25, %c0_26] : memref<9x128x128xbf16, #tpu.memory_space<vmem>>, vector<1x128x128xbf16>
    %26 = vector.shape_cast %25 : vector<1x128x128xbf16> to vector<128x128xbf16>
    %cst_27 = arith.constant dense<0.000000e+00> : vector<64x128xf32>
    %27 = tpu.matmul %24, %26, %cst_27 {dimension_numbers = #tpu.dot_dimension_numbers<[1], [0], [0], [1], [0, 0, 1, 1], [], []>} : vector<64x128xbf16>, vector<128x128xbf16>, vector<64x128xf32> -> vector<64x128xf32>
    %28 = arith.addf %21, %27 : vector<64x128xf32>
    %c0_28 = arith.constant 0 : index
    %c1_29 = arith.constant 1 : index
    %c1_30 = arith.constant 1 : index
    %c0_31 = arith.constant 0 : index
    %29 = vector.load %arg1[%c0_28, %c1_29, %c1_30, %c0_31] : memref<1x10x10x128xbf16, #tpu.memory_space<vmem>>, vector<1x8x8x128xbf16>
    %30 = vector.shape_cast %29 : vector<1x8x8x128xbf16> to vector<8x8x128xbf16>
    %31 = vector.shape_cast %30 : vector<8x8x128xbf16> to vector<64x128xbf16>
    %c4 = arith.constant 4 : index
    %c0_32 = arith.constant 0 : index
    %c0_33 = arith.constant 0 : index
    %32 = vector.load %arg2[%c4, %c0_32, %c0_33] : memref<9x128x128xbf16, #tpu.memory_space<vmem>>, vector<1x128x128xbf16>
    %33 = vector.shape_cast %32 : vector<1x128x128xbf16> to vector<128x128xbf16>
    %cst_34 = arith.constant dense<0.000000e+00> : vector<64x128xf32>
    %34 = tpu.matmul %31, %33, %cst_34 {dimension_numbers = #tpu.dot_dimension_numbers<[1], [0], [0], [1], [0, 0, 1, 1], [], []>} : vector<64x128xbf16>, vector<128x128xbf16>, vector<64x128xf32> -> vector<64x128xf32>
    %35 = arith.addf %28, %34 : vector<64x128xf32>
    %c0_35 = arith.constant 0 : index
    %c1_36 = arith.constant 1 : index
    %c2_37 = arith.constant 2 : index
    %c0_38 = arith.constant 0 : index
    %36 = vector.load %arg1[%c0_35, %c1_36, %c2_37, %c0_38] : memref<1x10x10x128xbf16, #tpu.memory_space<vmem>>, vector<1x8x8x128xbf16>
    %37 = vector.shape_cast %36 : vector<1x8x8x128xbf16> to vector<8x8x128xbf16>
    %38 = vector.shape_cast %37 : vector<8x8x128xbf16> to vector<64x128xbf16>
    %c5 = arith.constant 5 : index
    %c0_39 = arith.constant 0 : index
    %c0_40 = arith.constant 0 : index
    %39 = vector.load %arg2[%c5, %c0_39, %c0_40] : memref<9x128x128xbf16, #tpu.memory_space<vmem>>, vector<1x128x128xbf16>
    %40 = vector.shape_cast %39 : vector<1x128x128xbf16> to vector<128x128xbf16>
    %cst_41 = arith.constant dense<0.000000e+00> : vector<64x128xf32>
    %41 = tpu.matmul %38, %40, %cst_41 {dimension_numbers = #tpu.dot_dimension_numbers<[1], [0], [0], [1], [0, 0, 1, 1], [], []>} : vector<64x128xbf16>, vector<128x128xbf16>, vector<64x128xf32> -> vector<64x128xf32>
    %42 = arith.addf %35, %41 : vector<64x128xf32>
    %c0_42 = arith.constant 0 : index
    %c2_43 = arith.constant 2 : index
    %c0_44 = arith.constant 0 : index
    %c0_45 = arith.constant 0 : index
    %43 = vector.load %arg1[%c0_42, %c2_43, %c0_44, %c0_45] : memref<1x10x10x128xbf16, #tpu.memory_space<vmem>>, vector<1x8x8x128xbf16>
    %44 = vector.shape_cast %43 : vector<1x8x8x128xbf16> to vector<8x8x128xbf16>
    %45 = vector.shape_cast %44 : vector<8x8x128xbf16> to vector<64x128xbf16>
    %c6 = arith.constant 6 : index
    %c0_46 = arith.constant 0 : index
    %c0_47 = arith.constant 0 : index
    %46 = vector.load %arg2[%c6, %c0_46, %c0_47] : memref<9x128x128xbf16, #tpu.memory_space<vmem>>, vector<1x128x128xbf16>
    %47 = vector.shape_cast %46 : vector<1x128x128xbf16> to vector<128x128xbf16>
    %cst_48 = arith.constant dense<0.000000e+00> : vector<64x128xf32>
    %48 = tpu.matmul %45, %47, %cst_48 {dimension_numbers = #tpu.dot_dimension_numbers<[1], [0], [0], [1], [0, 0, 1, 1], [], []>} : vector<64x128xbf16>, vector<128x128xbf16>, vector<64x128xf32> -> vector<64x128xf32>
    %49 = arith.addf %42, %48 : vector<64x128xf32>
    %c0_49 = arith.constant 0 : index
    %c2_50 = arith.constant 2 : index
    %c1_51 = arith.constant 1 : index
    %c0_52 = arith.constant 0 : index
    %50 = vector.load %arg1[%c0_49, %c2_50, %c1_51, %c0_52] : memref<1x10x10x128xbf16, #tpu.memory_space<vmem>>, vector<1x8x8x128xbf16>
    %51 = vector.shape_cast %50 : vector<1x8x8x128xbf16> to vector<8x8x128xbf16>
    %52 = vector.shape_cast %51 : vector<8x8x128xbf16> to vector<64x128xbf16>
    %c7 = arith.constant 7 : index
    %c0_53 = arith.constant 0 : index
    %c0_54 = arith.constant 0 : index
    %53 = vector.load %arg2[%c7, %c0_53, %c0_54] : memref<9x128x128xbf16, #tpu.memory_space<vmem>>, vector<1x128x128xbf16>
    %54 = vector.shape_cast %53 : vector<1x128x128xbf16> to vector<128x128xbf16>
    %cst_55 = arith.constant dense<0.000000e+00> : vector<64x128xf32>
    %55 = tpu.matmul %52, %54, %cst_55 {dimension_numbers = #tpu.dot_dimension_numbers<[1], [0], [0], [1], [0, 0, 1, 1], [], []>} : vector<64x128xbf16>, vector<128x128xbf16>, vector<64x128xf32> -> vector<64x128xf32>
    %56 = arith.addf %49, %55 : vector<64x128xf32>
    %c0_56 = arith.constant 0 : index
    %c2_57 = arith.constant 2 : index
    %c2_58 = arith.constant 2 : index
    %c0_59 = arith.constant 0 : index
    %57 = vector.load %arg1[%c0_56, %c2_57, %c2_58, %c0_59] : memref<1x10x10x128xbf16, #tpu.memory_space<vmem>>, vector<1x8x8x128xbf16>
    %58 = vector.shape_cast %57 : vector<1x8x8x128xbf16> to vector<8x8x128xbf16>
    %59 = vector.shape_cast %58 : vector<8x8x128xbf16> to vector<64x128xbf16>
    %c8 = arith.constant 8 : index
    %c0_60 = arith.constant 0 : index
    %c0_61 = arith.constant 0 : index
    %60 = vector.load %arg2[%c8, %c0_60, %c0_61] : memref<9x128x128xbf16, #tpu.memory_space<vmem>>, vector<1x128x128xbf16>
    %61 = vector.shape_cast %60 : vector<1x128x128xbf16> to vector<128x128xbf16>
    %cst_62 = arith.constant dense<0.000000e+00> : vector<64x128xf32>
    %62 = tpu.matmul %59, %61, %cst_62 {dimension_numbers = #tpu.dot_dimension_numbers<[1], [0], [0], [1], [0, 0, 1, 1], [], []>} : vector<64x128xbf16>, vector<128x128xbf16>, vector<64x128xf32> -> vector<64x128xf32>
    %63 = arith.addf %56, %62 : vector<64x128xf32>
    %64 = arith.truncf %63 : vector<64x128xf32> to vector<64x128xbf16>
    %c0_63 = arith.constant 0 : index
    %c0_64 = arith.constant 0 : index
    %65 = vector.load %arg3[%c0_63, %c0_64] : memref<64x128xbf16, #tpu.memory_space<vmem>>, vector<64x128xbf16>
    tpu.vector_store %arg3[%c0_63, %c0_64], %64 {strides = array<i32>} : memref<64x128xbf16, #tpu.memory_space<vmem>>, vector<64x128xbf16>,
    %cst_65 = arith.constant dense<0.000000e+00> : vector<128xf32>
    %66 = vector.multi_reduction <add>, %63, %cst_65 [0] : vector<64x128xf32> to vector<128xf32>
    %67 = vector.shape_cast %66 : vector<128xf32> to vector<1x128xf32>
    %c0_66 = arith.constant 0 : index
    %c0_67 = arith.constant 0 : index
    %c0_68 = arith.constant 0 : index
    %68 = vector.load %arg4[%c0_66, %c0_67, %c0_68] : memref<1x1x128xf32, #tpu.memory_space<vmem>>, vector<1x1x128xf32>
    %69 = vector.shape_cast %68 : vector<1x1x128xf32> to vector<1x128xf32>
    %70 = vector.shape_cast %67 : vector<1x128xf32> to vector<1x1x128xf32>
    tpu.vector_store %arg4[%c0_66, %c0_67, %c0_68], %70 {strides = array<i32>} : memref<1x1x128xf32, #tpu.memory_space<vmem>>, vector<1x1x128xf32>,
    %71 = arith.mulf %63, %63 : vector<64x128xf32>
    %cst_69 = arith.constant dense<0.000000e+00> : vector<128xf32>
    %72 = vector.multi_reduction <add>, %71, %cst_69 [0] : vector<64x128xf32> to vector<128xf32>
    %73 = vector.shape_cast %72 : vector<128xf32> to vector<1x128xf32>
    %c0_70 = arith.constant 0 : index
    %c0_71 = arith.constant 0 : index
    %c0_72 = arith.constant 0 : index
    %74 = vector.load %arg5[%c0_70, %c0_71, %c0_72] : memref<1x1x128xf32, #tpu.memory_space<vmem>>, vector<1x1x128xf32>
    %75 = vector.shape_cast %74 : vector<1x1x128xf32> to vector<1x128xf32>
    %76 = vector.shape_cast %73 : vector<1x128xf32> to vector<1x1x128xf32>
    tpu.vector_store %arg5[%c0_70, %c0_71, %c0_72], %76 {strides = array<i32>} : memref<1x1x128xf32, #tpu.memory_space<vmem>>, vector<1x1x128xf32>,
    return
  }
  func.func @transform_0(%arg0: i32) -> (i32, i32, i32, i32) {
    %c0_i32 = arith.constant 0 : i32
    %c0_i32_0 = arith.constant 0 : i32
    %c0_i32_1 = arith.constant 0 : i32
    %c0_i32_2 = arith.constant 0 : i32
    return %arg0, %c0_i32, %c0_i32_0, %c0_i32_1 : i32, i32, i32, i32
  }
  func.func @transform_1(%arg0: i32) -> (i32, i32, i32) {
    %c0_i32 = arith.constant 0 : i32
    %c0_i32_0 = arith.constant 0 : i32
    %c0_i32_1 = arith.constant 0 : i32
    %c0_i32_2 = arith.constant 0 : i32
    return %c0_i32, %c0_i32_0, %c0_i32_1 : i32, i32, i32
  }
  func.func @transform_2(%arg0: i32) -> (i32, i32) {
    %c0_i32 = arith.constant 0 : i32
    %c0_i32_0 = arith.constant 0 : i32
    return %arg0, %c0_i32 : i32, i32
  }
  func.func @transform_3(%arg0: i32) -> (i32, i32, i32) {
    %c0_i32 = arith.constant 0 : i32
    %c0_i32_0 = arith.constant 0 : i32
    %c0_i32_1 = arith.constant 0 : i32
    return %arg0, %c0_i32, %c0_i32_0 : i32, i32, i32
  }
  func.func @transform_4(%arg0: i32) -> (i32, i32, i32) {
    %c0_i32 = arith.constant 0 : i32
    %c0_i32_0 = arith.constant 0 : i32
    %c0_i32_1 = arith.constant 0 : i32
    return %arg0, %c0_i32, %c0_i32_0 : i32, i32, i32
  }
}

module attributes {stable_mosaic.version = 11 : i64} {
  func.func @_residual_stats_kernel(%arg0: i32, %arg1: memref<64x4xbf16, #tpu.memory_space<vmem>>, %arg2: memref<4x128xbf16, #tpu.memory_space<vmem>>, %arg3: memref<1x1x128xf32, #tpu.memory_space<vmem>>, %arg4: memref<1x1x128xf32, #tpu.memory_space<vmem>>) attributes {dimension_semantics = [#tpu.dimension_semantics<parallel>], iteration_bounds = array<i64: 2>, scalar_prefetch = 0 : i64, scratch_operands = 0 : i64, tpu.core_type = #tpu.core_type<tc>, window_params = [{transform_indices = @transform_0, window_bounds = array<i64: 64, 4>}, {pipeline_mode = #tpu.pipeline_mode<synchronous>, transform_indices = @transform_1, window_bounds = array<i64: 4, 128>}, {transform_indices = @transform_2, window_bounds = array<i64: 1, 1, 128>}, {transform_indices = @transform_3, window_bounds = array<i64: 1, 1, 128>}]} {
    %c0 = arith.constant 0 : index
    %c0_0 = arith.constant 0 : index
    %0 = vector.load %arg1[%c0, %c0_0] : memref<64x4xbf16, #tpu.memory_space<vmem>>, vector<64x4xbf16>
    %c0_1 = arith.constant 0 : index
    %c0_2 = arith.constant 0 : index
    %1 = vector.load %arg2[%c0_1, %c0_2] : memref<4x128xbf16, #tpu.memory_space<vmem>>, vector<4x128xbf16>
    %cst = arith.constant dense<0.000000e+00> : vector<64x128xf32>
    %2 = tpu.matmul %0, %1, %cst {dimension_numbers = #tpu.dot_dimension_numbers<[1], [0], [0], [1], [0, 0, 1, 1], [], []>} : vector<64x4xbf16>, vector<4x128xbf16>, vector<64x128xf32> -> vector<64x128xf32>
    %cst_3 = arith.constant dense<0.000000e+00> : vector<128xf32>
    %3 = vector.multi_reduction <add>, %2, %cst_3 [0] : vector<64x128xf32> to vector<128xf32>
    %4 = vector.shape_cast %3 : vector<128xf32> to vector<1x128xf32>
    %c0_4 = arith.constant 0 : index
    %c0_5 = arith.constant 0 : index
    %c0_6 = arith.constant 0 : index
    %5 = vector.load %arg3[%c0_4, %c0_5, %c0_6] : memref<1x1x128xf32, #tpu.memory_space<vmem>>, vector<1x1x128xf32>
    %6 = vector.shape_cast %5 : vector<1x1x128xf32> to vector<1x128xf32>
    %7 = vector.shape_cast %4 : vector<1x128xf32> to vector<1x1x128xf32>
    tpu.vector_store %arg3[%c0_4, %c0_5, %c0_6], %7 {strides = array<i32>} : memref<1x1x128xf32, #tpu.memory_space<vmem>>, vector<1x1x128xf32>,
    %8 = arith.mulf %2, %2 : vector<64x128xf32>
    %cst_7 = arith.constant dense<0.000000e+00> : vector<128xf32>
    %9 = vector.multi_reduction <add>, %8, %cst_7 [0] : vector<64x128xf32> to vector<128xf32>
    %10 = vector.shape_cast %9 : vector<128xf32> to vector<1x128xf32>
    %c0_8 = arith.constant 0 : index
    %c0_9 = arith.constant 0 : index
    %c0_10 = arith.constant 0 : index
    %11 = vector.load %arg4[%c0_8, %c0_9, %c0_10] : memref<1x1x128xf32, #tpu.memory_space<vmem>>, vector<1x1x128xf32>
    %12 = vector.shape_cast %11 : vector<1x1x128xf32> to vector<1x128xf32>
    %13 = vector.shape_cast %10 : vector<1x128xf32> to vector<1x1x128xf32>
    tpu.vector_store %arg4[%c0_8, %c0_9, %c0_10], %13 {strides = array<i32>} : memref<1x1x128xf32, #tpu.memory_space<vmem>>, vector<1x1x128xf32>,
    return
  }
  func.func @transform_0(%arg0: i32) -> (i32, i32) {
    %c0_i32 = arith.constant 0 : i32
    %c0_i32_0 = arith.constant 0 : i32
    return %arg0, %c0_i32 : i32, i32
  }
  func.func @transform_1(%arg0: i32) -> (i32, i32) {
    %c0_i32 = arith.constant 0 : i32
    %c0_i32_0 = arith.constant 0 : i32
    %c0_i32_1 = arith.constant 0 : i32
    return %c0_i32, %c0_i32_0 : i32, i32
  }
  func.func @transform_2(%arg0: i32) -> (i32, i32, i32) {
    %c0_i32 = arith.constant 0 : i32
    %c0_i32_0 = arith.constant 0 : i32
    %c0_i32_1 = arith.constant 0 : i32
    return %arg0, %c0_i32, %c0_i32_0 : i32, i32, i32
  }
  func.func @transform_3(%arg0: i32) -> (i32, i32, i32) {
    %c0_i32 = arith.constant 0 : i32
    %c0_i32_0 = arith.constant 0 : i32
    %c0_i32_1 = arith.constant 0 : i32
    return %arg0, %c0_i32, %c0_i32_0 : i32, i32, i32
  }
}

module attributes {stable_mosaic.version = 11 : i64} {
  func.func @_bn_res_relu_kernel(%arg0: i32, %arg1: memref<64x128xbf16, #tpu.memory_space<vmem>>, %arg2: memref<64x4xbf16, #tpu.memory_space<vmem>>, %arg3: memref<4x128xbf16, #tpu.memory_space<vmem>>, %arg4: memref<1x128xf32, #tpu.memory_space<vmem>>, %arg5: memref<1x128xf32, #tpu.memory_space<vmem>>, %arg6: memref<1x128xf32, #tpu.memory_space<vmem>>, %arg7: memref<1x128xf32, #tpu.memory_space<vmem>>, %arg8: memref<64x128xf32, #tpu.memory_space<vmem>>) attributes {dimension_semantics = [#tpu.dimension_semantics<parallel>], iteration_bounds = array<i64: 2>, scalar_prefetch = 0 : i64, scratch_operands = 0 : i64, tpu.core_type = #tpu.core_type<tc>, window_params = [{transform_indices = @transform_0, window_bounds = array<i64: 64, 128>}, {transform_indices = @transform_1, window_bounds = array<i64: 64, 4>}, {pipeline_mode = #tpu.pipeline_mode<synchronous>, transform_indices = @transform_2, window_bounds = array<i64: 4, 128>}, {pipeline_mode = #tpu.pipeline_mode<synchronous>, transform_indices = @transform_3, window_bounds = array<i64: 1, 128>}, {pipeline_mode = #tpu.pipeline_mode<synchronous>, transform_indices = @transform_4, window_bounds = array<i64: 1, 128>}, {pipeline_mode = #tpu.pipeline_mode<synchronous>, transform_indices = @transform_5, window_bounds = array<i64: 1, 128>}, {pipeline_mode = #tpu.pipeline_mode<synchronous>, transform_indices = @transform_6, window_bounds = array<i64: 1, 128>}, {transform_indices = @transform_7, window_bounds = array<i64: 64, 128>}]} {
    %c0 = arith.constant 0 : index
    %c0_0 = arith.constant 0 : index
    %0 = vector.load %arg1[%c0, %c0_0] : memref<64x128xbf16, #tpu.memory_space<vmem>>, vector<64x128xbf16>
    %1 = arith.extf %0 : vector<64x128xbf16> to vector<64x128xf32>
    %c0_1 = arith.constant 0 : index
    %c0_2 = arith.constant 0 : index
    %2 = vector.load %arg4[%c0_1, %c0_2] : memref<1x128xf32, #tpu.memory_space<vmem>>, vector<1x128xf32>
    %3 = vector.broadcast %2 : vector<1x128xf32> to vector<64x128xf32>
    %4 = arith.mulf %1, %3 : vector<64x128xf32>
    %c0_3 = arith.constant 0 : index
    %c0_4 = arith.constant 0 : index
    %5 = vector.load %arg5[%c0_3, %c0_4] : memref<1x128xf32, #tpu.memory_space<vmem>>, vector<1x128xf32>
    %6 = vector.broadcast %5 : vector<1x128xf32> to vector<64x128xf32>
    %7 = arith.addf %4, %6 : vector<64x128xf32>
    %c0_5 = arith.constant 0 : index
    %c0_6 = arith.constant 0 : index
    %8 = vector.load %arg2[%c0_5, %c0_6] : memref<64x4xbf16, #tpu.memory_space<vmem>>, vector<64x4xbf16>
    %c0_7 = arith.constant 0 : index
    %c0_8 = arith.constant 0 : index
    %9 = vector.load %arg3[%c0_7, %c0_8] : memref<4x128xbf16, #tpu.memory_space<vmem>>, vector<4x128xbf16>
    %cst = arith.constant dense<0.000000e+00> : vector<64x128xf32>
    %10 = tpu.matmul %8, %9, %cst {dimension_numbers = #tpu.dot_dimension_numbers<[1], [0], [0], [1], [0, 0, 1, 1], [], []>} : vector<64x4xbf16>, vector<4x128xbf16>, vector<64x128xf32> -> vector<64x128xf32>
    %c0_9 = arith.constant 0 : index
    %c0_10 = arith.constant 0 : index
    %11 = vector.load %arg6[%c0_9, %c0_10] : memref<1x128xf32, #tpu.memory_space<vmem>>, vector<1x128xf32>
    %12 = vector.broadcast %11 : vector<1x128xf32> to vector<64x128xf32>
    %13 = arith.mulf %10, %12 : vector<64x128xf32>
    %14 = arith.addf %7, %13 : vector<64x128xf32>
    %c0_11 = arith.constant 0 : index
    %c0_12 = arith.constant 0 : index
    %15 = vector.load %arg7[%c0_11, %c0_12] : memref<1x128xf32, #tpu.memory_space<vmem>>, vector<1x128xf32>
    %16 = vector.broadcast %15 : vector<1x128xf32> to vector<64x128xf32>
    %17 = arith.addf %14, %16 : vector<64x128xf32>
    %cst_13 = arith.constant 0.000000e+00 : f32
    %18 = vector.broadcast %cst_13 : f32 to vector<64x128xf32>
    %19 = arith.maximumf %17, %18 : vector<64x128xf32>
    %c0_14 = arith.constant 0 : index
    %c0_15 = arith.constant 0 : index
    %20 = vector.load %arg8[%c0_14, %c0_15] : memref<64x128xf32, #tpu.memory_space<vmem>>, vector<64x128xf32>
    tpu.vector_store %arg8[%c0_14, %c0_15], %19 {strides = array<i32>} : memref<64x128xf32, #tpu.memory_space<vmem>>, vector<64x128xf32>,
    return
  }
  func.func @transform_0(%arg0: i32) -> (i32, i32) {
    %c0_i32 = arith.constant 0 : i32
    %c0_i32_0 = arith.constant 0 : i32
    return %arg0, %c0_i32 : i32, i32
  }
  func.func @transform_1(%arg0: i32) -> (i32, i32) {
    %c0_i32 = arith.constant 0 : i32
    %c0_i32_0 = arith.constant 0 : i32
    return %arg0, %c0_i32 : i32, i32
  }
  func.func @transform_2(%arg0: i32) -> (i32, i32) {
    %c0_i32 = arith.constant 0 : i32
    %c0_i32_0 = arith.constant 0 : i32
    %c0_i32_1 = arith.constant 0 : i32
    return %c0_i32, %c0_i32_0 : i32, i32
  }
  func.func @transform_3(%arg0: i32) -> (i32, i32) {
    %c0_i32 = arith.constant 0 : i32
    %c0_i32_0 = arith.constant 0 : i32
    %c0_i32_1 = arith.constant 0 : i32
    return %c0_i32, %c0_i32_0 : i32, i32
  }
  func.func @transform_4(%arg0: i32) -> (i32, i32) {
    %c0_i32 = arith.constant 0 : i32
    %c0_i32_0 = arith.constant 0 : i32
    %c0_i32_1 = arith.constant 0 : i32
    return %c0_i32, %c0_i32_0 : i32, i32
  }
  func.func @transform_5(%arg0: i32) -> (i32, i32) {
    %c0_i32 = arith.constant 0 : i32
    %c0_i32_0 = arith.constant 0 : i32
    %c0_i32_1 = arith.constant 0 : i32
    return %c0_i32, %c0_i32_0 : i32, i32
  }
  func.func @transform_6(%arg0: i32) -> (i32, i32) {
    %c0_i32 = arith.constant 0 : i32
    %c0_i32_0 = arith.constant 0 : i32
    %c0_i32_1 = arith.constant 0 : i32
    return %c0_i32, %c0_i32_0 : i32, i32
  }
  func.func @transform_7(%arg0: i32) -> (i32, i32) {
    %c0_i32 = arith.constant 0 : i32
    %c0_i32_0 = arith.constant 0 : i32
    return %arg0, %c0_i32 : i32, i32
  }
}

</mosaic_0001>

<llo_original>
// kernel: basic_block_forward.6
$region0: #{basic_block_forward.6}
  #allocation0 [shape = 'u32[]', space=smem, size = 0x4, offset = 0x4, fixed_abs, tag = 'smem constant byte address 0x4 - core index']
  #allocation1 [shape = 'u32[72,128]{1,0:T(1,128)}', space=vmem, size = 0x9000, scoped, tag = 'internal scratch']
  %s0 = inlined_call_operand.vmem [shape: bf16[128,128], index: 0, kind: input, shape index: {}]
  %s1 = inlined_call_operand.vmem [shape: f32[1,128], index: 1, kind: input, shape index: {}]
  %s2 = inlined_call_operand.vmem [shape: f32[1,128], index: 2, kind: input, shape index: {}]
  %s3 = inlined_call_operand.vmem [shape: bf16[128,128], index: 3, kind: output, shape index: {}]
  %s4 = sld [smem:[#allocation0]]
  $region22: #{basic_block_forward.6} parent=0
    _
  %s6 = ssub.s32 1, %s4
  %s7 = scalar_select 0, %s6, %s4
  // Predicated region
  $region2: #{basic_block_forward.6} parent=0 // pred_check
    _
  $region3: #{basic_block_forward.6} parent=0 // pred_check_branch
    %9 = sbr.rel (0) target = $region5
  $region4: #{basic_block_forward.6} parent=0 // pred_region
    _
  $region5: #{basic_block_forward.6} parent=0 // pred_fallthru
    _
  // Predicated region
  $region6: #{basic_block_forward.6} parent=0 // pred_check
    _
  $region7: #{basic_block_forward.6} parent=0 // pred_check_branch
    %11 = sbr.rel (0) target = $region9
  $region8: #{basic_block_forward.6} parent=0 // pred_region
    _
  $region9: #{basic_block_forward.6} parent=0 // pred_fallthru
    _
  // Predicated region
  $region10: #{basic_block_forward.6} parent=0 // pred_check
    _
  $region11: #{basic_block_forward.6} parent=0 // pred_check_branch
    %13 = sbr.rel (0) target = $region13
  $region12: #{basic_block_forward.6} parent=0 // pred_region
    _
  $region13: #{basic_block_forward.6} parent=0 // pred_fallthru
    _
  %v14 = vld [vmem:[%s0] sm:$0xf]
  %v15 = vld [vmem:[%s0 + $0x4] sm:$0xf]
  %v16 = vld [vmem:[%s0 + $0x8] sm:$0xf]
  %v17 = vld [vmem:[%s0 + $0xc] sm:$0xf]
  %v18 = vld [vmem:[%s0 + $0x10] sm:$0xf]
  %v19 = vld [vmem:[%s0 + $0x14] sm:$0xf]
  %v20 = vld [vmem:[%s0 + $0x18] sm:$0xf]
  %v21 = vld [vmem:[%s0 + $0x1c] sm:$0xf]
  %v22 = vld [vmem:[%s0 + $0x20] sm:$0xf]
  %v23 = vld [vmem:[%s0 + $0x24] sm:$0xf]
  %v24 = vld [vmem:[%s0 + $0x28] sm:$0xf]
  %v25 = vld [vmem:[%s0 + $0x2c] sm:$0xf]
  %v26 = vld [vmem:[%s0 + $0x30] sm:$0xf]
  %v27 = vld [vmem:[%s0 + $0x34] sm:$0xf]
  %v28 = vld [vmem:[%s0 + $0x38] sm:$0xf]
  %v29 = vld [vmem:[%s0 + $0x3c] sm:$0xf]
  %v30 = vunpack.c.l.bf16 %v14
  %v31 = vunpack.c.l.bf16 %v15
  %v32 = vunpack.c.l.bf16 %v16
  %v33 = vunpack.c.l.bf16 %v17
  %v34 = vunpack.c.l.bf16 %v18
  %v35 = vunpack.c.l.bf16 %v19
  %v36 = vunpack.c.l.bf16 %v20
  %v37 = vunpack.c.l.bf16 %v21
  %v38 = vunpack.c.l.bf16 %v22
  %v39 = vunpack.c.l.bf16 %v23
  %v40 = vunpack.c.l.bf16 %v24
  %v41 = vunpack.c.l.bf16 %v25
  %v42 = vunpack.c.l.bf16 %v26
  %v43 = vunpack.c.l.bf16 %v27
  %v44 = vunpack.c.l.bf16 %v28
  %v45 = vunpack.c.l.bf16 %v29
  %v46 = vld [vmem:[%s1] sm:$0x1]
  %v48 = vperm.slane %v46, 0
  %v50 = vmul.f32 %v30, %v48
  %v51 = vmul.f32 %v31, %v48
  %v52 = vmul.f32 %v32, %v48
  %v53 = vmul.f32 %v33, %v48
  %v54 = vmul.f32 %v34, %v48
  %v55 = vmul.f32 %v35, %v48
  %v56 = vmul.f32 %v36, %v48
  %v57 = vmul.f32 %v37, %v48
  %v58 = vmul.f32 %v38, %v48
  %v59 = vmul.f32 %v39, %v48
  %v60 = vmul.f32 %v40, %v48
  %v61 = vmul.f32 %v41, %v48
  %v62 = vmul.f32 %v42, %v48
  %v63 = vmul.f32 %v43, %v48
  %v64 = vmul.f32 %v44, %v48
  %v65 = vmul.f32 %v45, %v48
  %v66 = vld [vmem:[%s2] sm:$0x1]
  %v68 = vperm.slane %v66, 0
  %v70 = vadd.f32 %v50, %v68
  %v71 = vadd.f32 %v51, %v68
  %v72 = vadd.f32 %v52, %v68
  %v73 = vadd.f32 %v53, %v68
  %v74 = vadd.f32 %v54, %v68
  %v75 = vadd.f32 %v55, %v68
  %v76 = vadd.f32 %v56, %v68
  %v77 = vadd.f32 %v57, %v68
  %v78 = vadd.f32 %v58, %v68
  %v79 = vadd.f32 %v59, %v68
  %v80 = vadd.f32 %v60, %v68
  %v81 = vadd.f32 %v61, %v68
  %v82 = vadd.f32 %v62, %v68
  %v83 = vadd.f32 %v63, %v68
  %v84 = vadd.f32 %v64, %v68
  %v85 = vadd.f32 %v65, %v68
  %v86 = vmax.f32 %v70, 0.0
  %v87 = vmax.f32 %v71, 0.0
  %v88 = vmax.f32 %v72, 0.0
  %v89 = vmax.f32 %v73, 0.0
  %v90 = vmax.f32 %v74, 0.0
  %v91 = vmax.f32 %v75, 0.0
  %v92 = vmax.f32 %v76, 0.0
  %v93 = vmax.f32 %v77, 0.0
  %v94 = vmax.f32 %v78, 0.0
  %v95 = vmax.f32 %v79, 0.0
  %v96 = vmax.f32 %v80, 0.0
  %v97 = vmax.f32 %v81, 0.0
  %v98 = vmax.f32 %v82, 0.0
  %v99 = vmax.f32 %v83, 0.0
  %v100 = vmax.f32 %v84, 0.0
  %v101 = vmax.f32 %v85, 0.0
  %v102 = vpack.c.bf16 %v86, %v86
  %v103 = vpack.c.bf16 %v87, %v87
  %v104 = vpack.c.bf16 %v88, %v88
  %v105 = vpack.c.bf16 %v89, %v89
  %v106 = vpack.c.bf16 %v90, %v90
  %v107 = vpack.c.bf16 %v91, %v91
  %v108 = vpack.c.bf16 %v92, %v92
  %v109 = vpack.c.bf16 %v93, %v93
  %v110 = vpack.c.bf16 %v94, %v94
  %v111 = vpack.c.bf16 %v95, %v95
  %v112 = vpack.c.bf16 %v96, %v96
  %v113 = vpack.c.bf16 %v97, %v97
  %v114 = vpack.c.bf16 %v98, %v98
  %v115 = vpack.c.bf16 %v99, %v99
  %v116 = vpack.c.bf16 %v100, %v100
  %v117 = vpack.c.bf16 %v101, %v101
  %118 = vst [vmem:[%s3] sm:$0xf] %v102
  %119 = vst [vmem:[%s3 + $0x4] sm:$0xf] %v103
  %120 = vst [vmem:[%s3 + $0x8] sm:$0xf] %v104
  %121 = vst [vmem:[%s3 + $0xc] sm:$0xf] %v105
  %122 = vst [vmem:[%s3 + $0x10] sm:$0xf] %v106
  %123 = vst [vmem:[%s3 + $0x14] sm:$0xf] %v107
  %124 = vst [vmem:[%s3 + $0x18] sm:$0xf] %v108
  %125 = vst [vmem:[%s3 + $0x1c] sm:$0xf] %v109
  %126 = vst [vmem:[%s3 + $0x20] sm:$0xf] %v110
  %127 = vst [vmem:[%s3 + $0x24] sm:$0xf] %v111
  %128 = vst [vmem:[%s3 + $0x28] sm:$0xf] %v112
  %129 = vst [vmem:[%s3 + $0x2c] sm:$0xf] %v113
  %130 = vst [vmem:[%s3 + $0x30] sm:$0xf] %v114
  %131 = vst [vmem:[%s3 + $0x34] sm:$0xf] %v115
  %132 = vst [vmem:[%s3 + $0x38] sm:$0xf] %v116
  %133 = vst [vmem:[%s3 + $0x3c] sm:$0xf] %v117
  // Predicated region
  $region14: #{basic_block_forward.6} parent=0 // pred_check
    _
  $region15: #{basic_block_forward.6} parent=0 // pred_check_branch
    %135 = sbr.rel (0) target = $region17
  $region16: #{basic_block_forward.6} parent=0 // pred_region
    _
  $region17: #{basic_block_forward.6} parent=0 // pred_fallthru
    _
  // Predicated region
  $region18: #{basic_block_forward.6} parent=0 // pred_check
    _
  $region19: #{basic_block_forward.6} parent=0 // pred_check_branch
    %137 = sbr.rel (0) target = $region21
  $region20: #{basic_block_forward.6} parent=0 // pred_region
    _
  $region21: #{basic_block_forward.6} parent=0 // pred_fallthru
    _

// kernel: basic_block_forward.5
$region0: #{basic_block_forward.5}
  #allocation0 [shape = 'u32[]', space=smem, size = 0x4, offset = 0x4, fixed_abs, tag = 'smem constant byte address 0x4 - core index']
  #allocation1 [shape = 'u32[72,128]{1,0:T(1,128)}', space=vmem, size = 0x9000, scoped, tag = 'internal scratch']
  %s0 = inlined_call_operand.vmem [shape: bf16[128,36], index: 0, kind: input, shape index: {}]
  %s1 = inlined_call_operand.vmem [shape: bf16[36,128], index: 1, kind: input, shape index: {}]
  %s2 = inlined_call_operand.vmem [shape: bf16[128,128], index: 2, kind: output, shape index: {0}]
  %s3 = inlined_call_operand.vmem [shape: f32[1,1,128], index: 3, kind: output, shape index: {1}]
  %s4 = inlined_call_operand.vmem [shape: f32[1,1,128], index: 4, kind: output, shape index: {2}]
  %5 = xla_tuple %s2, %s3, %s4
  %s6 = sld [smem:[#allocation0]]
  $region34: #{basic_block_forward.5} parent=0
    _
  %s8 = ssub.s32 1, %s6
  %s9 = scalar_select 0, %s8, %s6
  // Predicated region
  $region2: #{basic_block_forward.5} parent=0 // pred_check
    _
  $region3: #{basic_block_forward.5} parent=0 // pred_check_branch
    %11 = sbr.rel (0) target = $region5
  $region4: #{basic_block_forward.5} parent=0 // pred_region
    _
  $region5: #{basic_block_forward.5} parent=0 // pred_fallthru
    _
  // Predicated region
  $region6: #{basic_block_forward.5} parent=0 // pred_check
    _
  $region7: #{basic_block_forward.5} parent=0 // pred_check_branch
    %13 = sbr.rel (0) target = $region9
  $region8: #{basic_block_forward.5} parent=0 // pred_region
    _
  $region9: #{basic_block_forward.5} parent=0 // pred_fallthru
    _
  %v15 = vld [vmem:[%s0] sm:$0xf]
  %v16 = vld [vmem:[%s0 + $0x4] sm:$0xf]
  %v17 = vld [vmem:[%s0 + $0x8] sm:$0xf]
  %v18 = vld [vmem:[%s0 + $0xc] sm:$0xf]
  %v19 = vld [vmem:[%s0 + $0x10] sm:$0xf]
  %v20 = vld [vmem:[%s0 + $0x14] sm:$0xf]
  %v21 = vld [vmem:[%s0 + $0x18] sm:$0xf]
  %v22 = vld [vmem:[%s0 + $0x1c] sm:$0xf]
  %v23 = vld [vmem:[%s0 + $0x20] sm:$0xf]
  %v24 = vld [vmem:[%s0 + $0x24] sm:$0xf]
  %v25 = vld [vmem:[%s0 + $0x28] sm:$0xf]
  %v26 = vld [vmem:[%s0 + $0x2c] sm:$0xf]
  %v27 = vld [vmem:[%s0 + $0x30] sm:$0xf]
  %v28 = vld [vmem:[%s0 + $0x34] sm:$0xf]
  %v29 = vld [vmem:[%s0 + $0x38] sm:$0xf]
  %v30 = vld [vmem:[%s0 + $0x3c] sm:$0xf]
  %v31 = vld [vmem:[%s1] sm:$0xf]
  %v32 = vld [vmem:[%s1 + $0x4] sm:$0xf]
  %v33 = vld [vmem:[%s1 + $0x8] sm:$0xf]
  %v34 = vld [vmem:[%s1 + $0xc] sm:$0xf]
  %v35 = vld [vmem:[%s1 + $0x10] sm:$0x3]
  %v52 = vunpack.c.l.b16 %v15
  %v53 = vunpack.c.l.b16 %v16
  %v54 = vunpack.c.l.b16 %v17
  %v55 = vunpack.c.l.b16 %v18
  %v56 = vunpack.c.l.b16 %v19
  %v57 = vunpack.c.l.b16 %v20
  %v58 = vunpack.c.l.b16 %v21
  %v59 = vunpack.c.l.b16 %v22
  %v60 = vunpack.c.l.b16 %v23
  %v61 = vunpack.c.l.b16 %v24
  %v62 = vunpack.c.l.b16 %v25
  %v63 = vunpack.c.l.b16 %v26
  %v64 = vunpack.c.l.b16 %v27
  %v65 = vunpack.c.l.b16 %v28
  %v66 = vunpack.c.l.b16 %v29
  %v67 = vunpack.c.l.b16 %v30
  %v68 = vpack.c.b16 %v53, %v52
  %v69 = vpack.c.b16 %v55, %v54
  %v70 = vpack.c.b16 %v57, %v56
  %v71 = vpack.c.b16 %v59, %v58
  %v72 = vpack.c.b16 %v61, %v60
  %v73 = vpack.c.b16 %v63, %v62
  %v74 = vpack.c.b16 %v65, %v64
  %v75 = vpack.c.b16 %v67, %v66
  %v81 = vunpack.c.l.b16 %v31
  %v82 = vunpack.c.l.b16 %v32
  %v83 = vunpack.c.l.b16 %v33
  %v84 = vunpack.c.l.b16 %v34
  %v85 = vunpack.c.l.b16 %v35
  %v86 = vpack.c.b16 %v82, %v81
  %v87 = vpack.c.b16 %v84, %v83
  %v88 = vpack.c.b16 %v85, %v85
  %vm91 = vcmask 293888
  %v93 = vsel %vm91, %v68, 0
  %v96 = vsel %vm91, %v69, 0
  %v99 = vsel %vm91, %v70, 0
  %v102 = vsel %vm91, %v71, 0
  %v105 = vsel %vm91, %v72, 0
  %v108 = vsel %vm91, %v73, 0
  %v111 = vsel %vm91, %v74, 0
  %v114 = vsel %vm91, %v75, 0
  %vm116 = vcmask 1041408
  %v118 = vsel %vm116, %v88, 0
  %120 = vmatpush.bf16.msra.mxu0 0
  %121 = vmatpush.bf16.msra.mxu0 0
  %122 = vmatpush.bf16.msra.mxu0 0
  %123 = vmatpush.bf16.msra.mxu0 0
  %124 = vmatpush.bf16.msra.mxu0 0
  %125 = vmatpush.bf16.msra.mxu0 %v118
  %126 = vmatpush.bf16.msra.mxu0 %v87
  %127 = vmatpush.bf16.msra.mxu0 %v86
  %128 = vmatmul.bf16.gmra.mxu0 %v93
  %v129 = vpop.f32.mrf.mxu0
  %v130 = vadd.f32 0.0, %v129
  %v131 = vpop.f32.mrf.mxu0
  %v132 = vadd.f32 0.0, %v131
  %133 = vmatmul.bf16.gmra.mxu0 %v96
  %v134 = vpop.f32.mrf.mxu0
  %v135 = vadd.f32 0.0, %v134
  %v136 = vpop.f32.mrf.mxu0
  %v137 = vadd.f32 0.0, %v136
  %138 = vmatmul.bf16.gmra.mxu0 %v99
  %v139 = vpop.f32.mrf.mxu0
  %v140 = vadd.f32 0.0, %v139
  %v141 = vpop.f32.mrf.mxu0
  %v142 = vadd.f32 0.0, %v141
  %143 = vmatmul.bf16.gmra.mxu0 %v102
  %v144 = vpop.f32.mrf.mxu0
  %v145 = vadd.f32 0.0, %v144
  %v146 = vpop.f32.mrf.mxu0
  %v147 = vadd.f32 0.0, %v146
  %148 = vmatmul.bf16.gmra.mxu0 %v105
  %v149 = vpop.f32.mrf.mxu0
  %v150 = vadd.f32 0.0, %v149
  %v151 = vpop.f32.mrf.mxu0
  %v152 = vadd.f32 0.0, %v151
  %153 = vmatmul.bf16.gmra.mxu0 %v108
  %v154 = vpop.f32.mrf.mxu0
  %v155 = vadd.f32 0.0, %v154
  %v156 = vpop.f32.mrf.mxu0
  %v157 = vadd.f32 0.0, %v156
  %158 = vmatmul.bf16.gmra.mxu0 %v111
  %v159 = vpop.f32.mrf.mxu0
  %v160 = vadd.f32 0.0, %v159
  %v161 = vpop.f32.mrf.mxu0
  %v162 = vadd.f32 0.0, %v161
  %163 = vmatmul.bf16.gmra.mxu0 %v114
  %v164 = vpop.f32.mrf.mxu0
  %v165 = vadd.f32 0.0, %v164
  %v166 = vpop.f32.mrf.mxu0
  %v167 = vadd.f32 0.0, %v166
  %168 = vdwg.mxu0
  %v169 = vpack.c.bf16 %v130, %v130
  %v170 = vpack.c.bf16 %v132, %v132
  %v171 = vpack.c.bf16 %v135, %v135
  %v172 = vpack.c.bf16 %v137, %v137
  %v173 = vpack.c.bf16 %v140, %v140
  %v174 = vpack.c.bf16 %v142, %v142
  %v175 = vpack.c.bf16 %v145, %v145
  %v176 = vpack.c.bf16 %v147, %v147
  %v177 = vpack.c.bf16 %v150, %v150
  %v178 = vpack.c.bf16 %v152, %v152
  %v179 = vpack.c.bf16 %v155, %v155
  %v180 = vpack.c.bf16 %v157, %v157
  %v181 = vpack.c.bf16 %v160, %v160
  %v182 = vpack.c.bf16 %v162, %v162
  %v183 = vpack.c.bf16 %v165, %v165
  %v184 = vpack.c.bf16 %v167, %v167
  %185 = vst [vmem:[%s2] sm:$0xf] %v169
  %186 = vst [vmem:[%s2 + $0x4] sm:$0xf] %v170
  %187 = vst [vmem:[%s2 + $0x8] sm:$0xf] %v171
  %188 = vst [vmem:[%s2 + $0xc] sm:$0xf] %v172
  %189 = vst [vmem:[%s2 + $0x10] sm:$0xf] %v173
  %190 = vst [vmem:[%s2 + $0x14] sm:$0xf] %v174
  %191 = vst [vmem:[%s2 + $0x18] sm:$0xf] %v175
  %192 = vst [vmem:[%s2 + $0x1c] sm:$0xf] %v176
  %193 = vst [vmem:[%s2 + $0x20] sm:$0xf] %v177
  %194 = vst [vmem:[%s2 + $0x24] sm:$0xf] %v178
  %195 = vst [vmem:[%s2 + $0x28] sm:$0xf] %v179
  %196 = vst [vmem:[%s2 + $0x2c] sm:$0xf] %v180
  %197 = vst [vmem:[%s2 + $0x30] sm:$0xf] %v181
  %198 = vst [vmem:[%s2 + $0x34] sm:$0xf] %v182
  %199 = vst [vmem:[%s2 + $0x38] sm:$0xf] %v183
  %200 = vst [vmem:[%s2 + $0x3c] sm:$0xf] %v184
  %v201 = vadd.f32 %v130, %v132
  %v202 = vadd.f32 %v201, %v135
  %v203 = vadd.f32 %v202, %v137
  %v204 = vadd.f32 %v203, %v140
  %v205 = vadd.f32 %v204, %v142
  %v206 = vadd.f32 %v205, %v145
  %v207 = vadd.f32 %v206, %v147
  %v208 = vadd.f32 %v207, %v150
  %v209 = vadd.f32 %v208, %v152
  %v210 = vadd.f32 %v209, %v155
  %v211 = vadd.f32 %v210, %v157
  %v212 = vadd.f32 %v211, %v160
  %v213 = vadd.f32 %v212, %v162
  %v214 = vadd.f32 %v213, %v165
  %v215 = vadd.f32 %v214, %v167
  %v216 = vrot.slane %v215, 4
  %v217 = vadd.f32 %v215, %v216
  %v218 = vrot.slane %v217, 2
  %v219 = vadd.f32 %v217, %v218
  %v220 = vrot.slane %v219, 1
  %v221 = vadd.f32 %v219, %v220
  %222 = vst [vmem:[%s3] sm:$0x1] %v221
  %v223 = vmul.f32 %v130, %v130
  %v224 = vmul.f32 %v132, %v132
  %v225 = vmul.f32 %v135, %v135
  %v226 = vmul.f32 %v137, %v137
  %v227 = vmul.f32 %v140, %v140
  %v228 = vmul.f32 %v142, %v142
  %v229 = vmul.f32 %v145, %v145
  %v230 = vmul.f32 %v147, %v147
  %v231 = vmul.f32 %v150, %v150
  %v232 = vmul.f32 %v152, %v152
  %v233 = vmul.f32 %v155, %v155
  %v234 = vmul.f32 %v157, %v157
  %v235 = vmul.f32 %v160, %v160
  %v236 = vmul.f32 %v162, %v162
  %v237 = vmul.f32 %v165, %v165
  %v238 = vmul.f32 %v167, %v167
  %v239 = vadd.f32 %v223, %v224
  %v240 = vadd.f32 %v239, %v225
  %v241 = vadd.f32 %v240, %v226
  %v242 = vadd.f32 %v241, %v227
  %v243 = vadd.f32 %v242, %v228
  %v244 = vadd.f32 %v243, %v229
  %v245 = vadd.f32 %v244, %v230
  %v246 = vadd.f32 %v245, %v231
  %v247 = vadd.f32 %v246, %v232
  %v248 = vadd.f32 %v247, %v233
  %v249 = vadd.f32 %v248, %v234
  %v250 = vadd.f32 %v249, %v235
  %v251 = vadd.f32 %v250, %v236
  %v252 = vadd.f32 %v251, %v237
  %v253 = vadd.f32 %v252, %v238
  %v254 = vrot.slane %v253, 4
  %v255 = vadd.f32 %v253, %v254
  %v256 = vrot.slane %v255, 2
  %v257 = vadd.f32 %v255, %v256
  %v258 = vrot.slane %v257, 1
  %v259 = vadd.f32 %v257, %v258
  %260 = vst [vmem:[%s4] sm:$0x1] %v259
  // Predicated region
  $region10: #{basic_block_forward.5} parent=0 // pred_check
    _
  $region11: #{basic_block_forward.5} parent=0 // pred_check_branch
    %262 = sbr.rel (0) target = $region13
  $region12: #{basic_block_forward.5} parent=0 // pred_region
    _
  $region13: #{basic_block_forward.5} parent=0 // pred_fallthru
    _
  // Predicated region
  $region14: #{basic_block_forward.5} parent=0 // pred_check
    _
  $region15: #{basic_block_forward.5} parent=0 // pred_check_branch
    %264 = sbr.rel (0) target = $region17
  $region16: #{basic_block_forward.5} parent=0 // pred_region
    _
  $region17: #{basic_block_forward.5} parent=0 // pred_fallthru
    _
  // Predicated region
  $region18: #{basic_block_forward.5} parent=0 // pred_check
    _
  $region19: #{basic_block_forward.5} parent=0 // pred_check_branch
    %266 = sbr.rel (0) target = $region21
  $region20: #{basic_block_forward.5} parent=0 // pred_region
    _
  $region21: #{basic_block_forward.5} parent=0 // pred_fallthru
    _
  // Predicated region
  $region22: #{basic_block_forward.5} parent=0 // pred_check
    _
  $region23: #{basic_block_forward.5} parent=0 // pred_check_branch
    %268 = sbr.rel (0) target = $region25
  $region24: #{basic_block_forward.5} parent=0 // pred_region
    _
  $region25: #{basic_block_forward.5} parent=0 // pred_fallthru
    _
  // Predicated region
  $region26: #{basic_block_forward.5} parent=0 // pred_check
    _
  $region27: #{basic_block_forward.5} parent=0 // pred_check_branch
    %270 = sbr.rel (0) target = $region29
  $region28: #{basic_block_forward.5} parent=0 // pred_region
    _
  $region29: #{basic_block_forward.5} parent=0 // pred_fallthru
    _
  // Predicated region
  $region30: #{basic_block_forward.5} parent=0 // pred_check
    _
  $region31: #{basic_block_forward.5} parent=0 // pred_check_branch
    %272 = sbr.rel (0) target = $region33
  $region32: #{basic_block_forward.5} parent=0 // pred_region
    _
  $region33: #{basic_block_forward.5} parent=0 // pred_fallthru
    _

// kernel: basic_block_forward.8
$region0: #{basic_block_forward.8}
  #allocation0 [shape = 'u32[]', space=smem, size = 0x4, offset = 0x4, fixed_abs, tag = 'smem constant byte address 0x4 - core index']
  #allocation1 [shape = 'u32[72,128]{1,0:T(1,128)}', space=vmem, size = 0x9000, scoped, tag = 'internal scratch']
  %s0 = inlined_call_operand.vmem [shape: bf16[128,4], index: 0, kind: input, shape index: {}]
  %s1 = inlined_call_operand.vmem [shape: bf16[4,128], index: 1, kind: input, shape index: {}]
  %s2 = inlined_call_operand.vmem [shape: f32[2,1,128], index: 2, kind: output, shape index: {0}]
  %s3 = inlined_call_operand.vmem [shape: f32[2,1,128], index: 3, kind: output, shape index: {1}]
  %4 = xla_tuple %s2, %s3
  %s5 = sld [smem:[#allocation0]]
  $region49: #{basic_block_forward.8} parent=0
    _
  %s7 = ssub.s32 1, %s5
  %s8 = scalar_select 0, %s7, %s5
  loop: start=0, step=1, limit=4
  $region2: #{basic_block_forward.8} parent=0 // loop_pre_header
    _
  $region3: #{basic_block_forward.8} parent=0 // loop_header
    %s10 = sphi 0, %s14
    %p11 = scmp.ge.s32.totalorder %s10, 4
    %s20 = sphi 0, %s22
    %s23 = sphi 0, %s20
    %s24 = sphi 0, %s23
    %s40 = sphi 0, %s24
    %s44 = sphi 0, %s44
    %s46 = sphi 0, %s44
    %s47 = sphi 0, %s46
    %s61 = sphi 0, %s47
    %s67 = sphi 0, %s69
    %s70 = sphi 0, %s67
    %s71 = sphi 0, %s70
    %s87 = sphi 0, %s71
    %s93 = sphi 0, %s95
    %s96 = sphi 0, %s93
    %s97 = sphi 0, %s96
    %s113 = sphi 0, %s97
  $region4: #{basic_block_forward.8} parent=0 // loop_header_branch
    %13 = sbr.rel (%p11) target = $region8
  $region5: #{basic_block_forward.8} parent=0 // loop_body
    %s15 = ssub.s32 %s10, 1
    %s16 = ssub.s32 %s10, 2
    %s17 = sadd.s32 %s10, 1
    %s18 = ssub.s32 %s10, %s17
    %p19 = scmp.eq.s32.totalorder %s18, 0
    %s21 = sadd.s32 %s20, 1
    %s22 = scalar_select %p19, %s20, %s21
    %p25 = pneg %p19
    %p26 = scmp.eq.s32.totalorder %s10, 1
    %p27 = por %p25, %p26
    %p28 = scmp.ne.s32.totalorder %s20, %s23
    %p29 = scmp.eq.s32.totalorder %s10, 0
    %p30 = por %p28, %p29
    %p31 = scmp.ne.s32.totalorder %s20, %s23
    %p32 = scmp.eq.s32.totalorder %s15, 1
    %p33 = por %p31, %p32
    %p34 = scmp.ne.s32.totalorder %s23, %s24
    %p35 = scmp.eq.s32.totalorder %s15, 0
    %p36 = por %p34, %p35
    %p37 = scmp.ne.s32.totalorder %s23, %s24
    %p38 = scmp.eq.s32.totalorder %s16, 1
    %p39 = por %p37, %p38
    %p41 = scmp.ne.s32.totalorder %s24, %s40
    %p42 = scmp.eq.s32.totalorder %s16, 0
    %p43 = por %p41, %p42
    %s45 = sadd.s32 %s44, 1
    %p48 = scmp.eq.s32.totalorder %s10, 1
    %p49 = scmp.ne.s32.totalorder %s44, %s46
    %p50 = scmp.eq.s32.totalorder %s10, 0
    %p51 = por %p49, %p50
    %p52 = scmp.ne.s32.totalorder %s44, %s46
    %p53 = scmp.eq.s32.totalorder %s15, 1
    %p54 = por %p52, %p53
    %p55 = scmp.ne.s32.totalorder %s46, %s47
    %p56 = scmp.eq.s32.totalorder %s15, 0
    %p57 = por %p55, %p56
    %p58 = scmp.ne.s32.totalorder %s46, %s47
    %p59 = scmp.eq.s32.totalorder %s16, 1
    %p60 = por %p58, %p59
    %p62 = scmp.ne.s32.totalorder %s47, %s61
    %p63 = scmp.eq.s32.totalorder %s16, 0
    %p64 = por %p62, %p63
    %s65 = ssub.s32 %s10, %s17
    %p66 = scmp.eq.s32.totalorder %s65, 0
    %s68 = sadd.s32 %s67, 1
    %s69 = scalar_select %p66, %s67, %s68
    %p72 = pneg %p66
    %p73 = scmp.eq.s32.totalorder %s10, 1
    %p74 = por %p72, %p73
    %p75 = scmp.ne.s32.totalorder %s67, %s70
    %p76 = scmp.eq.s32.totalorder %s10, 0
    %p77 = por %p75, %p76
    %p78 = scmp.ne.s32.totalorder %s67, %s70
    %p79 = scmp.eq.s32.totalorder %s15, 1
    %p80 = por %p78, %p79
    %p81 = scmp.ne.s32.totalorder %s70, %s71
    %p82 = scmp.eq.s32.totalorder %s15, 0
    %p83 = por %p81, %p82
    %p84 = scmp.ne.s32.totalorder %s70, %s71
    %p85 = scmp.eq.s32.totalorder %s16, 1
    %p86 = por %p84, %p85
    %p88 = scmp.ne.s32.totalorder %s71, %s87
    %p89 = scmp.eq.s32.totalorder %s16, 0
    %p90 = por %p88, %p89
    %s91 = ssub.s32 %s10, %s17
    %p92 = scmp.eq.s32.totalorder %s91, 0
    %s94 = sadd.s32 %s93, 1
    %s95 = scalar_select %p92, %s93, %s94
    %p98 = pneg %p92
    %p99 = scmp.eq.s32.totalorder %s10, 1
    %p100 = por %p98, %p99
    %p101 = scmp.ne.s32.totalorder %s93, %s96
    %p102 = scmp.eq.s32.totalorder %s10, 0
    %p103 = por %p101, %p102
    %p104 = scmp.ne.s32.totalorder %s93, %s96
    %p105 = scmp.eq.s32.totalorder %s15, 1
    %p106 = por %p104, %p105
    %p107 = scmp.ne.s32.totalorder %s96, %s97
    %p108 = scmp.eq.s32.totalorder %s15, 0
    %p109 = por %p107, %p108
    %p110 = scmp.ne.s32.totalorder %s96, %s97
    %p111 = scmp.eq.s32.totalorder %s16, 1
    %p112 = por %p110, %p111
    %p114 = scmp.ne.s32.totalorder %s97, %s113
    %p115 = scmp.eq.s32.totalorder %s16, 0
    %p116 = por %p114, %p115
    %p117 = scmp.le.s32.totalorder 1, %s10
    %p118 = scmp.lt.s32.totalorder %s10, 3
    %p119 = pnand %p117, %p118
    %p120 = pneg %p119
    // Predicated region
    $region9: #{basic_block_forward.8} parent=5 // pred_check
      _
    $region10: #{basic_block_forward.8} parent=5 // pred_check_branch
      %122 = sbr.rel (%p119) target = $region12
    $region11: #{basic_block_forward.8} parent=5 // pred_region
      %s123 = ssub.s32 %s10, 1
      // Predicated region
      $region13: #{basic_block_forward.8} parent=11 // pred_check
        %p124 = pneg %p57
      $region14: #{basic_block_forward.8} parent=11 // pred_check_branch
        %126 = sbr.rel (%p124) target = $region16
      $region15: #{basic_block_forward.8} parent=11 // pred_region
        _
      $region16: #{basic_block_forward.8} parent=11 // pred_fallthru
        _
    $region12: #{basic_block_forward.8} parent=5 // pred_fallthru
      _
    %p127 = scmp.lt.s32.totalorder %s10, 2
    // Predicated region
    $region17: #{basic_block_forward.8} parent=5 // pred_check
      %p128 = pneg %p127
    $region18: #{basic_block_forward.8} parent=5 // pred_check_branch
      %130 = sbr.rel (%p128) target = $region20
    $region19: #{basic_block_forward.8} parent=5 // pred_region
      // Predicated region
      $region21: #{basic_block_forward.8} parent=19 // pred_check
        %p131 = pneg %p30
      $region22: #{basic_block_forward.8} parent=19 // pred_check_branch
        %133 = sbr.rel (%p131) target = $region24
      $region23: #{basic_block_forward.8} parent=19 // pred_region
        %s134 = smul.u32 8, %s10
        %p135 = scmp.lt.s32.totalorder %s134, 15
        %s136 = scalar_select %p135, %s134, 15
        %s137 = smul.addr %s136, 4
        %s138 = scalar_lea.vmem %s0, %s137
        %s139 = smul.u32 8, %s10
      $region24: #{basic_block_forward.8} parent=19 // pred_fallthru
        _
    $region20: #{basic_block_forward.8} parent=5 // pred_fallthru
      _
    %p140 = scmp.le.s32.totalorder 1, %s10
    %p141 = scmp.lt.s32.totalorder %s10, 3
    %p142 = pnand %p140, %p141
    %p143 = pneg %p142
    // Predicated region
    $region25: #{basic_block_forward.8} parent=5 // pred_check
      _
    $region26: #{basic_block_forward.8} parent=5 // pred_check_branch
      %145 = sbr.rel (%p142) target = $region28
    $region27: #{basic_block_forward.8} parent=5 // pred_region
      %s146 = ssub.s32 %s10, 1
      %s147 = smul.u32 8, %s15
      %p148 = scmp.lt.s32.totalorder %s147, 15
      %s149 = scalar_select %p148, %s147, 15
      %s150 = smul.addr %s149, 4
      %s151 = scalar_lea.vmem %s0, %s150
      %p152 = pneg %p36
      %p153 = pneg %p33
      %p154 = pneg %p57
      %p155 = pneg %p54
      %p156 = pneg %p83
      %p157 = pneg %p80
      %p158 = scmp.lt.s32.totalorder %s15, 1
      %s159 = scalar_select %p158, %s15, 1
      %s160 = scalar_lea.vmem %s2, %s159
      %p161 = pneg %p109
      %p162 = pneg %p106
      %p163 = scmp.lt.s32.totalorder %s15, 1
      %s164 = scalar_select %p163, %s15, 1
      %s165 = scalar_lea.vmem %s3, %s164
      %s166 = smul.u32 8, %s15
      %p167 = scmp.lt.s32.totalorder %s166, 15
      %s168 = scalar_select %p167, %s166, 15
      %s169 = smul.addr %s168, 4
      %s170 = scalar_lea.vmem %s0, %s169
      %s171 = smul.u32 8, %s15
      %p172 = scmp.lt.s32.totalorder %s15, 1
      %s173 = scalar_select %p172, %s15, 1
      %s174 = scalar_lea.vmem %s2, %s173
      %p175 = scmp.lt.s32.totalorder %s15, 1
      %s176 = scalar_select %p175, %s15, 1
      %s177 = scalar_lea.vmem %s3, %s176
      %v179 = vld [vmem:[%s170] sm:$0xf]
      %v180 = vld [vmem:[%s170 + $0x4] sm:$0xf]
      %v181 = vld [vmem:[%s170 + $0x8] sm:$0xf]
      %v182 = vld [vmem:[%s170 + $0xc] sm:$0xf]
      %v183 = vld [vmem:[%s170 + $0x10] sm:$0xf]
      %v184 = vld [vmem:[%s170 + $0x14] sm:$0xf]
      %v185 = vld [vmem:[%s170 + $0x18] sm:$0xf]
      %v186 = vld [vmem:[%s170 + $0x1c] sm:$0xf]
      %v187 = vld [vmem:[%s1] sm:$0x3]
      %v196 = vunpack.c.l.b16 %v179
      %v197 = vunpack.c.l.b16 %v180
      %v198 = vunpack.c.l.b16 %v181
      %v199 = vunpack.c.l.b16 %v182
      %v200 = vunpack.c.l.b16 %v183
      %v201 = vunpack.c.l.b16 %v184
      %v202 = vunpack.c.l.b16 %v185
      %v203 = vunpack.c.l.b16 %v186
      %v204 = vpack.c.b16 %v197, %v196
      %v205 = vpack.c.b16 %v199, %v198
      %v206 = vpack.c.b16 %v201, %v200
      %v207 = vpack.c.b16 %v203, %v202
      %vm208 = vcmask 31744
      %v210 = vsel %vm208, %v204, 0
      %v213 = vsel %vm208, %v205, 0
      %v216 = vsel %vm208, %v206, 0
      %v219 = vsel %vm208, %v207, 0
      %vm221 = vcmask 1041408
      %v223 = vsel %vm221, %v187, 0
      %225 = vmatpush.bf16.msra.mxu0 0
      %226 = vmatpush.bf16.msra.mxu0 0
      %227 = vmatpush.bf16.msra.mxu0 0
      %228 = vmatpush.bf16.msra.mxu0 0
      %229 = vmatpush.bf16.msra.mxu0 0
      %230 = vmatpush.bf16.msra.mxu0 0
      %231 = vmatpush.bf16.msra.mxu0 0
      %232 = vmatpush.bf16.msra.mxu0 %v223
      %233 = vmatmul.bf16.gmra.mxu0 %v210
      %v234 = vpop.f32.mrf.mxu0
      %v235 = vadd.f32 0.0, %v234
      %v236 = vpop.f32.mrf.mxu0
      %v237 = vadd.f32 0.0, %v236
      %238 = vmatmul.bf16.gmra.mxu0 %v213
      %v239 = vpop.f32.mrf.mxu0
      %v240 = vadd.f32 0.0, %v239
      %v241 = vpop.f32.mrf.mxu0
      %v242 = vadd.f32 0.0, %v241
      %243 = vmatmul.bf16.gmra.mxu0 %v216
      %v244 = vpop.f32.mrf.mxu0
      %v245 = vadd.f32 0.0, %v244
      %v246 = vpop.f32.mrf.mxu0
      %v247 = vadd.f32 0.0, %v246
      %248 = vmatmul.bf16.gmra.mxu0 %v219
      %v249 = vpop.f32.mrf.mxu0
      %v250 = vadd.f32 0.0, %v249
      %v251 = vpop.f32.mrf.mxu0
      %v252 = vadd.f32 0.0, %v251
      %253 = vdwg.mxu0
      %v254 = vadd.f32 %v235, %v237
      %v255 = vadd.f32 %v254, %v240
      %v256 = vadd.f32 %v255, %v242
      %v257 = vadd.f32 %v256, %v245
      %v258 = vadd.f32 %v257, %v247
      %v259 = vadd.f32 %v258, %v250
      %v260 = vadd.f32 %v259, %v252
      %v261 = vrot.slane %v260, 4
      %v262 = vadd.f32 %v260, %v261
      %v263 = vrot.slane %v262, 2
      %v264 = vadd.f32 %v262, %v263
      %v265 = vrot.slane %v264, 1
      %v266 = vadd.f32 %v264, %v265
      %267 = vst [vmem:[%s174] sm:$0x1] %v266
      %v268 = vmul.f32 %v235, %v235
      %v269 = vmul.f32 %v237, %v237
      %v270 = vmul.f32 %v240, %v240
      %v271 = vmul.f32 %v242, %v242
      %v272 = vmul.f32 %v245, %v245
      %v273 = vmul.f32 %v247, %v247
      %v274 = vmul.f32 %v250, %v250
      %v275 = vmul.f32 %v252, %v252
      %v276 = vadd.f32 %v268, %v269
      %v277 = vadd.f32 %v276, %v270
      %v278 = vadd.f32 %v277, %v271
      %v279 = vadd.f32 %v278, %v272
      %v280 = vadd.f32 %v279, %v273
      %v281 = vadd.f32 %v280, %v274
      %v282 = vadd.f32 %v281, %v275
      %v283 = vrot.slane %v282, 4
      %v284 = vadd.f32 %v282, %v283
      %v285 = vrot.slane %v284, 2
      %v286 = vadd.f32 %v284, %v285
      %v287 = vrot.slane %v286, 1
      %v288 = vadd.f32 %v286, %v287
      %289 = vst [vmem:[%s177] sm:$0x1] %v288
      %p290 = scmp.lt.s32.totalorder %s15, 1
      %s291 = scalar_select %p290, %s15, 1
      %s292 = scalar_lea.vmem %s2, %s291
      %p293 = scmp.lt.s32.totalorder %s15, 1
      %s294 = scalar_select %p293, %s15, 1
      %s295 = scalar_lea.vmem %s3, %s294
      // Predicated region
      $region29: #{basic_block_forward.8} parent=27 // pred_check
        %p296 = pneg %p80
      $region30: #{basic_block_forward.8} parent=27 // pred_check_branch
        %298 = sbr.rel (%p296) target = $region32
      $region31: #{basic_block_forward.8} parent=27 // pred_region
        _
      $region32: #{basic_block_forward.8} parent=27 // pred_fallthru
        _
      // Predicated region
      $region33: #{basic_block_forward.8} parent=27 // pred_check
        %p299 = pneg %p106
      $region34: #{basic_block_forward.8} parent=27 // pred_check_branch
        %301 = sbr.rel (%p299) target = $region36
      $region35: #{basic_block_forward.8} parent=27 // pred_region
        _
      $region36: #{basic_block_forward.8} parent=27 // pred_fallthru
        _
    $region28: #{basic_block_forward.8} parent=5 // pred_fallthru
      _
    %p302 = scmp.le.s32.totalorder 2, %s10
    // Predicated region
    $region37: #{basic_block_forward.8} parent=5 // pred_check
      %p303 = pneg %p302
    $region38: #{basic_block_forward.8} parent=5 // pred_check_branch
      %305 = sbr.rel (%p303) target = $region40
    $region39: #{basic_block_forward.8} parent=5 // pred_region
      %s306 = ssub.s32 %s10, 2
      // Predicated region
      $region41: #{basic_block_forward.8} parent=39 // pred_check
        %p307 = pneg %p86
      $region42: #{basic_block_forward.8} parent=39 // pred_check_branch
        %309 = sbr.rel (%p307) target = $region44
      $region43: #{basic_block_forward.8} parent=39 // pred_region
        %p310 = scmp.lt.s32.totalorder %s16, 1
        %s311 = scalar_select %p310, %s16, 1
        %s312 = scalar_lea.vmem %s2, %s311
      $region44: #{basic_block_forward.8} parent=39 // pred_fallthru
        _
      // Predicated region
      $region45: #{basic_block_forward.8} parent=39 // pred_check
        %p313 = pneg %p112
      $region46: #{basic_block_forward.8} parent=39 // pred_check_branch
        %315 = sbr.rel (%p313) target = $region48
      $region47: #{basic_block_forward.8} parent=39 // pred_region
        %p316 = scmp.lt.s32.totalorder %s16, 1
        %s317 = scalar_select %p316, %s16, 1
        %s318 = scalar_lea.vmem %s3, %s317
      $region48: #{basic_block_forward.8} parent=39 // pred_fallthru
        _
    $region40: #{basic_block_forward.8} parent=5 // pred_fallthru
      _
  $region6: #{basic_block_forward.8} parent=0 // loop_footer
    %s14 = sadd.s32 1, %s10
  $region7: #{basic_block_forward.8} parent=0 // loop_footer_branch
    %9 = sbr.rel target = $region3
  $region8: #{basic_block_forward.8} parent=0 // loop_exit
    _

// kernel: basic_block_forward.9
$region0: #{basic_block_forward.9}
  #allocation0 [shape = 'u32[]', space=smem, size = 0x4, offset = 0x4, fixed_abs, tag = 'smem constant byte address 0x4 - core index']
  #allocation1 [shape = 'u32[72,128]{1,0:T(1,128)}', space=vmem, size = 0x9000, scoped, tag = 'internal scratch']
  %s0 = inlined_call_operand.vmem [shape: bf16[128,128], index: 0, kind: input, shape index: {}]
  %s1 = inlined_call_operand.vmem [shape: bf16[128,4], index: 1, kind: input, shape index: {}]
  %s2 = inlined_call_operand.vmem [shape: bf16[4,128], index: 2, kind: input, shape index: {}]
  %s3 = inlined_call_operand.vmem [shape: f32[1,128], index: 3, kind: input, shape index: {}]
  %s4 = inlined_call_operand.vmem [shape: f32[1,128], index: 4, kind: input, shape index: {}]
  %s5 = inlined_call_operand.vmem [shape: f32[1,128], index: 5, kind: input, shape index: {}]
  %s6 = inlined_call_operand.vmem [shape: f32[1,128], index: 6, kind: input, shape index: {}]
  %s7 = inlined_call_operand.vmem [shape: f32[128,128], index: 7, kind: output, shape index: {}]
  %s8 = sld [smem:[#allocation0]]
  $region61: #{basic_block_forward.9} parent=0
    _
  %s10 = ssub.s32 1, %s8
  %s11 = scalar_select 0, %s10, %s8
  loop: start=0, step=1, limit=4
  $region2: #{basic_block_forward.9} parent=0 // loop_pre_header
    _
  $region3: #{basic_block_forward.9} parent=0 // loop_header
    %s13 = sphi 0, %s17
    %p14 = scmp.ge.s32.totalorder %s13, 4
    %s23 = sphi 0, %s25
    %s26 = sphi 0, %s23
    %s27 = sphi 0, %s26
    %s43 = sphi 0, %s27
    %s49 = sphi 0, %s51
    %s52 = sphi 0, %s49
    %s53 = sphi 0, %s52
    %s69 = sphi 0, %s53
    %s73 = sphi 0, %s73
    %s75 = sphi 0, %s73
    %s76 = sphi 0, %s75
    %s90 = sphi 0, %s76
    %s94 = sphi 0, %s94
    %s96 = sphi 0, %s94
    %s97 = sphi 0, %s96
    %s111 = sphi 0, %s97
    %s115 = sphi 0, %s115
    %s117 = sphi 0, %s115
    %s118 = sphi 0, %s117
    %s132 = sphi 0, %s118
    %s136 = sphi 0, %s136
    %s138 = sphi 0, %s136
    %s139 = sphi 0, %s138
    %s153 = sphi 0, %s139
    %s157 = sphi 0, %s157
    %s159 = sphi 0, %s157
    %s160 = sphi 0, %s159
    %s174 = sphi 0, %s160
    %s180 = sphi 0, %s182
    %s183 = sphi 0, %s180
    %s184 = sphi 0, %s183
    %s200 = sphi 0, %s184
  $region4: #{basic_block_forward.9} parent=0 // loop_header_branch
    %16 = sbr.rel (%p14) target = $region8
  $region5: #{basic_block_forward.9} parent=0 // loop_body
    %s18 = ssub.s32 %s13, 1
    %s19 = ssub.s32 %s13, 2
    %s20 = sadd.s32 %s13, 1
    %s21 = ssub.s32 %s13, %s20
    %p22 = scmp.eq.s32.totalorder %s21, 0
    %s24 = sadd.s32 %s23, 1
    %s25 = scalar_select %p22, %s23, %s24
    %p28 = pneg %p22
    %p29 = scmp.eq.s32.totalorder %s13, 1
    %p30 = por %p28, %p29
    %p31 = scmp.ne.s32.totalorder %s23, %s26
    %p32 = scmp.eq.s32.totalorder %s13, 0
    %p33 = por %p31, %p32
    %p34 = scmp.ne.s32.totalorder %s23, %s26
    %p35 = scmp.eq.s32.totalorder %s18, 1
    %p36 = por %p34, %p35
    %p37 = scmp.ne.s32.totalorder %s26, %s27
    %p38 = scmp.eq.s32.totalorder %s18, 0
    %p39 = por %p37, %p38
    %p40 = scmp.ne.s32.totalorder %s26, %s27
    %p41 = scmp.eq.s32.totalorder %s19, 1
    %p42 = por %p40, %p41
    %p44 = scmp.ne.s32.totalorder %s27, %s43
    %p45 = scmp.eq.s32.totalorder %s19, 0
    %p46 = por %p44, %p45
    %s47 = ssub.s32 %s13, %s20
    %p48 = scmp.eq.s32.totalorder %s47, 0
    %s50 = sadd.s32 %s49, 1
    %s51 = scalar_select %p48, %s49, %s50
    %p54 = pneg %p48
    %p55 = scmp.eq.s32.totalorder %s13, 1
    %p56 = por %p54, %p55
    %p57 = scmp.ne.s32.totalorder %s49, %s52
    %p58 = scmp.eq.s32.totalorder %s13, 0
    %p59 = por %p57, %p58
    %p60 = scmp.ne.s32.totalorder %s49, %s52
    %p61 = scmp.eq.s32.totalorder %s18, 1
    %p62 = por %p60, %p61
    %p63 = scmp.ne.s32.totalorder %s52, %s53
    %p64 = scmp.eq.s32.totalorder %s18, 0
    %p65 = por %p63, %p64
    %p66 = scmp.ne.s32.totalorder %s52, %s53
    %p67 = scmp.eq.s32.totalorder %s19, 1
    %p68 = por %p66, %p67
    %p70 = scmp.ne.s32.totalorder %s53, %s69
    %p71 = scmp.eq.s32.totalorder %s19, 0
    %p72 = por %p70, %p71
    %s74 = sadd.s32 %s73, 1
    %p77 = scmp.eq.s32.totalorder %s13, 1
    %p78 = scmp.ne.s32.totalorder %s73, %s75
    %p79 = scmp.eq.s32.totalorder %s13, 0
    %p80 = por %p78, %p79
    %p81 = scmp.ne.s32.totalorder %s73, %s75
    %p82 = scmp.eq.s32.totalorder %s18, 1
    %p83 = por %p81, %p82
    %p84 = scmp.ne.s32.totalorder %s75, %s76
    %p85 = scmp.eq.s32.totalorder %s18, 0
    %p86 = por %p84, %p85
    %p87 = scmp.ne.s32.totalorder %s75, %s76
    %p88 = scmp.eq.s32.totalorder %s19, 1
    %p89 = por %p87, %p88
    %p91 = scmp.ne.s32.totalorder %s76, %s90
    %p92 = scmp.eq.s32.totalorder %s19, 0
    %p93 = por %p91, %p92
    %s95 = sadd.s32 %s94, 1
    %p98 = scmp.eq.s32.totalorder %s13, 1
    %p99 = scmp.ne.s32.totalorder %s94, %s96
    %p100 = scmp.eq.s32.totalorder %s13, 0
    %p101 = por %p99, %p100
    %p102 = scmp.ne.s32.totalorder %s94, %s96
    %p103 = scmp.eq.s32.totalorder %s18, 1
    %p104 = por %p102, %p103
    %p105 = scmp.ne.s32.totalorder %s96, %s97
    %p106 = scmp.eq.s32.totalorder %s18, 0
    %p107 = por %p105, %p106
    %p108 = scmp.ne.s32.totalorder %s96, %s97
    %p109 = scmp.eq.s32.totalorder %s19, 1
    %p110 = por %p108, %p109
    %p112 = scmp.ne.s32.totalorder %s97, %s111
    %p113 = scmp.eq.s32.totalorder %s19, 0
    %p114 = por %p112, %p113
    %s116 = sadd.s32 %s115, 1
    %p119 = scmp.eq.s32.totalorder %s13, 1
    %p120 = scmp.ne.s32.totalorder %s115, %s117
    %p121 = scmp.eq.s32.totalorder %s13, 0
    %p122 = por %p120, %p121
    %p123 = scmp.ne.s32.totalorder %s115, %s117
    %p124 = scmp.eq.s32.totalorder %s18, 1
    %p125 = por %p123, %p124
    %p126 = scmp.ne.s32.totalorder %s117, %s118
    %p127 = scmp.eq.s32.totalorder %s18, 0
    %p128 = por %p126, %p127
    %p129 = scmp.ne.s32.totalorder %s117, %s118
    %p130 = scmp.eq.s32.totalorder %s19, 1
    %p131 = por %p129, %p130
    %p133 = scmp.ne.s32.totalorder %s118, %s132
    %p134 = scmp.eq.s32.totalorder %s19, 0
    %p135 = por %p133, %p134
    %s137 = sadd.s32 %s136, 1
    %p140 = scmp.eq.s32.totalorder %s13, 1
    %p141 = scmp.ne.s32.totalorder %s136, %s138
    %p142 = scmp.eq.s32.totalorder %s13, 0
    %p143 = por %p141, %p142
    %p144 = scmp.ne.s32.totalorder %s136, %s138
    %p145 = scmp.eq.s32.totalorder %s18, 1
    %p146 = por %p144, %p145
    %p147 = scmp.ne.s32.totalorder %s138, %s139
    %p148 = scmp.eq.s32.totalorder %s18, 0
    %p149 = por %p147, %p148
    %p150 = scmp.ne.s32.totalorder %s138, %s139
    %p151 = scmp.eq.s32.totalorder %s19, 1
    %p152 = por %p150, %p151
    %p154 = scmp.ne.s32.totalorder %s139, %s153
    %p155 = scmp.eq.s32.totalorder %s19, 0
    %p156 = por %p154, %p155
    %s158 = sadd.s32 %s157, 1
    %p161 = scmp.eq.s32.totalorder %s13, 1
    %p162 = scmp.ne.s32.totalorder %s157, %s159
    %p163 = scmp.eq.s32.totalorder %s13, 0
    %p164 = por %p162, %p163
    %p165 = scmp.ne.s32.totalorder %s157, %s159
    %p166 = scmp.eq.s32.totalorder %s18, 1
    %p167 = por %p165, %p166
    %p168 = scmp.ne.s32.totalorder %s159, %s160
    %p169 = scmp.eq.s32.totalorder %s18, 0
    %p170 = por %p168, %p169
    %p171 = scmp.ne.s32.totalorder %s159, %s160
    %p172 = scmp.eq.s32.totalorder %s19, 1
    %p173 = por %p171, %p172
    %p175 = scmp.ne.s32.totalorder %s160, %s174
    %p176 = scmp.eq.s32.totalorder %s19, 0
    %p177 = por %p175, %p176
    %s178 = ssub.s32 %s13, %s20
    %p179 = scmp.eq.s32.totalorder %s178, 0
    %s181 = sadd.s32 %s180, 1
    %s182 = scalar_select %p179, %s180, %s181
    %p185 = pneg %p179
    %p186 = scmp.eq.s32.totalorder %s13, 1
    %p187 = por %p185, %p186
    %p188 = scmp.ne.s32.totalorder %s180, %s183
    %p189 = scmp.eq.s32.totalorder %s13, 0
    %p190 = por %p188, %p189
    %p191 = scmp.ne.s32.totalorder %s180, %s183
    %p192 = scmp.eq.s32.totalorder %s18, 1
    %p193 = por %p191, %p192
    %p194 = scmp.ne.s32.totalorder %s183, %s184
    %p195 = scmp.eq.s32.totalorder %s18, 0
    %p196 = por %p194, %p195
    %p197 = scmp.ne.s32.totalorder %s183, %s184
    %p198 = scmp.eq.s32.totalorder %s19, 1
    %p199 = por %p197, %p198
    %p201 = scmp.ne.s32.totalorder %s184, %s200
    %p202 = scmp.eq.s32.totalorder %s19, 0
    %p203 = por %p201, %p202
    %p204 = scmp.le.s32.totalorder 1, %s13
    %p205 = scmp.lt.s32.totalorder %s13, 3
    %p206 = pnand %p204, %p205
    %p207 = pneg %p206
    // Predicated region
    $region9: #{basic_block_forward.9} parent=5 // pred_check
      _
    $region10: #{basic_block_forward.9} parent=5 // pred_check_branch
      %209 = sbr.rel (%p206) target = $region12
    $region11: #{basic_block_forward.9} parent=5 // pred_region
      %s210 = ssub.s32 %s13, 1
      // Predicated region
      $region13: #{basic_block_forward.9} parent=11 // pred_check
        %p211 = pneg %p86
      $region14: #{basic_block_forward.9} parent=11 // pred_check_branch
        %213 = sbr.rel (%p211) target = $region16
      $region15: #{basic_block_forward.9} parent=11 // pred_region
        _
      $region16: #{basic_block_forward.9} parent=11 // pred_fallthru
        _
      // Predicated region
      $region17: #{basic_block_forward.9} parent=11 // pred_check
        %p214 = pneg %p107
      $region18: #{basic_block_forward.9} parent=11 // pred_check_branch
        %216 = sbr.rel (%p214) target = $region20
      $region19: #{basic_block_forward.9} parent=11 // pred_region
        _
      $region20: #{basic_block_forward.9} parent=11 // pred_fallthru
        _
      // Predicated region
      $region21: #{basic_block_forward.9} parent=11 // pred_check
        %p217 = pneg %p128
      $region22: #{basic_block_forward.9} parent=11 // pred_check_branch
        %219 = sbr.rel (%p217) target = $region24
      $region23: #{basic_block_forward.9} parent=11 // pred_region
        _
      $region24: #{basic_block_forward.9} parent=11 // pred_fallthru
        _
      // Predicated region
      $region25: #{basic_block_forward.9} parent=11 // pred_check
        %p220 = pneg %p149
      $region26: #{basic_block_forward.9} parent=11 // pred_check_branch
        %222 = sbr.rel (%p220) target = $region28
      $region27: #{basic_block_forward.9} parent=11 // pred_region
        _
      $region28: #{basic_block_forward.9} parent=11 // pred_fallthru
        _
      // Predicated region
      $region29: #{basic_block_forward.9} parent=11 // pred_check
        %p223 = pneg %p170
      $region30: #{basic_block_forward.9} parent=11 // pred_check_branch
        %225 = sbr.rel (%p223) target = $region32
      $region31: #{basic_block_forward.9} parent=11 // pred_region
        _
      $region32: #{basic_block_forward.9} parent=11 // pred_fallthru
        _
    $region12: #{basic_block_forward.9} parent=5 // pred_fallthru
      _
    %p226 = scmp.lt.s32.totalorder %s13, 2
    // Predicated region
    $region33: #{basic_block_forward.9} parent=5 // pred_check
      %p227 = pneg %p226
    $region34: #{basic_block_forward.9} parent=5 // pred_check_branch
      %229 = sbr.rel (%p227) target = $region36
    $region35: #{basic_block_forward.9} parent=5 // pred_region
      // Predicated region
      $region37: #{basic_block_forward.9} parent=35 // pred_check
        %p230 = pneg %p33
      $region38: #{basic_block_forward.9} parent=35 // pred_check_branch
        %232 = sbr.rel (%p230) target = $region40
      $region39: #{basic_block_forward.9} parent=35 // pred_region
        %s233 = smul.u32 8, %s13
        %p234 = scmp.lt.s32.totalorder %s233, 15
        %s235 = scalar_select %p234, %s233, 15
        %s236 = smul.addr %s235, 4
        %s237 = scalar_lea.vmem %s0, %s236
        %s238 = smul.u32 8, %s13
      $region40: #{basic_block_forward.9} parent=35 // pred_fallthru
        _
      // Predicated region
      $region41: #{basic_block_forward.9} parent=35 // pred_check
        %p239 = pneg %p59
      $region42: #{basic_block_forward.9} parent=35 // pred_check_branch
        %241 = sbr.rel (%p239) target = $region44
      $region43: #{basic_block_forward.9} parent=35 // pred_region
        %s242 = smul.u32 8, %s13
        %p243 = scmp.lt.s32.totalorder %s242, 15
        %s244 = scalar_select %p243, %s242, 15
        %s245 = smul.addr %s244, 4
        %s246 = scalar_lea.vmem %s1, %s245
        %s247 = smul.u32 8, %s13
      $region44: #{basic_block_forward.9} parent=35 // pred_fallthru
        _
    $region36: #{basic_block_forward.9} parent=5 // pred_fallthru
      _
    %p248 = scmp.le.s32.totalorder 1, %s13
    %p249 = scmp.lt.s32.totalorder %s13, 3
    %p250 = pnand %p248, %p249
    %p251 = pneg %p250
    // Predicated region
    $region45: #{basic_block_forward.9} parent=5 // pred_check
      _
    $region46: #{basic_block_forward.9} parent=5 // pred_check_branch
      %253 = sbr.rel (%p250) target = $region48
    $region47: #{basic_block_forward.9} parent=5 // pred_region
      %s254 = ssub.s32 %s13, 1
      %s255 = smul.u32 8, %s18
      %p256 = scmp.lt.s32.totalorder %s255, 15
      %s257 = scalar_select %p256, %s255, 15
      %s258 = smul.addr %s257, 4
      %s259 = scalar_lea.vmem %s0, %s258
      %p260 = pneg %p39
      %p261 = pneg %p36
      %s262 = smul.u32 8, %s18
      %p263 = scmp.lt.s32.totalorder %s262, 15
      %s264 = scalar_select %p263, %s262, 15
      %s265 = smul.addr %s264, 4
      %s266 = scalar_lea.vmem %s1, %s265
      %p267 = pneg %p65
      %p268 = pneg %p62
      %p269 = pneg %p86
      %p270 = pneg %p83
      %p271 = pneg %p107
      %p272 = pneg %p104
      %p273 = pneg %p128
      %p274 = pneg %p125
      %p275 = pneg %p149
      %p276 = pneg %p146
      %p277 = pneg %p170
      %p278 = pneg %p167
      %p279 = pneg %p196
      %p280 = pneg %p193
      %s281 = smul.u32 8, %s18
      %p282 = scmp.lt.s32.totalorder %s281, 15
      %s283 = scalar_select %p282, %s281, 15
      %s284 = smul.addr %s283, 8
      %s285 = scalar_lea.vmem %s7, %s284
      %s286 = smul.u32 8, %s18
      %p287 = scmp.lt.s32.totalorder %s286, 15
      %s288 = scalar_select %p287, %s286, 15
      %s289 = smul.addr %s288, 4
      %s290 = scalar_lea.vmem %s0, %s289
      %s291 = smul.u32 8, %s18
      %s292 = smul.u32 8, %s18
      %p293 = scmp.lt.s32.totalorder %s292, 15
      %s294 = scalar_select %p293, %s292, 15
      %s295 = smul.addr %s294, 4
      %s296 = scalar_lea.vmem %s1, %s295
      %s297 = smul.u32 8, %s18
      %s298 = smul.u32 8, %s18
      %p299 = scmp.lt.s32.totalorder %s298, 15
      %s300 = scalar_select %p299, %s298, 15
      %s301 = smul.addr %s300, 8
      %s302 = scalar_lea.vmem %s7, %s301
      %s303 = smul.u32 8, %s18
      %v305 = vld [vmem:[%s290] sm:$0xf]
      %v306 = vld [vmem:[%s290 + $0x4] sm:$0xf]
      %v307 = vld [vmem:[%s290 + $0x8] sm:$0xf]
      %v308 = vld [vmem:[%s290 + $0xc] sm:$0xf]
      %v309 = vld [vmem:[%s290 + $0x10] sm:$0xf]
      %v310 = vld [vmem:[%s290 + $0x14] sm:$0xf]
      %v311 = vld [vmem:[%s290 + $0x18] sm:$0xf]
      %v312 = vld [vmem:[%s290 + $0x1c] sm:$0xf]
      %v313 = vunpack.c.l.bf16 %v305
      %v314 = vunpack.c.l.bf16 %v306
      %v315 = vunpack.c.l.bf16 %v307
      %v316 = vunpack.c.l.bf16 %v308
      %v317 = vunpack.c.l.bf16 %v309
      %v318 = vunpack.c.l.bf16 %v310
      %v319 = vunpack.c.l.bf16 %v311
      %v320 = vunpack.c.l.bf16 %v312
      %v321 = vld [vmem:[%s3] sm:$0x1]
      %v323 = vperm.slane %v321, 0
      %v325 = vmul.f32 %v313, %v323
      %v326 = vmul.f32 %v314, %v323
      %v327 = vmul.f32 %v315, %v323
      %v328 = vmul.f32 %v316, %v323
      %v329 = vmul.f32 %v317, %v323
      %v330 = vmul.f32 %v318, %v323
      %v331 = vmul.f32 %v319, %v323
      %v332 = vmul.f32 %v320, %v323
      %v333 = vld [vmem:[%s4] sm:$0x1]
      %v335 = vperm.slane %v333, 0
      %v337 = vadd.f32 %v325, %v335
      %v338 = vadd.f32 %v326, %v335
      %v339 = vadd.f32 %v327, %v335
      %v340 = vadd.f32 %v328, %v335
      %v341 = vadd.f32 %v329, %v335
      %v342 = vadd.f32 %v330, %v335
      %v343 = vadd.f32 %v331, %v335
      %v344 = vadd.f32 %v332, %v335
      %v345 = vld [vmem:[%s296] sm:$0xf]
      %v346 = vld [vmem:[%s296 + $0x4] sm:$0xf]
      %v347 = vld [vmem:[%s296 + $0x8] sm:$0xf]
      %v348 = vld [vmem:[%s296 + $0xc] sm:$0xf]
      %v349 = vld [vmem:[%s296 + $0x10] sm:$0xf]
      %v350 = vld [vmem:[%s296 + $0x14] sm:$0xf]
      %v351 = vld [vmem:[%s296 + $0x18] sm:$0xf]
      %v352 = vld [vmem:[%s296 + $0x1c] sm:$0xf]
      %v353 = vld [vmem:[%s2] sm:$0x3]
      %v362 = vunpack.c.l.b16 %v345
      %v363 = vunpack.c.l.b16 %v346
      %v364 = vunpack.c.l.b16 %v347
      %v365 = vunpack.c.l.b16 %v348
      %v366 = vunpack.c.l.b16 %v349
      %v367 = vunpack.c.l.b16 %v350
      %v368 = vunpack.c.l.b16 %v351
      %v369 = vunpack.c.l.b16 %v352
      %v370 = vpack.c.b16 %v363, %v362
      %v371 = vpack.c.b16 %v365, %v364
      %v372 = vpack.c.b16 %v367, %v366
      %v373 = vpack.c.b16 %v369, %v368
      %vm374 = vcmask 31744
      %v376 = vsel %vm374, %v370, 0
      %v379 = vsel %vm374, %v371, 0
      %v382 = vsel %vm374, %v372, 0
      %v385 = vsel %vm374, %v373, 0
      %vm387 = vcmask 1041408
      %v389 = vsel %vm387, %v353, 0
      %391 = vmatpush.bf16.msra.mxu0 0
      %392 = vmatpush.bf16.msra.mxu0 0
      %393 = vmatpush.bf16.msra.mxu0 0
      %394 = vmatpush.bf16.msra.mxu0 0
      %395 = vmatpush.bf16.msra.mxu0 0
      %396 = vmatpush.bf16.msra.mxu0 0
      %397 = vmatpush.bf16.msra.mxu0 0
      %398 = vmatpush.bf16.msra.mxu0 %v389
      %399 = vmatmul.bf16.gmra.mxu0 %v376
      %v400 = vpop.f32.mrf.mxu0
      %v401 = vadd.f32 0.0, %v400
      %v402 = vpop.f32.mrf.mxu0
      %v403 = vadd.f32 0.0, %v402
      %404 = vmatmul.bf16.gmra.mxu0 %v379
      %v405 = vpop.f32.mrf.mxu0
      %v406 = vadd.f32 0.0, %v405
      %v407 = vpop.f32.mrf.mxu0
      %v408 = vadd.f32 0.0, %v407
      %409 = vmatmul.bf16.gmra.mxu0 %v382
      %v410 = vpop.f32.mrf.mxu0
      %v411 = vadd.f32 0.0, %v410
      %v412 = vpop.f32.mrf.mxu0
      %v413 = vadd.f32 0.0, %v412
      %414 = vmatmul.bf16.gmra.mxu0 %v385
      %v415 = vpop.f32.mrf.mxu0
      %v416 = vadd.f32 0.0, %v415
      %v417 = vpop.f32.mrf.mxu0
      %v418 = vadd.f32 0.0, %v417
      %419 = vdwg.mxu0
      %v420 = vld [vmem:[%s5] sm:$0x1]
      %v422 = vperm.slane %v420, 0
      %v424 = vmul.f32 %v401, %v422
      %v425 = vmul.f32 %v403, %v422
      %v426 = vmul.f32 %v406, %v422
      %v427 = vmul.f32 %v408, %v422
      %v428 = vmul.f32 %v411, %v422
      %v429 = vmul.f32 %v413, %v422
      %v430 = vmul.f32 %v416, %v422
      %v431 = vmul.f32 %v418, %v422
      %v432 = vadd.f32 %v337, %v424
      %v433 = vadd.f32 %v338, %v425
      %v434 = vadd.f32 %v339, %v426
      %v435 = vadd.f32 %v340, %v427
      %v436 = vadd.f32 %v341, %v428
      %v437 = vadd.f32 %v342, %v429
      %v438 = vadd.f32 %v343, %v430
      %v439 = vadd.f32 %v344, %v431
      %v440 = vld [vmem:[%s6] sm:$0x1]
      %v442 = vperm.slane %v440, 0
      %v444 = vadd.f32 %v432, %v442
      %v445 = vadd.f32 %v433, %v442
      %v446 = vadd.f32 %v434, %v442
      %v447 = vadd.f32 %v435, %v442
      %v448 = vadd.f32 %v436, %v442
      %v449 = vadd.f32 %v437, %v442
      %v450 = vadd.f32 %v438, %v442
      %v451 = vadd.f32 %v439, %v442
      %v452 = vmax.f32 %v444, 0.0
      %v453 = vmax.f32 %v445, 0.0
      %v454 = vmax.f32 %v446, 0.0
      %v455 = vmax.f32 %v447, 0.0
      %v456 = vmax.f32 %v448, 0.0
      %v457 = vmax.f32 %v449, 0.0
      %v458 = vmax.f32 %v450, 0.0
      %v459 = vmax.f32 %v451, 0.0
      %460 = vst [vmem:[%s302] sm:$0xff] %v452
      %461 = vst [vmem:[%s302 + $0x8] sm:$0xff] %v453
      %462 = vst [vmem:[%s302 + $0x10] sm:$0xff] %v454
      %463 = vst [vmem:[%s302 + $0x18] sm:$0xff] %v455
      %464 = vst [vmem:[%s302 + $0x20] sm:$0xff] %v456
      %465 = vst [vmem:[%s302 + $0x28] sm:$0xff] %v457
      %466 = vst [vmem:[%s302 + $0x30] sm:$0xff] %v458
      %467 = vst [vmem:[%s302 + $0x38] sm:$0xff] %v459
      %s468 = smul.u32 8, %s18
      %p469 = scmp.lt.s32.totalorder %s468, 15
      %s470 = scalar_select %p469, %s468, 15
      %s471 = smul.addr %s470, 8
      %s472 = scalar_lea.vmem %s7, %s471
      // Predicated region
      $region49: #{basic_block_forward.9} parent=47 // pred_check
        %p473 = pneg %p193
      $region50: #{basic_block_forward.9} parent=47 // pred_check_branch
        %475 = sbr.rel (%p473) target = $region52
      $region51: #{basic_block_forward.9} parent=47 // pred_region
        %s476 = smul.u32 8, %s18
      $region52: #{basic_block_forward.9} parent=47 // pred_fallthru
        _
    $region48: #{basic_block_forward.9} parent=5 // pred_fallthru
      _
    %p477 = scmp.le.s32.totalorder 2, %s13
    // Predicated region
    $region53: #{basic_block_forward.9} parent=5 // pred_check
      %p478 = pneg %p477
    $region54: #{basic_block_forward.9} parent=5 // pred_check_branch
      %480 = sbr.rel (%p478) target = $region56
    $region55: #{basic_block_forward.9} parent=5 // pred_region
      %s481 = ssub.s32 %s13, 2
      // Predicated region
      $region57: #{basic_block_forward.9} parent=55 // pred_check
        %p482 = pneg %p199
      $region58: #{basic_block_forward.9} parent=55 // pred_check_branch
        %484 = sbr.rel (%p482) target = $region60
      $region59: #{basic_block_forward.9} parent=55 // pred_region
        %s485 = smul.u32 8, %s19
        %p486 = scmp.lt.s32.totalorder %s485, 15
        %s487 = scalar_select %p486, %s485, 15
        %s488 = smul.addr %s487, 8
        %s489 = scalar_lea.vmem %s7, %s488
      $region60: #{basic_block_forward.9} parent=55 // pred_fallthru
        _
    $region56: #{basic_block_forward.9} parent=5 // pred_fallthru
      _
  $region6: #{basic_block_forward.9} parent=0 // loop_footer
    %s17 = sadd.s32 1, %s13
  $region7: #{basic_block_forward.9} parent=0 // loop_footer_branch
    %12 = sbr.rel target = $region3
  $region8: #{basic_block_forward.9} parent=0 // loop_exit
    _

// kernel: basic_block_forward.7
$region0: #{basic_block_forward.7}
  #allocation0 [shape = 'u32[]', space=smem, size = 0x4, offset = 0x4, fixed_abs, tag = 'smem constant byte address 0x4 - core index']
  #allocation1 [shape = 'u32[72,128]{1,0:T(1,128)}', space=vmem, size = 0x9000, scoped, tag = 'internal scratch']
  %s0 = inlined_call_operand.vmem [shape: bf16[2,10,10,128], index: 0, kind: input, shape index: {}]
  %s1 = inlined_call_operand.vmem [shape: bf16[9,128,128], index: 1, kind: input, shape index: {}]
  %s2 = inlined_call_operand.vmem [shape: bf16[128,128], index: 2, kind: output, shape index: {0}]
  %s3 = inlined_call_operand.vmem [shape: f32[2,1,128], index: 3, kind: output, shape index: {1}]
  %s4 = inlined_call_operand.vmem [shape: f32[2,1,128], index: 4, kind: output, shape index: {2}]
  %5 = xla_tuple %s2, %s3, %s4
  %s6 = sld [smem:[#allocation0]]
  $region57: #{basic_block_forward.7} parent=0
    _
  %s8 = ssub.s32 1, %s6
  %s9 = scalar_select 0, %s8, %s6
  loop: start=0, step=1, limit=4
  $region2: #{basic_block_forward.7} parent=0 // loop_pre_header
    _
  $region3: #{basic_block_forward.7} parent=0 // loop_header
    %s11 = sphi 0, %s15
    %p12 = scmp.ge.s32.totalorder %s11, 4
    %s21 = sphi 0, %s23
    %s24 = sphi 0, %s21
    %s25 = sphi 0, %s24
    %s41 = sphi 0, %s25
    %s45 = sphi 0, %s45
    %s47 = sphi 0, %s45
    %s48 = sphi 0, %s47
    %s62 = sphi 0, %s48
    %s68 = sphi 0, %s70
    %s71 = sphi 0, %s68
    %s72 = sphi 0, %s71
    %s88 = sphi 0, %s72
    %s94 = sphi 0, %s96
    %s97 = sphi 0, %s94
    %s98 = sphi 0, %s97
    %s114 = sphi 0, %s98
    %s120 = sphi 0, %s122
    %s123 = sphi 0, %s120
    %s124 = sphi 0, %s123
    %s140 = sphi 0, %s124
  $region4: #{basic_block_forward.7} parent=0 // loop_header_branch
    %14 = sbr.rel (%p12) target = $region8
  $region5: #{basic_block_forward.7} parent=0 // loop_body
    %s16 = ssub.s32 %s11, 1
    %s17 = ssub.s32 %s11, 2
    %s18 = sadd.s32 %s11, 1
    %s19 = ssub.s32 %s11, %s18
    %p20 = scmp.eq.s32.totalorder %s19, 0
    %s22 = sadd.s32 %s21, 1
    %s23 = scalar_select %p20, %s21, %s22
    %p26 = pneg %p20
    %p27 = scmp.eq.s32.totalorder %s11, 1
    %p28 = por %p26, %p27
    %p29 = scmp.ne.s32.totalorder %s21, %s24
    %p30 = scmp.eq.s32.totalorder %s11, 0
    %p31 = por %p29, %p30
    %p32 = scmp.ne.s32.totalorder %s21, %s24
    %p33 = scmp.eq.s32.totalorder %s16, 1
    %p34 = por %p32, %p33
    %p35 = scmp.ne.s32.totalorder %s24, %s25
    %p36 = scmp.eq.s32.totalorder %s16, 0
    %p37 = por %p35, %p36
    %p38 = scmp.ne.s32.totalorder %s24, %s25
    %p39 = scmp.eq.s32.totalorder %s17, 1
    %p40 = por %p38, %p39
    %p42 = scmp.ne.s32.totalorder %s25, %s41
    %p43 = scmp.eq.s32.totalorder %s17, 0
    %p44 = por %p42, %p43
    %s46 = sadd.s32 %s45, 1
    %p49 = scmp.eq.s32.totalorder %s11, 1
    %p50 = scmp.ne.s32.totalorder %s45, %s47
    %p51 = scmp.eq.s32.totalorder %s11, 0
    %p52 = por %p50, %p51
    %p53 = scmp.ne.s32.totalorder %s45, %s47
    %p54 = scmp.eq.s32.totalorder %s16, 1
    %p55 = por %p53, %p54
    %p56 = scmp.ne.s32.totalorder %s47, %s48
    %p57 = scmp.eq.s32.totalorder %s16, 0
    %p58 = por %p56, %p57
    %p59 = scmp.ne.s32.totalorder %s47, %s48
    %p60 = scmp.eq.s32.totalorder %s17, 1
    %p61 = por %p59, %p60
    %p63 = scmp.ne.s32.totalorder %s48, %s62
    %p64 = scmp.eq.s32.totalorder %s17, 0
    %p65 = por %p63, %p64
    %s66 = ssub.s32 %s11, %s18
    %p67 = scmp.eq.s32.totalorder %s66, 0
    %s69 = sadd.s32 %s68, 1
    %s70 = scalar_select %p67, %s68, %s69
    %p73 = pneg %p67
    %p74 = scmp.eq.s32.totalorder %s11, 1
    %p75 = por %p73, %p74
    %p76 = scmp.ne.s32.totalorder %s68, %s71
    %p77 = scmp.eq.s32.totalorder %s11, 0
    %p78 = por %p76, %p77
    %p79 = scmp.ne.s32.totalorder %s68, %s71
    %p80 = scmp.eq.s32.totalorder %s16, 1
    %p81 = por %p79, %p80
    %p82 = scmp.ne.s32.totalorder %s71, %s72
    %p83 = scmp.eq.s32.totalorder %s16, 0
    %p84 = por %p82, %p83
    %p85 = scmp.ne.s32.totalorder %s71, %s72
    %p86 = scmp.eq.s32.totalorder %s17, 1
    %p87 = por %p85, %p86
    %p89 = scmp.ne.s32.totalorder %s72, %s88
    %p90 = scmp.eq.s32.totalorder %s17, 0
    %p91 = por %p89, %p90
    %s92 = ssub.s32 %s11, %s18
    %p93 = scmp.eq.s32.totalorder %s92, 0
    %s95 = sadd.s32 %s94, 1
    %s96 = scalar_select %p93, %s94, %s95
    %p99 = pneg %p93
    %p100 = scmp.eq.s32.totalorder %s11, 1
    %p101 = por %p99, %p100
    %p102 = scmp.ne.s32.totalorder %s94, %s97
    %p103 = scmp.eq.s32.totalorder %s11, 0
    %p104 = por %p102, %p103
    %p105 = scmp.ne.s32.totalorder %s94, %s97
    %p106 = scmp.eq.s32.totalorder %s16, 1
    %p107 = por %p105, %p106
    %p108 = scmp.ne.s32.totalorder %s97, %s98
    %p109 = scmp.eq.s32.totalorder %s16, 0
    %p110 = por %p108, %p109
    %p111 = scmp.ne.s32.totalorder %s97, %s98
    %p112 = scmp.eq.s32.totalorder %s17, 1
    %p113 = por %p111, %p112
    %p115 = scmp.ne.s32.totalorder %s98, %s114
    %p116 = scmp.eq.s32.totalorder %s17, 0
    %p117 = por %p115, %p116
    %s118 = ssub.s32 %s11, %s18
    %p119 = scmp.eq.s32.totalorder %s118, 0
    %s121 = sadd.s32 %s120, 1
    %s122 = scalar_select %p119, %s120, %s121
    %p125 = pneg %p119
    %p126 = scmp.eq.s32.totalorder %s11, 1
    %p127 = por %p125, %p126
    %p128 = scmp.ne.s32.totalorder %s120, %s123
    %p129 = scmp.eq.s32.totalorder %s11, 0
    %p130 = por %p128, %p129
    %p131 = scmp.ne.s32.totalorder %s120, %s123
    %p132 = scmp.eq.s32.totalorder %s16, 1
    %p133 = por %p131, %p132
    %p134 = scmp.ne.s32.totalorder %s123, %s124
    %p135 = scmp.eq.s32.totalorder %s16, 0
    %p136 = por %p134, %p135
    %p137 = scmp.ne.s32.totalorder %s123, %s124
    %p138 = scmp.eq.s32.totalorder %s17, 1
    %p139 = por %p137, %p138
    %p141 = scmp.ne.s32.totalorder %s124, %s140
    %p142 = scmp.eq.s32.totalorder %s17, 0
    %p143 = por %p141, %p142
    %p144 = scmp.le.s32.totalorder 1, %s11
    %p145 = scmp.lt.s32.totalorder %s11, 3
    %p146 = pnand %p144, %p145
    %p147 = pneg %p146
    // Predicated region
    $region9: #{basic_block_forward.7} parent=5 // pred_check
      _
    $region10: #{basic_block_forward.7} parent=5 // pred_check_branch
      %149 = sbr.rel (%p146) target = $region12
    $region11: #{basic_block_forward.7} parent=5 // pred_region
      %s150 = ssub.s32 %s11, 1
      // Predicated region
      $region13: #{basic_block_forward.7} parent=11 // pred_check
        %p151 = pneg %p58
      $region14: #{basic_block_forward.7} parent=11 // pred_check_branch
        %153 = sbr.rel (%p151) target = $region16
      $region15: #{basic_block_forward.7} parent=11 // pred_region
        _
      $region16: #{basic_block_forward.7} parent=11 // pred_fallthru
        _
    $region12: #{basic_block_forward.7} parent=5 // pred_fallthru
      _
    %p154 = scmp.lt.s32.totalorder %s11, 2
    // Predicated region
    $region17: #{basic_block_forward.7} parent=5 // pred_check
      %p155 = pneg %p154
    $region18: #{basic_block_forward.7} parent=5 // pred_check_branch
      %157 = sbr.rel (%p155) target = $region20
    $region19: #{basic_block_forward.7} parent=5 // pred_region
      // Predicated region
      $region21: #{basic_block_forward.7} parent=19 // pred_check
        %p158 = pneg %p31
      $region22: #{basic_block_forward.7} parent=19 // pred_check_branch
        %160 = sbr.rel (%p158) target = $region24
      $region23: #{basic_block_forward.7} parent=19 // pred_region
        %p161 = scmp.lt.s32.totalorder %s11, 1
        %s162 = scalar_select %p161, %s11, 1
        %s163 = smul.addr %s162, 20
        %s164 = smul.addr %s163, 4
        %s165 = scalar_lea.vmem %s0, %s164
      $region24: #{basic_block_forward.7} parent=19 // pred_fallthru
        _
    $region20: #{basic_block_forward.7} parent=5 // pred_fallthru
      _
    %p166 = scmp.le.s32.totalorder 1, %s11
    %p167 = scmp.lt.s32.totalorder %s11, 3
    %p168 = pnand %p166, %p167
    %p169 = pneg %p168
    // Predicated region
    $region25: #{basic_block_forward.7} parent=5 // pred_check
      _
    $region26: #{basic_block_forward.7} parent=5 // pred_check_branch
      %171 = sbr.rel (%p168) target = $region28
    $region27: #{basic_block_forward.7} parent=5 // pred_region
      %s172 = ssub.s32 %s11, 1
      %p173 = scmp.lt.s32.totalorder %s16, 1
      %s174 = scalar_select %p173, %s16, 1
      %s175 = smul.addr %s174, 20
      %s176 = smul.addr %s175, 4
      %s177 = scalar_lea.vmem %s0, %s176
      %p178 = pneg %p37
      %p179 = pneg %p34
      %p180 = pneg %p58
      %p181 = pneg %p55
      %p182 = pneg %p84
      %p183 = pneg %p81
      %s184 = smul.u32 8, %s16
      %p185 = scmp.lt.s32.totalorder %s184, 15
      %s186 = scalar_select %p185, %s184, 15
      %s187 = smul.addr %s186, 4
      %s188 = scalar_lea.vmem %s2, %s187
      %p189 = pneg %p110
      %p190 = pneg %p107
      %p191 = scmp.lt.s32.totalorder %s16, 1
      %s192 = scalar_select %p191, %s16, 1
      %s193 = scalar_lea.vmem %s3, %s192
      %p194 = pneg %p136
      %p195 = pneg %p133
      %p196 = scmp.lt.s32.totalorder %s16, 1
      %s197 = scalar_select %p196, %s16, 1
      %s198 = scalar_lea.vmem %s4, %s197
      %p199 = scmp.lt.s32.totalorder %s16, 1
      %s200 = scalar_select %p199, %s16, 1
      %s201 = smul.addr %s200, 20
      %s202 = smul.addr %s201, 4
      %s203 = scalar_lea.vmem %s0, %s202
      %s204 = smul.u32 8, %s16
      %p205 = scmp.lt.s32.totalorder %s204, 15
      %s206 = scalar_select %p205, %s204, 15
      %s207 = smul.addr %s206, 4
      %s208 = scalar_lea.vmem %s2, %s207
      %s209 = smul.u32 8, %s16
      %p210 = scmp.lt.s32.totalorder %s16, 1
      %s211 = scalar_select %p210, %s16, 1
      %s212 = scalar_lea.vmem %s3, %s211
      %p213 = scmp.lt.s32.totalorder %s16, 1
      %s214 = scalar_select %p213, %s16, 1
      %s215 = scalar_lea.vmem %s4, %s214
      %v216 = vld [vmem:[%s203] sm:$0xf]
      %v217 = vld [vmem:[%s203 + $0x8] sm:$0xf]
      %v218 = vld [vmem:[%s203 + $0x10] sm:$0xf]
      %v219 = vld [vmem:[%s203 + $0x18] sm:$0xf]
      %v220 = vld [vmem:[%s203 + $0x20] sm:$0xf]
      %v221 = vld [vmem:[%s203 + $0x28] sm:$0xf]
      %v222 = vld [vmem:[%s203 + $0x30] sm:$0xf]
      %v223 = vld [vmem:[%s203 + $0x38] sm:$0xf]
      %v224 = vld [vmem:[%s1] sm:$0xf]
      %v225 = vld [vmem:[%s1 + $0x4] sm:$0xf]
      %v226 = vld [vmem:[%s1 + $0x8] sm:$0xf]
      %v227 = vld [vmem:[%s1 + $0xc] sm:$0xf]
      %v228 = vld [vmem:[%s1 + $0x10] sm:$0xf]
      %v229 = vld [vmem:[%s1 + $0x14] sm:$0xf]
      %v230 = vld [vmem:[%s1 + $0x18] sm:$0xf]
      %v231 = vld [vmem:[%s1 + $0x1c] sm:$0xf]
      %v232 = vld [vmem:[%s1 + $0x20] sm:$0xf]
      %v233 = vld [vmem:[%s1 + $0x24] sm:$0xf]
      %v234 = vld [vmem:[%s1 + $0x28] sm:$0xf]
      %v235 = vld [vmem:[%s1 + $0x2c] sm:$0xf]
      %v236 = vld [vmem:[%s1 + $0x30] sm:$0xf]
      %v237 = vld [vmem:[%s1 + $0x34] sm:$0xf]
      %v238 = vld [vmem:[%s1 + $0x38] sm:$0xf]
      %v239 = vld [vmem:[%s1 + $0x3c] sm:$0xf]
      %v240 = vld [vmem:[%s203 + $0x4] sm:$0x1]
      %v241 = vld [vmem:[%s203 + $0xc] sm:$0x1]
      %v242 = vld [vmem:[%s203 + $0x14] sm:$0x1]
      %v243 = vld [vmem:[%s203 + $0x1c] sm:$0x1]
      %v244 = vld [vmem:[%s203 + $0x24] sm:$0x1]
      %v245 = vld [vmem:[%s203 + $0x2c] sm:$0x1]
      %v246 = vld [vmem:[%s203 + $0x34] sm:$0x1]
      %v247 = vld [vmem:[%s203 + $0x3c] sm:$0x1]
      %vm248 = vsmask.f32 3328
      %vm249 = vsmask.f32 7440
      %vm250 = vmor %vm248, %vm249
      %v252 = vshrl.u32 %v216, 16
      %v254 = vrot.slane %v252, 4
      %v255 = vshll.u32 %v216, 16
      %v257 = vrot.slane %v255, 5
      %v258 = vor.u32 %v254, %v257
      %v259 = vrot.slane %v258, 4
      %v261 = vshll.u32 %v240, 16
      %v263 = vrot.slane %v261, 5
      %v264 = vsel %vm250, %v259, %v263
      %v266 = vshrl.u32 %v217, 16
      %v268 = vrot.slane %v266, 4
      %v269 = vshll.u32 %v217, 16
      %v271 = vrot.slane %v269, 5
      %v272 = vor.u32 %v268, %v271
      %v273 = vrot.slane %v272, 4
      %v275 = vshll.u32 %v241, 16
      %v277 = vrot.slane %v275, 5
      %v278 = vsel %vm250, %v273, %v277
      %v280 = vshrl.u32 %v218, 16
      %v282 = vrot.slane %v280, 4
      %v283 = vshll.u32 %v218, 16
      %v285 = vrot.slane %v283, 5
      %v286 = vor.u32 %v282, %v285
      %v287 = vrot.slane %v286, 4
      %v289 = vshll.u32 %v242, 16
      %v291 = vrot.slane %v289, 5
      %v292 = vsel %vm250, %v287, %v291
      %v294 = vshrl.u32 %v219, 16
      %v296 = vrot.slane %v294, 4
      %v297 = vshll.u32 %v219, 16
      %v299 = vrot.slane %v297, 5
      %v300 = vor.u32 %v296, %v299
      %v301 = vrot.slane %v300, 4
      %v303 = vshll.u32 %v243, 16
      %v305 = vrot.slane %v303, 5
      %v306 = vsel %vm250, %v301, %v305
      %v308 = vshrl.u32 %v220, 16
      %v310 = vrot.slane %v308, 4
      %v311 = vshll.u32 %v220, 16
      %v313 = vrot.slane %v311, 5
      %v314 = vor.u32 %v310, %v313
      %v315 = vrot.slane %v314, 4
      %v317 = vshll.u32 %v244, 16
      %v319 = vrot.slane %v317, 5
      %v320 = vsel %vm250, %v315, %v319
      %v322 = vshrl.u32 %v221, 16
      %v324 = vrot.slane %v322, 4
      %v325 = vshll.u32 %v221, 16
      %v327 = vrot.slane %v325, 5
      %v328 = vor.u32 %v324, %v327
      %v329 = vrot.slane %v328, 4
      %v331 = vshll.u32 %v245, 16
      %v333 = vrot.slane %v331, 5
      %v334 = vsel %vm250, %v329, %v333
      %v336 = vshrl.u32 %v222, 16
      %v338 = vrot.slane %v336, 4
      %v339 = vshll.u32 %v222, 16
      %v341 = vrot.slane %v339, 5
      %v342 = vor.u32 %v338, %v341
      %v343 = vrot.slane %v342, 4
      %v345 = vshll.u32 %v246, 16
      %v347 = vrot.slane %v345, 5
      %v348 = vsel %vm250, %v343, %v347
      %v350 = vshrl.u32 %v223, 16
      %v352 = vrot.slane %v350, 4
      %v353 = vshll.u32 %v223, 16
      %v355 = vrot.slane %v353, 5
      %v356 = vor.u32 %v352, %v355
      %v357 = vrot.slane %v356, 4
      %v359 = vshll.u32 %v247, 16
      %v361 = vrot.slane %v359, 5
      %v362 = vsel %vm250, %v357, %v361
      %s363 = scalar_lea.vmem %s1, 64
      %v364 = vld [vmem:[%s363] sm:$0xf]
      %v365 = vld [vmem:[%s363 + $0x4] sm:$0xf]
      %v366 = vld [vmem:[%s363 + $0x8] sm:$0xf]
      %v367 = vld [vmem:[%s363 + $0xc] sm:$0xf]
      %v368 = vld [vmem:[%s363 + $0x10] sm:$0xf]
      %v369 = vld [vmem:[%s363 + $0x14] sm:$0xf]
      %v370 = vld [vmem:[%s363 + $0x18] sm:$0xf]
      %v371 = vld [vmem:[%s363 + $0x1c] sm:$0xf]
      %v372 = vld [vmem:[%s363 + $0x20] sm:$0xf]
      %v373 = vld [vmem:[%s363 + $0x24] sm:$0xf]
      %v374 = vld [vmem:[%s363 + $0x28] sm:$0xf]
      %v375 = vld [vmem:[%s363 + $0x2c] sm:$0xf]
      %v376 = vld [vmem:[%s363 + $0x30] sm:$0xf]
      %v377 = vld [vmem:[%s363 + $0x34] sm:$0xf]
      %v378 = vld [vmem:[%s363 + $0x38] sm:$0xf]
      %v379 = vld [vmem:[%s363 + $0x3c] sm:$0xf]
      %v380 = vunpack.c.l.b16 %v264
      %v381 = vunpack.c.l.b16 %v278
      %v382 = vunpack.c.l.b16 %v292
      %v383 = vunpack.c.l.b16 %v306
      %v384 = vunpack.c.l.b16 %v320
      %v385 = vunpack.c.l.b16 %v334
      %v386 = vunpack.c.l.b16 %v348
      %v387 = vunpack.c.l.b16 %v362
      %v388 = vpack.c.b16 %v381, %v380
      %v389 = vpack.c.b16 %v383, %v382
      %v390 = vpack.c.b16 %v385, %v384
      %v391 = vpack.c.b16 %v387, %v386
      %v412 = vunpack.c.l.b16 %v364
      %v413 = vunpack.c.l.b16 %v365
      %v414 = vunpack.c.l.b16 %v366
      %v415 = vunpack.c.l.b16 %v367
      %v416 = vunpack.c.l.b16 %v368
      %v417 = vunpack.c.l.b16 %v369
      %v418 = vunpack.c.l.b16 %v370
      %v419 = vunpack.c.l.b16 %v371
      %v420 = vunpack.c.l.b16 %v372
      %v421 = vunpack.c.l.b16 %v373
      %v422 = vunpack.c.l.b16 %v374
      %v423 = vunpack.c.l.b16 %v375
      %v424 = vunpack.c.l.b16 %v376
      %v425 = vunpack.c.l.b16 %v377
      %v426 = vunpack.c.l.b16 %v378
      %v427 = vunpack.c.l.b16 %v379
      %v428 = vpack.c.b16 %v413, %v412
      %v429 = vpack.c.b16 %v415, %v414
      %v430 = vpack.c.b16 %v417, %v416
      %v431 = vpack.c.b16 %v419, %v418
      %v432 = vpack.c.b16 %v421, %v420
      %v433 = vpack.c.b16 %v423, %v422
      %v434 = vpack.c.b16 %v425, %v424
      %v435 = vpack.c.b16 %v427, %v426
      %444 = vmatpush.bf16.msra.mxu0 %v435
      %445 = vmatpush.bf16.msra.mxu0 %v434
      %446 = vmatpush.bf16.msra.mxu0 %v433
      %447 = vmatpush.bf16.msra.mxu0 %v432
      %448 = vmatpush.bf16.msra.mxu0 %v431
      %449 = vmatpush.bf16.msra.mxu0 %v430
      %450 = vmatpush.bf16.msra.mxu0 %v429
      %451 = vmatpush.bf16.msra.mxu0 %v428
      %452 = vmatmul.bf16.gmra.mxu0 %v388
      %v453 = vpop.f32.mrf.mxu0
      %v454 = vadd.f32 0.0, %v453
      %v455 = vpop.f32.mrf.mxu0
      %v456 = vadd.f32 0.0, %v455
      %457 = vmatmul.bf16.gmra.mxu0 %v389
      %v458 = vpop.f32.mrf.mxu0
      %v459 = vadd.f32 0.0, %v458
      %v460 = vpop.f32.mrf.mxu0
      %v461 = vadd.f32 0.0, %v460
      %462 = vmatmul.bf16.gmra.mxu0 %v390
      %v463 = vpop.f32.mrf.mxu0
      %v464 = vadd.f32 0.0, %v463
      %v465 = vpop.f32.mrf.mxu0
      %v466 = vadd.f32 0.0, %v465
      %467 = vmatmul.bf16.gmra.mxu0 %v391
      %v468 = vpop.f32.mrf.mxu0
      %v469 = vadd.f32 0.0, %v468
      %v470 = vpop.f32.mrf.mxu0
      %v471 = vadd.f32 0.0, %v470
      %472 = vdwg.mxu0
      %v481 = vunpack.c.l.b16 %v216
      %v482 = vunpack.c.l.b16 %v217
      %v483 = vunpack.c.l.b16 %v218
      %v484 = vunpack.c.l.b16 %v219
      %v485 = vunpack.c.l.b16 %v220
      %v486 = vunpack.c.l.b16 %v221
      %v487 = vunpack.c.l.b16 %v222
      %v488 = vunpack.c.l.b16 %v223
      %v489 = vpack.c.b16 %v482, %v481
      %v490 = vpack.c.b16 %v484, %v483
      %v491 = vpack.c.b16 %v486, %v485
      %v492 = vpack.c.b16 %v488, %v487
      %v513 = vunpack.c.l.b16 %v224
      %v514 = vunpack.c.l.b16 %v225
      %v515 = vunpack.c.l.b16 %v226
      %v516 = vunpack.c.l.b16 %v227
      %v517 = vunpack.c.l.b16 %v228
      %v518 = vunpack.c.l.b16 %v229
      %v519 = vunpack.c.l.b16 %v230
      %v520 = vunpack.c.l.b16 %v231
      %v521 = vunpack.c.l.b16 %v232
      %v522 = vunpack.c.l.b16 %v233
      %v523 = vunpack.c.l.b16 %v234
      %v524 = vunpack.c.l.b16 %v235
      %v525 = vunpack.c.l.b16 %v236
      %v526 = vunpack.c.l.b16 %v237
      %v527 = vunpack.c.l.b16 %v238
      %v528 = vunpack.c.l.b16 %v239
      %v529 = vpack.c.b16 %v514, %v513
      %v530 = vpack.c.b16 %v516, %v515
      %v531 = vpack.c.b16 %v518, %v517
      %v532 = vpack.c.b16 %v520, %v519
      %v533 = vpack.c.b16 %v522, %v521
      %v534 = vpack.c.b16 %v524, %v523
      %v535 = vpack.c.b16 %v526, %v525
      %v536 = vpack.c.b16 %v528, %v527
      %545 = vmatpush.bf16.msra.mxu0 %v536
      %546 = vmatpush.bf16.msra.mxu0 %v535
      %547 = vmatpush.bf16.msra.mxu0 %v534
      %548 = vmatpush.bf16.msra.mxu0 %v533
      %549 = vmatpush.bf16.msra.mxu0 %v532
      %550 = vmatpush.bf16.msra.mxu0 %v531
      %551 = vmatpush.bf16.msra.mxu0 %v530
      %552 = vmatpush.bf16.msra.mxu0 %v529
      %553 = vmatmul.bf16.gmra.mxu0 %v489
      %v554 = vpop.f32.mrf.mxu0
      %v555 = vadd.f32 %v454, %v554
      %v556 = vpop.f32.mrf.mxu0
      %v557 = vadd.f32 %v456, %v556
      %558 = vmatmul.bf16.gmra.mxu0 %v490
      %v559 = vpop.f32.mrf.mxu0
      %v560 = vadd.f32 %v459, %v559
      %v561 = vpop.f32.mrf.mxu0
      %v562 = vadd.f32 %v461, %v561
      %563 = vmatmul.bf16.gmra.mxu0 %v491
      %v564 = vpop.f32.mrf.mxu0
      %v565 = vadd.f32 %v464, %v564
      %v566 = vpop.f32.mrf.mxu0
      %v567 = vadd.f32 %v466, %v566
      %568 = vmatmul.bf16.gmra.mxu0 %v492
      %v569 = vpop.f32.mrf.mxu0
      %v570 = vadd.f32 %v469, %v569
      %v571 = vpop.f32.mrf.mxu0
      %v572 = vadd.f32 %v471, %v571
      %573 = vdwg.mxu0
      %v574 = vld [vmem:[%s203] sm:$0xe]
      %v575 = vld [vmem:[%s203 + $0x8] sm:$0xe]
      %v576 = vld [vmem:[%s203 + $0x10] sm:$0xe]
      %v577 = vld [vmem:[%s203 + $0x18] sm:$0xe]
      %v578 = vld [vmem:[%s203 + $0x20] sm:$0xe]
      %v579 = vld [vmem:[%s203 + $0x28] sm:$0xe]
      %v580 = vld [vmem:[%s203 + $0x30] sm:$0xe]
      %v581 = vld [vmem:[%s203 + $0x38] sm:$0xe]
      %vm598 = vcmask 1042432
      %vm599 = vcmask 1046532
      %vm600 = vmor %vm598, %vm599
      %v601 = vrot.slane %v574, 5
      %v602 = vrot.slane %v601, 4
      %v603 = vrot.slane %v240, 5
      %v604 = vsel %vm600, %v602, %v603
      %v605 = vrot.slane %v575, 5
      %v606 = vrot.slane %v605, 4
      %v607 = vrot.slane %v241, 5
      %v608 = vsel %vm600, %v606, %v607
      %v609 = vrot.slane %v576, 5
      %v610 = vrot.slane %v609, 4
      %v611 = vrot.slane %v242, 5
      %v612 = vsel %vm600, %v610, %v611
      %v613 = vrot.slane %v577, 5
      %v614 = vrot.slane %v613, 4
      %v615 = vrot.slane %v243, 5
      %v616 = vsel %vm600, %v614, %v615
      %v617 = vrot.slane %v578, 5
      %v618 = vrot.slane %v617, 4
      %v619 = vrot.slane %v244, 5
      %v620 = vsel %vm600, %v618, %v619
      %v621 = vrot.slane %v579, 5
      %v622 = vrot.slane %v621, 4
      %v623 = vrot.slane %v245, 5
      %v624 = vsel %vm600, %v622, %v623
      %v625 = vrot.slane %v580, 5
      %v626 = vrot.slane %v625, 4
      %v627 = vrot.slane %v246, 5
      %v628 = vsel %vm600, %v626, %v627
      %v629 = vrot.slane %v581, 5
      %v630 = vrot.slane %v629, 4
      %v631 = vrot.slane %v247, 5
      %v632 = vsel %vm600, %v630, %v631
      %s633 = scalar_lea.vmem %s1, 128
      %v634 = vld [vmem:[%s633] sm:$0xf]
      %v635 = vld [vmem:[%s633 + $0x4] sm:$0xf]
      %v636 = vld [vmem:[%s633 + $0x8] sm:$0xf]
      %v637 = vld [vmem:[%s633 + $0xc] sm:$0xf]
      %v638 = vld [vmem:[%s633 + $0x10] sm:$0xf]
      %v639 = vld [vmem:[%s633 + $0x14] sm:$0xf]
      %v640 = vld [vmem:[%s633 + $0x18] sm:$0xf]
      %v641 = vld [vmem:[%s633 + $0x1c] sm:$0xf]
      %v642 = vld [vmem:[%s633 + $0x20] sm:$0xf]
      %v643 = vld [vmem:[%s633 + $0x24] sm:$0xf]
      %v644 = vld [vmem:[%s633 + $0x28] sm:$0xf]
      %v645 = vld [vmem:[%s633 + $0x2c] sm:$0xf]
      %v646 = vld [vmem:[%s633 + $0x30] sm:$0xf]
      %v647 = vld [vmem:[%s633 + $0x34] sm:$0xf]
      %v648 = vld [vmem:[%s633 + $0x38] sm:$0xf]
      %v649 = vld [vmem:[%s633 + $0x3c] sm:$0xf]
      %v650 = vunpack.c.l.b16 %v604
      %v651 = vunpack.c.l.b16 %v608
      %v652 = vunpack.c.l.b16 %v612
      %v653 = vunpack.c.l.b16 %v616
      %v654 = vunpack.c.l.b16 %v620
      %v655 = vunpack.c.l.b16 %v624
      %v656 = vunpack.c.l.b16 %v628
      %v657 = vunpack.c.l.b16 %v632
      %v658 = vpack.c.b16 %v651, %v650
      %v659 = vpack.c.b16 %v653, %v652
      %v660 = vpack.c.b16 %v655, %v654
      %v661 = vpack.c.b16 %v657, %v656
      %v682 = vunpack.c.l.b16 %v634
      %v683 = vunpack.c.l.b16 %v635
      %v684 = vunpack.c.l.b16 %v636
      %v685 = vunpack.c.l.b16 %v637
      %v686 = vunpack.c.l.b16 %v638
      %v687 = vunpack.c.l.b16 %v639
      %v688 = vunpack.c.l.b16 %v640
      %v689 = vunpack.c.l.b16 %v641
      %v690 = vunpack.c.l.b16 %v642
      %v691 = vunpack.c.l.b16 %v643
      %v692 = vunpack.c.l.b16 %v644
      %v693 = vunpack.c.l.b16 %v645
      %v694 = vunpack.c.l.b16 %v646
      %v695 = vunpack.c.l.b16 %v647
      %v696 = vunpack.c.l.b16 %v648
      %v697 = vunpack.c.l.b16 %v649
      %v698 = vpack.c.b16 %v683, %v682
      %v699 = vpack.c.b16 %v685, %v684
      %v700 = vpack.c.b16 %v687, %v686
      %v701 = vpack.c.b16 %v689, %v688
      %v702 = vpack.c.b16 %v691, %v690
      %v703 = vpack.c.b16 %v693, %v692
      %v704 = vpack.c.b16 %v695, %v694
      %v705 = vpack.c.b16 %v697, %v696
      %714 = vmatpush.bf16.msra.mxu0 %v705
      %715 = vmatpush.bf16.msra.mxu0 %v704
      %716 = vmatpush.bf16.msra.mxu0 %v703
      %717 = vmatpush.bf16.msra.mxu0 %v702
      %718 = vmatpush.bf16.msra.mxu0 %v701
      %719 = vmatpush.bf16.msra.mxu0 %v700
      %720 = vmatpush.bf16.msra.mxu0 %v699
      %721 = vmatpush.bf16.msra.mxu0 %v698
      %722 = vmatmul.bf16.gmra.mxu0 %v658
      %v723 = vpop.f32.mrf.mxu0
      %v724 = vadd.f32 0.0, %v723
      %v725 = vpop.f32.mrf.mxu0
      %v726 = vadd.f32 0.0, %v725
      %727 = vmatmul.bf16.gmra.mxu0 %v659
      %v728 = vpop.f32.mrf.mxu0
      %v729 = vadd.f32 0.0, %v728
      %v730 = vpop.f32.mrf.mxu0
      %v731 = vadd.f32 0.0, %v730
      %732 = vmatmul.bf16.gmra.mxu0 %v660
      %v733 = vpop.f32.mrf.mxu0
      %v734 = vadd.f32 0.0, %v733
      %v735 = vpop.f32.mrf.mxu0
      %v736 = vadd.f32 0.0, %v735
      %737 = vmatmul.bf16.gmra.mxu0 %v661
      %v738 = vpop.f32.mrf.mxu0
      %v739 = vadd.f32 0.0, %v738
      %v740 = vpop.f32.mrf.mxu0
      %v741 = vadd.f32 0.0, %v740
      %742 = vdwg.mxu0
      %v743 = vadd.f32 %v555, %v724
      %v744 = vadd.f32 %v557, %v726
      %v745 = vadd.f32 %v560, %v729
      %v746 = vadd.f32 %v562, %v731
      %v747 = vadd.f32 %v565, %v734
      %v748 = vadd.f32 %v567, %v736
      %v749 = vadd.f32 %v570, %v739
      %v750 = vadd.f32 %v572, %v741
      %s751 = scalar_lea.vmem %s203, 8
      %v752 = vld [vmem:[%s751] sm:$0xf]
      %v753 = vld [vmem:[%s751 + $0x8] sm:$0xf]
      %v754 = vld [vmem:[%s751 + $0x10] sm:$0xf]
      %v755 = vld [vmem:[%s751 + $0x18] sm:$0xf]
      %v756 = vld [vmem:[%s751 + $0x20] sm:$0xf]
      %v757 = vld [vmem:[%s751 + $0x28] sm:$0xf]
      %v758 = vld [vmem:[%s751 + $0x30] sm:$0xf]
      %v759 = vld [vmem:[%s751 + $0x38] sm:$0xf]
      %s760 = scalar_lea.vmem %s1, 192
      %v761 = vld [vmem:[%s760] sm:$0xf]
      %v762 = vld [vmem:[%s760 + $0x4] sm:$0xf]
      %v763 = vld [vmem:[%s760 + $0x8] sm:$0xf]
      %v764 = vld [vmem:[%s760 + $0xc] sm:$0xf]
      %v765 = vld [vmem:[%s760 + $0x10] sm:$0xf]
      %v766 = vld [vmem:[%s760 + $0x14] sm:$0xf]
      %v767 = vld [vmem:[%s760 + $0x18] sm:$0xf]
      %v768 = vld [vmem:[%s760 + $0x1c] sm:$0xf]
      %v769 = vld [vmem:[%s760 + $0x20] sm:$0xf]
      %v770 = vld [vmem:[%s760 + $0x24] sm:$0xf]
      %v771 = vld [vmem:[%s760 + $0x28] sm:$0xf]
      %v772 = vld [vmem:[%s760 + $0x2c] sm:$0xf]
      %v773 = vld [vmem:[%s760 + $0x30] sm:$0xf]
      %v774 = vld [vmem:[%s760 + $0x34] sm:$0xf]
      %v775 = vld [vmem:[%s760 + $0x38] sm:$0xf]
      %v776 = vld [vmem:[%s760 + $0x3c] sm:$0xf]
      %v785 = vunpack.c.l.b16 %v752
      %v786 = vunpack.c.l.b16 %v753
      %v787 = vunpack.c.l.b16 %v754
      %v788 = vunpack.c.l.b16 %v755
      %v789 = vunpack.c.l.b16 %v756
      %v790 = vunpack.c.l.b16 %v757
      %v791 = vunpack.c.l.b16 %v758
      %v792 = vunpack.c.l.b16 %v759
      %v793 = vpack.c.b16 %v786, %v785
      %v794 = vpack.c.b16 %v788, %v787
      %v795 = vpack.c.b16 %v790, %v789
      %v796 = vpack.c.b16 %v792, %v791
      %v817 = vunpack.c.l.b16 %v761
      %v818 = vunpack.c.l.b16 %v762
      %v819 = vunpack.c.l.b16 %v763
      %v820 = vunpack.c.l.b16 %v764
      %v821 = vunpack.c.l.b16 %v765
      %v822 = vunpack.c.l.b16 %v766
      %v823 = vunpack.c.l.b16 %v767
      %v824 = vunpack.c.l.b16 %v768
      %v825 = vunpack.c.l.b16 %v769
      %v826 = vunpack.c.l.b16 %v770
      %v827 = vunpack.c.l.b16 %v771
      %v828 = vunpack.c.l.b16 %v772
      %v829 = vunpack.c.l.b16 %v773
      %v830 = vunpack.c.l.b16 %v774
      %v831 = vunpack.c.l.b16 %v775
      %v832 = vunpack.c.l.b16 %v776
      %v833 = vpack.c.b16 %v818, %v817
      %v834 = vpack.c.b16 %v820, %v819
      %v835 = vpack.c.b16 %v822, %v821
      %v836 = vpack.c.b16 %v824, %v823
      %v837 = vpack.c.b16 %v826, %v825
      %v838 = vpack.c.b16 %v828, %v827
      %v839 = vpack.c.b16 %v830, %v829
      %v840 = vpack.c.b16 %v832, %v831
      %849 = vmatpush.bf16.msra.mxu0 %v840
      %850 = vmatpush.bf16.msra.mxu0 %v839
      %851 = vmatpush.bf16.msra.mxu0 %v838
      %852 = vmatpush.bf16.msra.mxu0 %v837
      %853 = vmatpush.bf16.msra.mxu0 %v836
      %854 = vmatpush.bf16.msra.mxu0 %v835
      %855 = vmatpush.bf16.msra.mxu0 %v834
      %856 = vmatpush.bf16.msra.mxu0 %v833
      %857 = vmatmul.bf16.gmra.mxu0 %v793
      %v858 = vpop.f32.mrf.mxu0
      %v859 = vadd.f32 0.0, %v858
      %v860 = vpop.f32.mrf.mxu0
      %v861 = vadd.f32 0.0, %v860
      %862 = vmatmul.bf16.gmra.mxu0 %v794
      %v863 = vpop.f32.mrf.mxu0
      %v864 = vadd.f32 0.0, %v863
      %v865 = vpop.f32.mrf.mxu0
      %v866 = vadd.f32 0.0, %v865
      %867 = vmatmul.bf16.gmra.mxu0 %v795
      %v868 = vpop.f32.mrf.mxu0
      %v869 = vadd.f32 0.0, %v868
      %v870 = vpop.f32.mrf.mxu0
      %v871 = vadd.f32 0.0, %v870
      %872 = vmatmul.bf16.gmra.mxu0 %v796
      %v873 = vpop.f32.mrf.mxu0
      %v874 = vadd.f32 0.0, %v873
      %v875 = vpop.f32.mrf.mxu0
      %v876 = vadd.f32 0.0, %v875
      %877 = vdwg.mxu0
      %v878 = vadd.f32 %v743, %v859
      %v879 = vadd.f32 %v744, %v861
      %v880 = vadd.f32 %v745, %v864
      %v881 = vadd.f32 %v746, %v866
      %v882 = vadd.f32 %v747, %v869
      %v883 = vadd.f32 %v748, %v871
      %v884 = vadd.f32 %v749, %v874
      %v885 = vadd.f32 %v750, %v876
      %v886 = vld [vmem:[%s751] sm:$0xf]
      %v887 = vld [vmem:[%s751 + $0x4] sm:$0x1]
      %v888 = vld [vmem:[%s751 + $0x8] sm:$0xf]
      %v889 = vld [vmem:[%s751 + $0xc] sm:$0x1]
      %v890 = vld [vmem:[%s751 + $0x10] sm:$0xf]
      %v891 = vld [vmem:[%s751 + $0x14] sm:$0x1]
      %v892 = vld [vmem:[%s751 + $0x18] sm:$0xf]
      %v893 = vld [vmem:[%s751 + $0x1c] sm:$0x1]
      %v894 = vld [vmem:[%s751 + $0x20] sm:$0xf]
      %v895 = vld [vmem:[%s751 + $0x24] sm:$0x1]
      %v896 = vld [vmem:[%s751 + $0x28] sm:$0xf]
      %v897 = vld [vmem:[%s751 + $0x2c] sm:$0x1]
      %v898 = vld [vmem:[%s751 + $0x30] sm:$0xf]
      %v899 = vld [vmem:[%s751 + $0x34] sm:$0x1]
      %v900 = vld [vmem:[%s751 + $0x38] sm:$0xf]
      %v901 = vld [vmem:[%s751 + $0x3c] sm:$0x1]
      %v903 = vshrl.u32 %v886, 16
      %v905 = vrot.slane %v903, 4
      %v906 = vshll.u32 %v886, 16
      %v908 = vrot.slane %v906, 5
      %v909 = vor.u32 %v905, %v908
      %v910 = vrot.slane %v909, 4
      %v912 = vshll.u32 %v887, 16
      %v914 = vrot.slane %v912, 5
      %v915 = vsel %vm250, %v910, %v914
      %v917 = vshrl.u32 %v888, 16
      %v919 = vrot.slane %v917, 4
      %v920 = vshll.u32 %v888, 16
      %v922 = vrot.slane %v920, 5
      %v923 = vor.u32 %v919, %v922
      %v924 = vrot.slane %v923, 4
      %v926 = vshll.u32 %v889, 16
      %v928 = vrot.slane %v926, 5
      %v929 = vsel %vm250, %v924, %v928
      %v931 = vshrl.u32 %v890, 16
      %v933 = vrot.slane %v931, 4
      %v934 = vshll.u32 %v890, 16
      %v936 = vrot.slane %v934, 5
      %v937 = vor.u32 %v933, %v936
      %v938 = vrot.slane %v937, 4
      %v940 = vshll.u32 %v891, 16
      %v942 = vrot.slane %v940, 5
      %v943 = vsel %vm250, %v938, %v942
      %v945 = vshrl.u32 %v892, 16
      %v947 = vrot.slane %v945, 4
      %v948 = vshll.u32 %v892, 16
      %v950 = vrot.slane %v948, 5
      %v951 = vor.u32 %v947, %v950
      %v952 = vrot.slane %v951, 4
      %v954 = vshll.u32 %v893, 16
      %v956 = vrot.slane %v954, 5
      %v957 = vsel %vm250, %v952, %v956
      %v959 = vshrl.u32 %v894, 16
      %v961 = vrot.slane %v959, 4
      %v962 = vshll.u32 %v894, 16
      %v964 = vrot.slane %v962, 5
      %v965 = vor.u32 %v961, %v964
      %v966 = vrot.slane %v965, 4
      %v968 = vshll.u32 %v895, 16
      %v970 = vrot.slane %v968, 5
      %v971 = vsel %vm250, %v966, %v970
      %v973 = vshrl.u32 %v896, 16
      %v975 = vrot.slane %v973, 4
      %v976 = vshll.u32 %v896, 16
      %v978 = vrot.slane %v976, 5
      %v979 = vor.u32 %v975, %v978
      %v980 = vrot.slane %v979, 4
      %v982 = vshll.u32 %v897, 16
      %v984 = vrot.slane %v982, 5
      %v985 = vsel %vm250, %v980, %v984
      %v987 = vshrl.u32 %v898, 16
      %v989 = vrot.slane %v987, 4
      %v990 = vshll.u32 %v898, 16
      %v992 = vrot.slane %v990, 5
      %v993 = vor.u32 %v989, %v992
      %v994 = vrot.slane %v993, 4
      %v996 = vshll.u32 %v899, 16
      %v998 = vrot.slane %v996, 5
      %v999 = vsel %vm250, %v994, %v998
      %v1001 = vshrl.u32 %v900, 16
      %v1003 = vrot.slane %v1001, 4
      %v1004 = vshll.u32 %v900, 16
      %v1006 = vrot.slane %v1004, 5
      %v1007 = vor.u32 %v1003, %v1006
      %v1008 = vrot.slane %v1007, 4
      %v1010 = vshll.u32 %v901, 16
      %v1012 = vrot.slane %v1010, 5
      %v1013 = vsel %vm250, %v1008, %v1012
      %s1014 = scalar_lea.vmem %s1, 256
      %v1015 = vld [vmem:[%s1014] sm:$0xf]
      %v1016 = vld [vmem:[%s1014 + $0x4] sm:$0xf]
      %v1017 = vld [vmem:[%s1014 + $0x8] sm:$0xf]
      %v1018 = vld [vmem:[%s1014 + $0xc] sm:$0xf]
      %v1019 = vld [vmem:[%s1014 + $0x10] sm:$0xf]
      %v1020 = vld [vmem:[%s1014 + $0x14] sm:$0xf]
      %v1021 = vld [vmem:[%s1014 + $0x18] sm:$0xf]
      %v1022 = vld [vmem:[%s1014 + $0x1c] sm:$0xf]
      %v1023 = vld [vmem:[%s1014 + $0x20] sm:$0xf]
      %v1024 = vld [vmem:[%s1014 + $0x24] sm:$0xf]
      %v1025 = vld [vmem:[%s1014 + $0x28] sm:$0xf]
      %v1026 = vld [vmem:[%s1014 + $0x2c] sm:$0xf]
      %v1027 = vld [vmem:[%s1014 + $0x30] sm:$0xf]
      %v1028 = vld [vmem:[%s1014 + $0x34] sm:$0xf]
      %v1029 = vld [vmem:[%s1014 + $0x38] sm:$0xf]
      %v1030 = vld [vmem:[%s1014 + $0x3c] sm:$0xf]
      %v1031 = vunpack.c.l.b16 %v915
      %v1032 = vunpack.c.l.b16 %v929
      %v1033 = vunpack.c.l.b16 %v943
      %v1034 = vunpack.c.l.b16 %v957
      %v1035 = vunpack.c.l.b16 %v971
      %v1036 = vunpack.c.l.b16 %v985
      %v1037 = vunpack.c.l.b16 %v999
      %v1038 = vunpack.c.l.b16 %v1013
      %v1039 = vpack.c.b16 %v1032, %v1031
      %v1040 = vpack.c.b16 %v1034, %v1033
      %v1041 = vpack.c.b16 %v1036, %v1035
      %v1042 = vpack.c.b16 %v1038, %v1037
      %v1063 = vunpack.c.l.b16 %v1015
      %v1064 = vunpack.c.l.b16 %v1016
      %v1065 = vunpack.c.l.b16 %v1017
      %v1066 = vunpack.c.l.b16 %v1018
      %v1067 = vunpack.c.l.b16 %v1019
      %v1068 = vunpack.c.l.b16 %v1020
      %v1069 = vunpack.c.l.b16 %v1021
      %v1070 = vunpack.c.l.b16 %v1022
      %v1071 = vunpack.c.l.b16 %v1023
      %v1072 = vunpack.c.l.b16 %v1024
      %v1073 = vunpack.c.l.b16 %v1025
      %v1074 = vunpack.c.l.b16 %v1026
      %v1075 = vunpack.c.l.b16 %v1027
      %v1076 = vunpack.c.l.b16 %v1028
      %v1077 = vunpack.c.l.b16 %v1029
      %v1078 = vunpack.c.l.b16 %v1030
      %v1079 = vpack.c.b16 %v1064, %v1063
      %v1080 = vpack.c.b16 %v1066, %v1065
      %v1081 = vpack.c.b16 %v1068, %v1067
      %v1082 = vpack.c.b16 %v1070, %v1069
      %v1083 = vpack.c.b16 %v1072, %v1071
      %v1084 = vpack.c.b16 %v1074, %v1073
      %v1085 = vpack.c.b16 %v1076, %v1075
      %v1086 = vpack.c.b16 %v1078, %v1077
      %1095 = vmatpush.bf16.msra.mxu0 %v1086
      %1096 = vmatpush.bf16.msra.mxu0 %v1085
      %1097 = vmatpush.bf16.msra.mxu0 %v1084
      %1098 = vmatpush.bf16.msra.mxu0 %v1083
      %1099 = vmatpush.bf16.msra.mxu0 %v1082
      %1100 = vmatpush.bf16.msra.mxu0 %v1081
      %1101 = vmatpush.bf16.msra.mxu0 %v1080
      %1102 = vmatpush.bf16.msra.mxu0 %v1079
      %1103 = vmatmul.bf16.gmra.mxu0 %v1039
      %v1104 = vpop.f32.mrf.mxu0
      %v1105 = vadd.f32 0.0, %v1104
      %v1106 = vpop.f32.mrf.mxu0
      %v1107 = vadd.f32 0.0, %v1106
      %1108 = vmatmul.bf16.gmra.mxu0 %v1040
      %v1109 = vpop.f32.mrf.mxu0
      %v1110 = vadd.f32 0.0, %v1109
      %v1111 = vpop.f32.mrf.mxu0
      %v1112 = vadd.f32 0.0, %v1111
      %1113 = vmatmul.bf16.gmra.mxu0 %v1041
      %v1114 = vpop.f32.mrf.mxu0
      %v1115 = vadd.f32 0.0, %v1114
      %v1116 = vpop.f32.mrf.mxu0
      %v1117 = vadd.f32 0.0, %v1116
      %1118 = vmatmul.bf16.gmra.mxu0 %v1042
      %v1119 = vpop.f32.mrf.mxu0
      %v1120 = vadd.f32 0.0, %v1119
      %v1121 = vpop.f32.mrf.mxu0
      %v1122 = vadd.f32 0.0, %v1121
      %1123 = vdwg.mxu0
      %v1124 = vadd.f32 %v878, %v1105
      %v1125 = vadd.f32 %v879, %v1107
      %v1126 = vadd.f32 %v880, %v1110
      %v1127 = vadd.f32 %v881, %v1112
      %v1128 = vadd.f32 %v882, %v1115
      %v1129 = vadd.f32 %v883, %v1117
      %v1130 = vadd.f32 %v884, %v1120
      %v1131 = vadd.f32 %v885, %v1122
      %v1132 = vld [vmem:[%s751] sm:$0xe]
      %v1133 = vld [vmem:[%s751 + $0x8] sm:$0xe]
      %v1134 = vld [vmem:[%s751 + $0x10] sm:$0xe]
      %v1135 = vld [vmem:[%s751 + $0x18] sm:$0xe]
      %v1136 = vld [vmem:[%s751 + $0x20] sm:$0xe]
      %v1137 = vld [vmem:[%s751 + $0x28] sm:$0xe]
      %v1138 = vld [vmem:[%s751 + $0x30] sm:$0xe]
      %v1139 = vld [vmem:[%s751 + $0x38] sm:$0xe]
      %v1156 = vrot.slane %v1132, 5
      %v1157 = vrot.slane %v1156, 4
      %v1158 = vrot.slane %v887, 5
      %v1159 = vsel %vm600, %v1157, %v1158
      %v1160 = vrot.slane %v1133, 5
      %v1161 = vrot.slane %v1160, 4
      %v1162 = vrot.slane %v889, 5
      %v1163 = vsel %vm600, %v1161, %v1162
      %v1164 = vrot.slane %v1134, 5
      %v1165 = vrot.slane %v1164, 4
      %v1166 = vrot.slane %v891, 5
      %v1167 = vsel %vm600, %v1165, %v1166
      %v1168 = vrot.slane %v1135, 5
      %v1169 = vrot.slane %v1168, 4
      %v1170 = vrot.slane %v893, 5
      %v1171 = vsel %vm600, %v1169, %v1170
      %v1172 = vrot.slane %v1136, 5
      %v1173 = vrot.slane %v1172, 4
      %v1174 = vrot.slane %v895, 5
      %v1175 = vsel %vm600, %v1173, %v1174
      %v1176 = vrot.slane %v1137, 5
      %v1177 = vrot.slane %v1176, 4
      %v1178 = vrot.slane %v897, 5
      %v1179 = vsel %vm600, %v1177, %v1178
      %v1180 = vrot.slane %v1138, 5
      %v1181 = vrot.slane %v1180, 4
      %v1182 = vrot.slane %v899, 5
      %v1183 = vsel %vm600, %v1181, %v1182
      %v1184 = vrot.slane %v1139, 5
      %v1185 = vrot.slane %v1184, 4
      %v1186 = vrot.slane %v901, 5
      %v1187 = vsel %vm600, %v1185, %v1186
      %s1188 = scalar_lea.vmem %s1, 320
      %v1189 = vld [vmem:[%s1188] sm:$0xf]
      %v1190 = vld [vmem:[%s1188 + $0x4] sm:$0xf]
      %v1191 = vld [vmem:[%s1188 + $0x8] sm:$0xf]
      %v1192 = vld [vmem:[%s1188 + $0xc] sm:$0xf]
      %v1193 = vld [vmem:[%s1188 + $0x10] sm:$0xf]
      %v1194 = vld [vmem:[%s1188 + $0x14] sm:$0xf]
      %v1195 = vld [vmem:[%s1188 + $0x18] sm:$0xf]
      %v1196 = vld [vmem:[%s1188 + $0x1c] sm:$0xf]
      %v1197 = vld [vmem:[%s1188 + $0x20] sm:$0xf]
      %v1198 = vld [vmem:[%s1188 + $0x24] sm:$0xf]
      %v1199 = vld [vmem:[%s1188 + $0x28] sm:$0xf]
      %v1200 = vld [vmem:[%s1188 + $0x2c] sm:$0xf]
      %v1201 = vld [vmem:[%s1188 + $0x30] sm:$0xf]
      %v1202 = vld [vmem:[%s1188 + $0x34] sm:$0xf]
      %v1203 = vld [vmem:[%s1188 + $0x38] sm:$0xf]
      %v1204 = vld [vmem:[%s1188 + $0x3c] sm:$0xf]
      %v1205 = vunpack.c.l.b16 %v1159
      %v1206 = vunpack.c.l.b16 %v1163
      %v1207 = vunpack.c.l.b16 %v1167
      %v1208 = vunpack.c.l.b16 %v1171
      %v1209 = vunpack.c.l.b16 %v1175
      %v1210 = vunpack.c.l.b16 %v1179
      %v1211 = vunpack.c.l.b16 %v1183
      %v1212 = vunpack.c.l.b16 %v1187
      %v1213 = vpack.c.b16 %v1206, %v1205
      %v1214 = vpack.c.b16 %v1208, %v1207
      %v1215 = vpack.c.b16 %v1210, %v1209
      %v1216 = vpack.c.b16 %v1212, %v1211
      %v1237 = vunpack.c.l.b16 %v1189
      %v1238 = vunpack.c.l.b16 %v1190
      %v1239 = vunpack.c.l.b16 %v1191
      %v1240 = vunpack.c.l.b16 %v1192
      %v1241 = vunpack.c.l.b16 %v1193
      %v1242 = vunpack.c.l.b16 %v1194
      %v1243 = vunpack.c.l.b16 %v1195
      %v1244 = vunpack.c.l.b16 %v1196
      %v1245 = vunpack.c.l.b16 %v1197
      %v1246 = vunpack.c.l.b16 %v1198
      %v1247 = vunpack.c.l.b16 %v1199
      %v1248 = vunpack.c.l.b16 %v1200
      %v1249 = vunpack.c.l.b16 %v1201
      %v1250 = vunpack.c.l.b16 %v1202
      %v1251 = vunpack.c.l.b16 %v1203
      %v1252 = vunpack.c.l.b16 %v1204
      %v1253 = vpack.c.b16 %v1238, %v1237
      %v1254 = vpack.c.b16 %v1240, %v1239
      %v1255 = vpack.c.b16 %v1242, %v1241
      %v1256 = vpack.c.b16 %v1244, %v1243
      %v1257 = vpack.c.b16 %v1246, %v1245
      %v1258 = vpack.c.b16 %v1248, %v1247
      %v1259 = vpack.c.b16 %v1250, %v1249
      %v1260 = vpack.c.b16 %v1252, %v1251
      %1269 = vmatpush.bf16.msra.mxu0 %v1260
      %1270 = vmatpush.bf16.msra.mxu0 %v1259
      %1271 = vmatpush.bf16.msra.mxu0 %v1258
      %1272 = vmatpush.bf16.msra.mxu0 %v1257
      %1273 = vmatpush.bf16.msra.mxu0 %v1256
      %1274 = vmatpush.bf16.msra.mxu0 %v1255
      %1275 = vmatpush.bf16.msra.mxu0 %v1254
      %1276 = vmatpush.bf16.msra.mxu0 %v1253
      %1277 = vmatmul.bf16.gmra.mxu0 %v1213
      %v1278 = vpop.f32.mrf.mxu0
      %v1279 = vadd.f32 0.0, %v1278
      %v1280 = vpop.f32.mrf.mxu0
      %v1281 = vadd.f32 0.0, %v1280
      %1282 = vmatmul.bf16.gmra.mxu0 %v1214
      %v1283 = vpop.f32.mrf.mxu0
      %v1284 = vadd.f32 0.0, %v1283
      %v1285 = vpop.f32.mrf.mxu0
      %v1286 = vadd.f32 0.0, %v1285
      %1287 = vmatmul.bf16.gmra.mxu0 %v1215
      %v1288 = vpop.f32.mrf.mxu0
      %v1289 = vadd.f32 0.0, %v1288
      %v1290 = vpop.f32.mrf.mxu0
      %v1291 = vadd.f32 0.0, %v1290
      %1292 = vmatmul.bf16.gmra.mxu0 %v1216
      %v1293 = vpop.f32.mrf.mxu0
      %v1294 = vadd.f32 0.0, %v1293
      %v1295 = vpop.f32.mrf.mxu0
      %v1296 = vadd.f32 0.0, %v1295
      %1297 = vdwg.mxu0
      %v1298 = vadd.f32 %v1124, %v1279
      %v1299 = vadd.f32 %v1125, %v1281
      %v1300 = vadd.f32 %v1126, %v1284
      %v1301 = vadd.f32 %v1127, %v1286
      %v1302 = vadd.f32 %v1128, %v1289
      %v1303 = vadd.f32 %v1129, %v1291
      %v1304 = vadd.f32 %v1130, %v1294
      %v1305 = vadd.f32 %v1131, %v1296
      %s1306 = scalar_lea.vmem %s203, 16
      %v1307 = vld [vmem:[%s1306] sm:$0xf]
      %v1308 = vld [vmem:[%s1306 + $0x8] sm:$0xf]
      %v1309 = vld [vmem:[%s1306 + $0x10] sm:$0xf]
      %v1310 = vld [vmem:[%s1306 + $0x18] sm:$0xf]
      %v1311 = vld [vmem:[%s1306 + $0x20] sm:$0xf]
      %v1312 = vld [vmem:[%s1306 + $0x28] sm:$0xf]
      %v1313 = vld [vmem:[%s1306 + $0x30] sm:$0xf]
      %v1314 = vld [vmem:[%s1306 + $0x38] sm:$0xf]
      %s1315 = scalar_lea.vmem %s1, 384
      %v1316 = vld [vmem:[%s1315] sm:$0xf]
      %v1317 = vld [vmem:[%s1315 + $0x4] sm:$0xf]
      %v1318 = vld [vmem:[%s1315 + $0x8] sm:$0xf]
      %v1319 = vld [vmem:[%s1315 + $0xc] sm:$0xf]
      %v1320 = vld [vmem:[%s1315 + $0x10] sm:$0xf]
      %v1321 = vld [vmem:[%s1315 + $0x14] sm:$0xf]
      %v1322 = vld [vmem:[%s1315 + $0x18] sm:$0xf]
      %v1323 = vld [vmem:[%s1315 + $0x1c] sm:$0xf]
      %v1324 = vld [vmem:[%s1315 + $0x20] sm:$0xf]
      %v1325 = vld [vmem:[%s1315 + $0x24] sm:$0xf]
      %v1326 = vld [vmem:[%s1315 + $0x28] sm:$0xf]
      %v1327 = vld [vmem:[%s1315 + $0x2c] sm:$0xf]
      %v1328 = vld [vmem:[%s1315 + $0x30] sm:$0xf]
      %v1329 = vld [vmem:[%s1315 + $0x34] sm:$0xf]
      %v1330 = vld [vmem:[%s1315 + $0x38] sm:$0xf]
      %v1331 = vld [vmem:[%s1315 + $0x3c] sm:$0xf]
      %v1340 = vunpack.c.l.b16 %v1307
      %v1341 = vunpack.c.l.b16 %v1308
      %v1342 = vunpack.c.l.b16 %v1309
      %v1343 = vunpack.c.l.b16 %v1310
      %v1344 = vunpack.c.l.b16 %v1311
      %v1345 = vunpack.c.l.b16 %v1312
      %v1346 = vunpack.c.l.b16 %v1313
      %v1347 = vunpack.c.l.b16 %v1314
      %v1348 = vpack.c.b16 %v1341, %v1340
      %v1349 = vpack.c.b16 %v1343, %v1342
      %v1350 = vpack.c.b16 %v1345, %v1344
      %v1351 = vpack.c.b16 %v1347, %v1346
      %v1372 = vunpack.c.l.b16 %v1316
      %v1373 = vunpack.c.l.b16 %v1317
      %v1374 = vunpack.c.l.b16 %v1318
      %v1375 = vunpack.c.l.b16 %v1319
      %v1376 = vunpack.c.l.b16 %v1320
      %v1377 = vunpack.c.l.b16 %v1321
      %v1378 = vunpack.c.l.b16 %v1322
      %v1379 = vunpack.c.l.b16 %v1323
      %v1380 = vunpack.c.l.b16 %v1324
      %v1381 = vunpack.c.l.b16 %v1325
      %v1382 = vunpack.c.l.b16 %v1326
      %v1383 = vunpack.c.l.b16 %v1327
      %v1384 = vunpack.c.l.b16 %v1328
      %v1385 = vunpack.c.l.b16 %v1329
      %v1386 = vunpack.c.l.b16 %v1330
      %v1387 = vunpack.c.l.b16 %v1331
      %v1388 = vpack.c.b16 %v1373, %v1372
      %v1389 = vpack.c.b16 %v1375, %v1374
      %v1390 = vpack.c.b16 %v1377, %v1376
      %v1391 = vpack.c.b16 %v1379, %v1378
      %v1392 = vpack.c.b16 %v1381, %v1380
      %v1393 = vpack.c.b16 %v1383, %v1382
      %v1394 = vpack.c.b16 %v1385, %v1384
      %v1395 = vpack.c.b16 %v1387, %v1386
      %1404 = vmatpush.bf16.msra.mxu0 %v1395
      %1405 = vmatpush.bf16.msra.mxu0 %v1394
      %1406 = vmatpush.bf16.msra.mxu0 %v1393
      %1407 = vmatpush.bf16.msra.mxu0 %v1392
      %1408 = vmatpush.bf16.msra.mxu0 %v1391
      %1409 = vmatpush.bf16.msra.mxu0 %v1390
      %1410 = vmatpush.bf16.msra.mxu0 %v1389
      %1411 = vmatpush.bf16.msra.mxu0 %v1388
      %1412 = vmatmul.bf16.gmra.mxu0 %v1348
      %v1413 = vpop.f32.mrf.mxu0
      %v1414 = vadd.f32 0.0, %v1413
      %v1415 = vpop.f32.mrf.mxu0
      %v1416 = vadd.f32 0.0, %v1415
      %1417 = vmatmul.bf16.gmra.mxu0 %v1349
      %v1418 = vpop.f32.mrf.mxu0
      %v1419 = vadd.f32 0.0, %v1418
      %v1420 = vpop.f32.mrf.mxu0
      %v1421 = vadd.f32 0.0, %v1420
      %1422 = vmatmul.bf16.gmra.mxu0 %v1350
      %v1423 = vpop.f32.mrf.mxu0
      %v1424 = vadd.f32 0.0, %v1423
      %v1425 = vpop.f32.mrf.mxu0
      %v1426 = vadd.f32 0.0, %v1425
      %1427 = vmatmul.bf16.gmra.mxu0 %v1351
      %v1428 = vpop.f32.mrf.mxu0
      %v1429 = vadd.f32 0.0, %v1428
      %v1430 = vpop.f32.mrf.mxu0
      %v1431 = vadd.f32 0.0, %v1430
      %1432 = vdwg.mxu0
      %v1433 = vadd.f32 %v1298, %v1414
      %v1434 = vadd.f32 %v1299, %v1416
      %v1435 = vadd.f32 %v1300, %v1419
      %v1436 = vadd.f32 %v1301, %v1421
      %v1437 = vadd.f32 %v1302, %v1424
      %v1438 = vadd.f32 %v1303, %v1426
      %v1439 = vadd.f32 %v1304, %v1429
      %v1440 = vadd.f32 %v1305, %v1431
      %v1441 = vld [vmem:[%s1306] sm:$0xf]
      %v1442 = vld [vmem:[%s1306 + $0x4] sm:$0x1]
      %v1443 = vld [vmem:[%s1306 + $0x8] sm:$0xf]
      %v1444 = vld [vmem:[%s1306 + $0xc] sm:$0x1]
      %v1445 = vld [vmem:[%s1306 + $0x10] sm:$0xf]
      %v1446 = vld [vmem:[%s1306 + $0x14] sm:$0x1]
      %v1447 = vld [vmem:[%s1306 + $0x18] sm:$0xf]
      %v1448 = vld [vmem:[%s1306 + $0x1c] sm:$0x1]
      %v1449 = vld [vmem:[%s1306 + $0x20] sm:$0xf]
      %v1450 = vld [vmem:[%s1306 + $0x24] sm:$0x1]
      %v1451 = vld [vmem:[%s1306 + $0x28] sm:$0xf]
      %v1452 = vld [vmem:[%s1306 + $0x2c] sm:$0x1]
      %v1453 = vld [vmem:[%s1306 + $0x30] sm:$0xf]
      %v1454 = vld [vmem:[%s1306 + $0x34] sm:$0x1]
      %v1455 = vld [vmem:[%s1306 + $0x38] sm:$0xf]
      %v1456 = vld [vmem:[%s1306 + $0x3c] sm:$0x1]
      %v1458 = vshrl.u32 %v1441, 16
      %v1460 = vrot.slane %v1458, 4
      %v1461 = vshll.u32 %v1441, 16
      %v1463 = vrot.slane %v1461, 5
      %v1464 = vor.u32 %v1460, %v1463
      %v1465 = vrot.slane %v1464, 4
      %v1467 = vshll.u32 %v1442, 16
      %v1469 = vrot.slane %v1467, 5
      %v1470 = vsel %vm250, %v1465, %v1469
      %v1472 = vshrl.u32 %v1443, 16
      %v1474 = vrot.slane %v1472, 4
      %v1475 = vshll.u32 %v1443, 16
      %v1477 = vrot.slane %v1475, 5
      %v1478 = vor.u32 %v1474, %v1477
      %v1479 = vrot.slane %v1478, 4
      %v1481 = vshll.u32 %v1444, 16
      %v1483 = vrot.slane %v1481, 5
      %v1484 = vsel %vm250, %v1479, %v1483
      %v1486 = vshrl.u32 %v1445, 16
      %v1488 = vrot.slane %v1486, 4
      %v1489 = vshll.u32 %v1445, 16
      %v1491 = vrot.slane %v1489, 5
      %v1492 = vor.u32 %v1488, %v1491
      %v1493 = vrot.slane %v1492, 4
      %v1495 = vshll.u32 %v1446, 16
      %v1497 = vrot.slane %v1495, 5
      %v1498 = vsel %vm250, %v1493, %v1497
      %v1500 = vshrl.u32 %v1447, 16
      %v1502 = vrot.slane %v1500, 4
      %v1503 = vshll.u32 %v1447, 16
      %v1505 = vrot.slane %v1503, 5
      %v1506 = vor.u32 %v1502, %v1505
      %v1507 = vrot.slane %v1506, 4
      %v1509 = vshll.u32 %v1448, 16
      %v1511 = vrot.slane %v1509, 5
      %v1512 = vsel %vm250, %v1507, %v1511
      %v1514 = vshrl.u32 %v1449, 16
      %v1516 = vrot.slane %v1514, 4
      %v1517 = vshll.u32 %v1449, 16
      %v1519 = vrot.slane %v1517, 5
      %v1520 = vor.u32 %v1516, %v1519
      %v1521 = vrot.slane %v1520, 4
      %v1523 = vshll.u32 %v1450, 16
      %v1525 = vrot.slane %v1523, 5
      %v1526 = vsel %vm250, %v1521, %v1525
      %v1528 = vshrl.u32 %v1451, 16
      %v1530 = vrot.slane %v1528, 4
      %v1531 = vshll.u32 %v1451, 16
      %v1533 = vrot.slane %v1531, 5
      %v1534 = vor.u32 %v1530, %v1533
      %v1535 = vrot.slane %v1534, 4
      %v1537 = vshll.u32 %v1452, 16
      %v1539 = vrot.slane %v1537, 5
      %v1540 = vsel %vm250, %v1535, %v1539
      %v1542 = vshrl.u32 %v1453, 16
      %v1544 = vrot.slane %v1542, 4
      %v1545 = vshll.u32 %v1453, 16
      %v1547 = vrot.slane %v1545, 5
      %v1548 = vor.u32 %v1544, %v1547
      %v1549 = vrot.slane %v1548, 4
      %v1551 = vshll.u32 %v1454, 16
      %v1553 = vrot.slane %v1551, 5
      %v1554 = vsel %vm250, %v1549, %v1553
      %v1556 = vshrl.u32 %v1455, 16
      %v1558 = vrot.slane %v1556, 4
      %v1559 = vshll.u32 %v1455, 16
      %v1561 = vrot.slane %v1559, 5
      %v1562 = vor.u32 %v1558, %v1561
      %v1563 = vrot.slane %v1562, 4
      %v1565 = vshll.u32 %v1456, 16
      %v1567 = vrot.slane %v1565, 5
      %v1568 = vsel %vm250, %v1563, %v1567
      %s1569 = scalar_lea.vmem %s1, 448
      %v1570 = vld [vmem:[%s1569] sm:$0xf]
      %v1571 = vld [vmem:[%s1569 + $0x4] sm:$0xf]
      %v1572 = vld [vmem:[%s1569 + $0x8] sm:$0xf]
      %v1573 = vld [vmem:[%s1569 + $0xc] sm:$0xf]
      %v1574 = vld [vmem:[%s1569 + $0x10] sm:$0xf]
      %v1575 = vld [vmem:[%s1569 + $0x14] sm:$0xf]
      %v1576 = vld [vmem:[%s1569 + $0x18] sm:$0xf]
      %v1577 = vld [vmem:[%s1569 + $0x1c] sm:$0xf]
      %v1578 = vld [vmem:[%s1569 + $0x20] sm:$0xf]
      %v1579 = vld [vmem:[%s1569 + $0x24] sm:$0xf]
      %v1580 = vld [vmem:[%s1569 + $0x28] sm:$0xf]
      %v1581 = vld [vmem:[%s1569 + $0x2c] sm:$0xf]
      %v1582 = vld [vmem:[%s1569 + $0x30] sm:$0xf]
      %v1583 = vld [vmem:[%s1569 + $0x34] sm:$0xf]
      %v1584 = vld [vmem:[%s1569 + $0x38] sm:$0xf]
      %v1585 = vld [vmem:[%s1569 + $0x3c] sm:$0xf]
      %v1586 = vunpack.c.l.b16 %v1470
      %v1587 = vunpack.c.l.b16 %v1484
      %v1588 = vunpack.c.l.b16 %v1498
      %v1589 = vunpack.c.l.b16 %v1512
      %v1590 = vunpack.c.l.b16 %v1526
      %v1591 = vunpack.c.l.b16 %v1540
      %v1592 = vunpack.c.l.b16 %v1554
      %v1593 = vunpack.c.l.b16 %v1568
      %v1594 = vpack.c.b16 %v1587, %v1586
      %v1595 = vpack.c.b16 %v1589, %v1588
      %v1596 = vpack.c.b16 %v1591, %v1590
      %v1597 = vpack.c.b16 %v1593, %v1592
      %v1618 = vunpack.c.l.b16 %v1570
      %v1619 = vunpack.c.l.b16 %v1571
      %v1620 = vunpack.c.l.b16 %v1572
      %v1621 = vunpack.c.l.b16 %v1573
      %v1622 = vunpack.c.l.b16 %v1574
      %v1623 = vunpack.c.l.b16 %v1575
      %v1624 = vunpack.c.l.b16 %v1576
      %v1625 = vunpack.c.l.b16 %v1577
      %v1626 = vunpack.c.l.b16 %v1578
      %v1627 = vunpack.c.l.b16 %v1579
      %v1628 = vunpack.c.l.b16 %v1580
      %v1629 = vunpack.c.l.b16 %v1581
      %v1630 = vunpack.c.l.b16 %v1582
      %v1631 = vunpack.c.l.b16 %v1583
      %v1632 = vunpack.c.l.b16 %v1584
      %v1633 = vunpack.c.l.b16 %v1585
      %v1634 = vpack.c.b16 %v1619, %v1618
      %v1635 = vpack.c.b16 %v1621, %v1620
      %v1636 = vpack.c.b16 %v1623, %v1622
      %v1637 = vpack.c.b16 %v1625, %v1624
      %v1638 = vpack.c.b16 %v1627, %v1626
      %v1639 = vpack.c.b16 %v1629, %v1628
      %v1640 = vpack.c.b16 %v1631, %v1630
      %v1641 = vpack.c.b16 %v1633, %v1632
      %1650 = vmatpush.bf16.msra.mxu0 %v1641
      %1651 = vmatpush.bf16.msra.mxu0 %v1640
      %1652 = vmatpush.bf16.msra.mxu0 %v1639
      %1653 = vmatpush.bf16.msra.mxu0 %v1638
      %1654 = vmatpush.bf16.msra.mxu0 %v1637
      %1655 = vmatpush.bf16.msra.mxu0 %v1636
      %1656 = vmatpush.bf16.msra.mxu0 %v1635
      %1657 = vmatpush.bf16.msra.mxu0 %v1634
      %1658 = vmatmul.bf16.gmra.mxu0 %v1594
      %v1659 = vpop.f32.mrf.mxu0
      %v1660 = vadd.f32 0.0, %v1659
      %v1661 = vpop.f32.mrf.mxu0
      %v1662 = vadd.f32 0.0, %v1661
      %1663 = vmatmul.bf16.gmra.mxu0 %v1595
      %v1664 = vpop.f32.mrf.mxu0
      %v1665 = vadd.f32 0.0, %v1664
      %v1666 = vpop.f32.mrf.mxu0
      %v1667 = vadd.f32 0.0, %v1666
      %1668 = vmatmul.bf16.gmra.mxu0 %v1596
      %v1669 = vpop.f32.mrf.mxu0
      %v1670 = vadd.f32 0.0, %v1669
      %v1671 = vpop.f32.mrf.mxu0
      %v1672 = vadd.f32 0.0, %v1671
      %1673 = vmatmul.bf16.gmra.mxu0 %v1597
      %v1674 = vpop.f32.mrf.mxu0
      %v1675 = vadd.f32 0.0, %v1674
      %v1676 = vpop.f32.mrf.mxu0
      %v1677 = vadd.f32 0.0, %v1676
      %1678 = vdwg.mxu0
      %v1679 = vadd.f32 %v1433, %v1660
      %v1680 = vadd.f32 %v1434, %v1662
      %v1681 = vadd.f32 %v1435, %v1665
      %v1682 = vadd.f32 %v1436, %v1667
      %v1683 = vadd.f32 %v1437, %v1670
      %v1684 = vadd.f32 %v1438, %v1672
      %v1685 = vadd.f32 %v1439, %v1675
      %v1686 = vadd.f32 %v1440, %v1677
      %v1687 = vld [vmem:[%s1306] sm:$0xe]
      %v1688 = vld [vmem:[%s1306 + $0x8] sm:$0xe]
      %v1689 = vld [vmem:[%s1306 + $0x10] sm:$0xe]
      %v1690 = vld [vmem:[%s1306 + $0x18] sm:$0xe]
      %v1691 = vld [vmem:[%s1306 + $0x20] sm:$0xe]
      %v1692 = vld [vmem:[%s1306 + $0x28] sm:$0xe]
      %v1693 = vld [vmem:[%s1306 + $0x30] sm:$0xe]
      %v1694 = vld [vmem:[%s1306 + $0x38] sm:$0xe]
      %v1711 = vrot.slane %v1687, 5
      %v1712 = vrot.slane %v1711, 4
      %v1713 = vrot.slane %v1442, 5
      %v1714 = vsel %vm600, %v1712, %v1713
      %v1715 = vrot.slane %v1688, 5
      %v1716 = vrot.slane %v1715, 4
      %v1717 = vrot.slane %v1444, 5
      %v1718 = vsel %vm600, %v1716, %v1717
      %v1719 = vrot.slane %v1689, 5
      %v1720 = vrot.slane %v1719, 4
      %v1721 = vrot.slane %v1446, 5
      %v1722 = vsel %vm600, %v1720, %v1721
      %v1723 = vrot.slane %v1690, 5
      %v1724 = vrot.slane %v1723, 4
      %v1725 = vrot.slane %v1448, 5
      %v1726 = vsel %vm600, %v1724, %v1725
      %v1727 = vrot.slane %v1691, 5
      %v1728 = vrot.slane %v1727, 4
      %v1729 = vrot.slane %v1450, 5
      %v1730 = vsel %vm600, %v1728, %v1729
      %v1731 = vrot.slane %v1692, 5
      %v1732 = vrot.slane %v1731, 4
      %v1733 = vrot.slane %v1452, 5
      %v1734 = vsel %vm600, %v1732, %v1733
      %v1735 = vrot.slane %v1693, 5
      %v1736 = vrot.slane %v1735, 4
      %v1737 = vrot.slane %v1454, 5
      %v1738 = vsel %vm600, %v1736, %v1737
      %v1739 = vrot.slane %v1694, 5
      %v1740 = vrot.slane %v1739, 4
      %v1741 = vrot.slane %v1456, 5
      %v1742 = vsel %vm600, %v1740, %v1741
      %s1743 = scalar_lea.vmem %s1, 512
      %v1744 = vld [vmem:[%s1743] sm:$0xf]
      %v1745 = vld [vmem:[%s1743 + $0x4] sm:$0xf]
      %v1746 = vld [vmem:[%s1743 + $0x8] sm:$0xf]
      %v1747 = vld [vmem:[%s1743 + $0xc] sm:$0xf]
      %v1748 = vld [vmem:[%s1743 + $0x10] sm:$0xf]
      %v1749 = vld [vmem:[%s1743 + $0x14] sm:$0xf]
      %v1750 = vld [vmem:[%s1743 + $0x18] sm:$0xf]
      %v1751 = vld [vmem:[%s1743 + $0x1c] sm:$0xf]
      %v1752 = vld [vmem:[%s1743 + $0x20] sm:$0xf]
      %v1753 = vld [vmem:[%s1743 + $0x24] sm:$0xf]
      %v1754 = vld [vmem:[%s1743 + $0x28] sm:$0xf]
      %v1755 = vld [vmem:[%s1743 + $0x2c] sm:$0xf]
      %v1756 = vld [vmem:[%s1743 + $0x30] sm:$0xf]
      %v1757 = vld [vmem:[%s1743 + $0x34] sm:$0xf]
      %v1758 = vld [vmem:[%s1743 + $0x38] sm:$0xf]
      %v1759 = vld [vmem:[%s1743 + $0x3c] sm:$0xf]
      %v1760 = vunpack.c.l.b16 %v1714
      %v1761 = vunpack.c.l.b16 %v1718
      %v1762 = vunpack.c.l.b16 %v1722
      %v1763 = vunpack.c.l.b16 %v1726
      %v1764 = vunpack.c.l.b16 %v1730
      %v1765 = vunpack.c.l.b16 %v1734
      %v1766 = vunpack.c.l.b16 %v1738
      %v1767 = vunpack.c.l.b16 %v1742
      %v1768 = vpack.c.b16 %v1761, %v1760
      %v1769 = vpack.c.b16 %v1763, %v1762
      %v1770 = vpack.c.b16 %v1765, %v1764
      %v1771 = vpack.c.b16 %v1767, %v1766
      %v1792 = vunpack.c.l.b16 %v1744
      %v1793 = vunpack.c.l.b16 %v1745
      %v1794 = vunpack.c.l.b16 %v1746
      %v1795 = vunpack.c.l.b16 %v1747
      %v1796 = vunpack.c.l.b16 %v1748
      %v1797 = vunpack.c.l.b16 %v1749
      %v1798 = vunpack.c.l.b16 %v1750
      %v1799 = vunpack.c.l.b16 %v1751
      %v1800 = vunpack.c.l.b16 %v1752
      %v1801 = vunpack.c.l.b16 %v1753
      %v1802 = vunpack.c.l.b16 %v1754
      %v1803 = vunpack.c.l.b16 %v1755
      %v1804 = vunpack.c.l.b16 %v1756
      %v1805 = vunpack.c.l.b16 %v1757
      %v1806 = vunpack.c.l.b16 %v1758
      %v1807 = vunpack.c.l.b16 %v1759
      %v1808 = vpack.c.b16 %v1793, %v1792
      %v1809 = vpack.c.b16 %v1795, %v1794
      %v1810 = vpack.c.b16 %v1797, %v1796
      %v1811 = vpack.c.b16 %v1799, %v1798
      %v1812 = vpack.c.b16 %v1801, %v1800
      %v1813 = vpack.c.b16 %v1803, %v1802
      %v1814 = vpack.c.b16 %v1805, %v1804
      %v1815 = vpack.c.b16 %v1807, %v1806
      %1824 = vmatpush.bf16.msra.mxu0 %v1815
      %1825 = vmatpush.bf16.msra.mxu0 %v1814
      %1826 = vmatpush.bf16.msra.mxu0 %v1813
      %1827 = vmatpush.bf16.msra.mxu0 %v1812
      %1828 = vmatpush.bf16.msra.mxu0 %v1811
      %1829 = vmatpush.bf16.msra.mxu0 %v1810
      %1830 = vmatpush.bf16.msra.mxu0 %v1809
      %1831 = vmatpush.bf16.msra.mxu0 %v1808
      %1832 = vmatmul.bf16.gmra.mxu0 %v1768
      %v1833 = vpop.f32.mrf.mxu0
      %v1834 = vadd.f32 0.0, %v1833
      %v1835 = vpop.f32.mrf.mxu0
      %v1836 = vadd.f32 0.0, %v1835
      %1837 = vmatmul.bf16.gmra.mxu0 %v1769
      %v1838 = vpop.f32.mrf.mxu0
      %v1839 = vadd.f32 0.0, %v1838
      %v1840 = vpop.f32.mrf.mxu0
      %v1841 = vadd.f32 0.0, %v1840
      %1842 = vmatmul.bf16.gmra.mxu0 %v1770
      %v1843 = vpop.f32.mrf.mxu0
      %v1844 = vadd.f32 0.0, %v1843
      %v1845 = vpop.f32.mrf.mxu0
      %v1846 = vadd.f32 0.0, %v1845
      %1847 = vmatmul.bf16.gmra.mxu0 %v1771
      %v1848 = vpop.f32.mrf.mxu0
      %v1849 = vadd.f32 0.0, %v1848
      %v1850 = vpop.f32.mrf.mxu0
      %v1851 = vadd.f32 0.0, %v1850
      %1852 = vdwg.mxu0
      %v1853 = vadd.f32 %v1679, %v1834
      %v1854 = vadd.f32 %v1680, %v1836
      %v1855 = vadd.f32 %v1681, %v1839
      %v1856 = vadd.f32 %v1682, %v1841
      %v1857 = vadd.f32 %v1683, %v1844
      %v1858 = vadd.f32 %v1684, %v1846
      %v1859 = vadd.f32 %v1685, %v1849
      %v1860 = vadd.f32 %v1686, %v1851
      %v1861 = vpack.c.bf16 %v1853, %v1853
      %v1862 = vpack.c.bf16 %v1854, %v1854
      %v1863 = vpack.c.bf16 %v1855, %v1855
      %v1864 = vpack.c.bf16 %v1856, %v1856
      %v1865 = vpack.c.bf16 %v1857, %v1857
      %v1866 = vpack.c.bf16 %v1858, %v1858
      %v1867 = vpack.c.bf16 %v1859, %v1859
      %v1868 = vpack.c.bf16 %v1860, %v1860
      %1869 = vst [vmem:[%s208] sm:$0xf] %v1861
      %1870 = vst [vmem:[%s208 + $0x4] sm:$0xf] %v1862
      %1871 = vst [vmem:[%s208 + $0x8] sm:$0xf] %v1863
      %1872 = vst [vmem:[%s208 + $0xc] sm:$0xf] %v1864
      %1873 = vst [vmem:[%s208 + $0x10] sm:$0xf] %v1865
      %1874 = vst [vmem:[%s208 + $0x14] sm:$0xf] %v1866
      %1875 = vst [vmem:[%s208 + $0x18] sm:$0xf] %v1867
      %1876 = vst [vmem:[%s208 + $0x1c] sm:$0xf] %v1868
      %v1877 = vadd.f32 %v1853, %v1854
      %v1878 = vadd.f32 %v1877, %v1855
      %v1879 = vadd.f32 %v1878, %v1856
      %v1880 = vadd.f32 %v1879, %v1857
      %v1881 = vadd.f32 %v1880, %v1858
      %v1882 = vadd.f32 %v1881, %v1859
      %v1883 = vadd.f32 %v1882, %v1860
      %v1884 = vrot.slane %v1883, 4
      %v1885 = vadd.f32 %v1883, %v1884
      %v1886 = vrot.slane %v1885, 2
      %v1887 = vadd.f32 %v1885, %v1886
      %v1888 = vrot.slane %v1887, 1
      %v1889 = vadd.f32 %v1887, %v1888
      %1890 = vst [vmem:[%s212] sm:$0x1] %v1889
      %v1891 = vmul.f32 %v1853, %v1853
      %v1892 = vmul.f32 %v1854, %v1854
      %v1893 = vmul.f32 %v1855, %v1855
      %v1894 = vmul.f32 %v1856, %v1856
      %v1895 = vmul.f32 %v1857, %v1857
      %v1896 = vmul.f32 %v1858, %v1858
      %v1897 = vmul.f32 %v1859, %v1859
      %v1898 = vmul.f32 %v1860, %v1860
      %v1899 = vadd.f32 %v1891, %v1892
      %v1900 = vadd.f32 %v1899, %v1893
      %v1901 = vadd.f32 %v1900, %v1894
      %v1902 = vadd.f32 %v1901, %v1895
      %v1903 = vadd.f32 %v1902, %v1896
      %v1904 = vadd.f32 %v1903, %v1897
      %v1905 = vadd.f32 %v1904, %v1898
      %v1906 = vrot.slane %v1905, 4
      %v1907 = vadd.f32 %v1905, %v1906
      %v1908 = vrot.slane %v1907, 2
      %v1909 = vadd.f32 %v1907, %v1908
      %v1910 = vrot.slane %v1909, 1
      %v1911 = vadd.f32 %v1909, %v1910
      %1912 = vst [vmem:[%s215] sm:$0x1] %v1911
      %s1913 = smul.u32 8, %s16
      %p1914 = scmp.lt.s32.totalorder %s1913, 15
      %s1915 = scalar_select %p1914, %s1913, 15
      %s1916 = smul.addr %s1915, 4
      %s1917 = scalar_lea.vmem %s2, %s1916
      %p1918 = scmp.lt.s32.totalorder %s16, 1
      %s1919 = scalar_select %p1918, %s16, 1
      %s1920 = scalar_lea.vmem %s3, %s1919
      %p1921 = scmp.lt.s32.totalorder %s16, 1
      %s1922 = scalar_select %p1921, %s16, 1
      %s1923 = scalar_lea.vmem %s4, %s1922
      // Predicated region
      $region29: #{basic_block_forward.7} parent=27 // pred_check
        %p1924 = pneg %p81
      $region30: #{basic_block_forward.7} parent=27 // pred_check_branch
        %1926 = sbr.rel (%p1924) target = $region32
      $region31: #{basic_block_forward.7} parent=27 // pred_region
        %s1927 = smul.u32 8, %s16
      $region32: #{basic_block_forward.7} parent=27 // pred_fallthru
        _
      // Predicated region
      $region33: #{basic_block_forward.7} parent=27 // pred_check
        %p1928 = pneg %p107
      $region34: #{basic_block_forward.7} parent=27 // pred_check_branch
        %1930 = sbr.rel (%p1928) target = $region36
      $region35: #{basic_block_forward.7} parent=27 // pred_region
        _
      $region36: #{basic_block_forward.7} parent=27 // pred_fallthru
        _
      // Predicated region
      $region37: #{basic_block_forward.7} parent=27 // pred_check
        %p1931 = pneg %p133
      $region38: #{basic_block_forward.7} parent=27 // pred_check_branch
        %1933 = sbr.rel (%p1931) target = $region40
      $region39: #{basic_block_forward.7} parent=27 // pred_region
        _
      $region40: #{basic_block_forward.7} parent=27 // pred_fallthru
        _
    $region28: #{basic_block_forward.7} parent=5 // pred_fallthru
      _
    %p1934 = scmp.le.s32.totalorder 2, %s11
    // Predicated region
    $region41: #{basic_block_forward.7} parent=5 // pred_check
      %p1935 = pneg %p1934
    $region42: #{basic_block_forward.7} parent=5 // pred_check_branch
      %1937 = sbr.rel (%p1935) target = $region44
    $region43: #{basic_block_forward.7} parent=5 // pred_region
      %s1938 = ssub.s32 %s11, 2
      // Predicated region
      $region45: #{basic_block_forward.7} parent=43 // pred_check
        %p1939 = pneg %p87
      $region46: #{basic_block_forward.7} parent=43 // pred_check_branch
        %1941 = sbr.rel (%p1939) target = $region48
      $region47: #{basic_block_forward.7} parent=43 // pred_region
        %s1942 = smul.u32 8, %s17
        %p1943 = scmp.lt.s32.totalorder %s1942, 15
        %s1944 = scalar_select %p1943, %s1942, 15
        %s1945 = smul.addr %s1944, 4
        %s1946 = scalar_lea.vmem %s2, %s1945
      $region48: #{basic_block_forward.7} parent=43 // pred_fallthru
        _
      // Predicated region
      $region49: #{basic_block_forward.7} parent=43 // pred_check
        %p1947 = pneg %p113
      $region50: #{basic_block_forward.7} parent=43 // pred_check_branch
        %1949 = sbr.rel (%p1947) target = $region52
      $region51: #{basic_block_forward.7} parent=43 // pred_region
        %p1950 = scmp.lt.s32.totalorder %s17, 1
        %s1951 = scalar_select %p1950, %s17, 1
        %s1952 = scalar_lea.vmem %s3, %s1951
      $region52: #{basic_block_forward.7} parent=43 // pred_fallthru
        _
      // Predicated region
      $region53: #{basic_block_forward.7} parent=43 // pred_check
        %p1953 = pneg %p139
      $region54: #{basic_block_forward.7} parent=43 // pred_check_branch
        %1955 = sbr.rel (%p1953) target = $region56
      $region55: #{basic_block_forward.7} parent=43 // pred_region
        %p1956 = scmp.lt.s32.totalorder %s17, 1
        %s1957 = scalar_select %p1956, %s17, 1
        %s1958 = scalar_lea.vmem %s4, %s1957
      $region56: #{basic_block_forward.7} parent=43 // pred_fallthru
        _
    $region44: #{basic_block_forward.7} parent=5 // pred_fallthru
      _
  $region6: #{basic_block_forward.7} parent=0 // loop_footer
    %s15 = sadd.s32 1, %s11
  $region7: #{basic_block_forward.7} parent=0 // loop_footer_branch
    %10 = sbr.rel target = $region3
  $region8: #{basic_block_forward.7} parent=0 // loop_exit
    _

</llo_original>
